<compile_context>
chip_gen: v7x
topology: tpu7x:2x2x1
jax: 0.10.0
libtpu: 0.0.40
codegen_flags: <defaults>
</compile_context>

<pallas_src>
import jax
import jax.numpy as jnp
from jax.experimental import pallas as pl
from jax.experimental.pallas import tpu as pltpu

# ----------------------------- config --------------------------------------
DICT_WORD = 30     # decoder vocab
EMB_SIZE = 32
ENC_SIZE = 32
DEC_SIZE = 32      # must equal EMB_SIZE (residual) and ENC_SIZE (attention)
ATTN_SIZE = 32
NUM_LAYER = 2
N_PRE = NUM_LAYER - 1
FC_PAD = 128       # lane-dense fc output; sliced back to DICT_WORD outside


# --------------------------- fused Pallas kernel -----------------------------

def _decoder_kernel(x_ref, hc0_ref, enc_ref, mbias_ref,
                    lw_ref, lb_ref,
                    qw_ref, qb_ref, kvw_ref, kvb_ref, ww_ref,
                    fcw_ref, fcb_ref,
                    out_ref, y_sc):
    TqB = x_ref.shape[0]
    H = hc0_ref.shape[1]
    H4 = 4 * H
    B, Tk = mbias_ref.shape
    Tq = TqB // B
    A = qw_ref.shape[1]
    NLB = NUM_LAYER * B

    # lane mask selecting the "g" (cell-candidate) gate; precomputed scale for
    # the single-tanh sigmoid trick: sigmoid(x) = 0.5*tanh(x/2) + 0.5
    lane = jax.lax.broadcasted_iota(jnp.int32, (B, H4), 1)
    g_mask = jnp.logical_and(lane >= 2 * H, lane < 3 * H)
    gate_scale = jnp.where(g_mask, jnp.float32(1.0), jnp.float32(0.5))

    def lstm_scan(xg, whh, h, c):
        """xg: (Tq*B, 4H) hoisted x-gates (value); whh: (H, 4H); h,c: (B, H).
        h/c carried in registers; only per-step output rows hit VMEM."""
        for t in range(Tq):
            gates = xg[t * B:(t + 1) * B, :] + jnp.dot(
                h, whh, preferred_element_type=jnp.float32)
            th = jnp.tanh(gates * gate_scale)                 # one EUP pass
            act = jnp.where(g_mask, th, 0.5 * th + 0.5)       # i,f,o=sigmoid; g=tanh
            i_g = act[:, 0 * H:1 * H]
            f_g = act[:, 1 * H:2 * H]
            g_g = act[:, 2 * H:3 * H]
            o_g = act[:, 3 * H:4 * H]
            c = f_g * c + i_g * g_g
            h = o_g * jnp.tanh(c)
            y_sc[t * B:(t + 1) * B, :] = h

    # ---- embedding input (embedded/gathered outside; flat (Tq*B, H)) --------
    tensor = x_ref[...]

    # ---- pre LSTM layers with residual connections ---------------------------
    for li in range(N_PRE):
        r = 2 * li * H
        xg = (jnp.dot(tensor, lw_ref[r:r + H, :],
                      preferred_element_type=jnp.float32)
              + lb_ref[li:li + 1, :])
        lstm_scan(xg, lw_ref[r + H:r + 2 * H, :],
                  hc0_ref[li * B:(li + 1) * B, :],
                  hc0_ref[NLB + li * B:NLB + (li + 1) * B, :])
        tensor = y_sc[...] + tensor                            # fused residual add

    # ---- additive attention: Q on decoder states, fused K|V on encoder ------
    q = (jnp.dot(tensor, qw_ref[...], preferred_element_type=jnp.float32)
         + qb_ref[...])                                        # (Tq*B, A)
    kv = (jnp.dot(enc_ref[...], kvw_ref[...],
                  preferred_element_type=jnp.float32)
          + kvb_ref[...])                                      # (B*Tk, 2A)

    q3 = q.reshape(Tq, B, A)
    kv3 = kv.reshape(B, Tk, 2 * A)
    k3 = kv3[:, :, :A]
    v3 = kv3[:, :, A:]

    s4 = jnp.tanh(q3[:, :, None, :] + k3[None, :, :, :])      # (Tq, B, Tk, A)
    score = jnp.sum(s4 * ww_ref[...], axis=-1)                 # (Tq, B, Tk)
    # additive bias == where(mask, +Wb, -1e6) folded in the wrapper;
    # softmax-equivalent to torch.where(mask, score+Wb, -1e6)
    score = score + mbias_ref[...][None, :, :]

    score = score - jnp.max(score, axis=-1, keepdims=True)     # softmax over src time
    e = jnp.exp(score)
    attn = e * pl.reciprocal(jnp.sum(e, axis=-1, keepdims=True), approx=True)

    context = jnp.sum(attn[:, :, :, None] * v3[None, :, :, :], axis=2)  # (Tq,B,A)
    ctx = context.reshape(Tq * B, A)

    # ---- final LSTM on [tensor | context] via split W_ih (no lane concat) ----
    r = 2 * N_PRE * H
    li = NUM_LAYER - 1
    xg = (jnp.dot(tensor, lw_ref[r:r + H, :],
                  preferred_element_type=jnp.float32)
          + jnp.dot(ctx, lw_ref[r + H:r + 2 * H, :],
                    preferred_element_type=jnp.float32)
          + lb_ref[li:li + 1, :])
    lstm_scan(xg, lw_ref[r + 2 * H:r + 3 * H, :],
              hc0_ref[li * B:(li + 1) * B, :],
              hc0_ref[NLB + li * B:NLB + (li + 1) * B, :])

    # ---- output fc: lane-dense (Tq*B, FC_PAD) slab, plain unmasked stores ---
    out_ref[...] = (jnp.dot(y_sc[...], fcw_ref[...],
                            preferred_element_type=jnp.float32)
                    + fcb_ref[...])


# ------------------------------ wrapper --------------------------------------

def decoder_forward(params, dec_ids, h0s, c0s, enc, src_len):
    """dec_ids: (Tq, B) int32; h0s/c0s: (NUM_LAYER, B, H); enc: (Tk, B, ENC);
    src_len: (B,) int32.  Returns logits (Tq, B, DICT_WORD)."""
    Tq, B = dec_ids.shape
    Tk = enc.shape[0]
    H = DEC_SIZE

    # embedding gather + flattening/transposes are XLA glue outside the kernel
    emb_x = params["emb"][dec_ids].reshape(Tq * B, EMB_SIZE)          # (Tq*B, H)
    enc_flat = jnp.transpose(enc, (1, 0, 2)).reshape(B * Tk, ENC_SIZE)
    hc0 = jnp.concatenate([h0s.reshape(NUM_LAYER * B, H),
                           c0s.reshape(NUM_LAYER * B, H)], axis=0)    # (2*NL*B, H)

    # mask: source position tk valid iff tk < src_len[b]; fold attention W bias
    pos = jnp.arange(Tk, dtype=jnp.int32)[None, :]
    valid = pos < src_len.astype(jnp.int32)[:, None]
    mask_bias = jnp.where(valid, params["Wb"][0].astype(jnp.float32),
                          jnp.float32(-1000000.0))                    # (B, Tk)

    # pack all LSTM weights into one (.., 4H) slab and biases into one (NL, 4H)
    lw_rows, lb_rows = [], []
    for (wih, whh, b) in params["pre"]:
        lw_rows += [wih, whh]
        lb_rows.append(b)
    wih_f, whh_f, b_f = params["final"]
    lw_rows += [wih_f[:H], wih_f[H:], whh_f]      # split W_ih_final (tensor|context)
    lb_rows.append(b_f)
    lw = jnp.concatenate(lw_rows, axis=0)                             # (160, 128)
    lb = jnp.stack(lb_rows, axis=0)                                   # (NL, 128)

    # fused K|V projection, lane-padded fc
    kvw = jnp.concatenate([params["Kw"], params["Vw"]], axis=1)       # (ENC, 2A)
    kvb = jnp.concatenate([params["Kb"], params["Vb"]]).reshape(1, 2 * ATTN_SIZE)
    fcw = jnp.zeros((H, FC_PAD), jnp.float32).at[:, :DICT_WORD].set(params["fcw"])
    fcb = jnp.zeros((1, FC_PAD), jnp.float32).at[0, :DICT_WORD].set(params["fcb"])

    args = [emb_x, hc0, enc_flat, mask_bias, lw, lb,
            params["Qw"], params["Qb"].reshape(1, ATTN_SIZE),
            kvw, kvb, params["Ww"].reshape(1, ATTN_SIZE),
            fcw, fcb]

    vmem = pl.BlockSpec(memory_space=pltpu.MemorySpace.VMEM)
    out_pad = pl.pallas_call(
        _decoder_kernel,
        out_shape=jax.ShapeDtypeStruct((Tq * B, FC_PAD), jnp.float32),
        in_specs=[vmem] * len(args),
        out_specs=vmem,
        scratch_shapes=[pltpu.VMEM((Tq * B, H), jnp.float32)],        # lstm outputs
    )(*args)
    return out_pad.reshape(Tq, B, FC_PAD)[..., :DICT_WORD]


decoder_forward_jit = jax.jit(decoder_forward)


# ------------------------ parameter initialization ---------------------------

def _uniform(key, shape, scale):
    return jax.random.uniform(key, shape, jnp.float32, -scale, scale)


def init_params(key):
    ks = iter(jax.random.split(key, 32))
    inv_h = 1.0 / jnp.sqrt(jnp.float32(DEC_SIZE))
    inv_e = 1.0 / jnp.sqrt(jnp.float32(ENC_SIZE))
    inv_a = 1.0 / jnp.sqrt(jnp.float32(ATTN_SIZE))

    p = {}
    p["emb"] = jax.random.normal(next(ks), (DICT_WORD, EMB_SIZE), jnp.float32)
    p["pre"] = []
    for _ in range(N_PRE):
        p["pre"].append((
            _uniform(next(ks), (DEC_SIZE, 4 * DEC_SIZE), inv_h),
            _uniform(next(ks), (DEC_SIZE, 4 * DEC_SIZE), inv_h),
            _uniform(next(ks), (4 * DEC_SIZE,), inv_h),   # b_ih + b_hh folded
        ))
    p["final"] = (
        _uniform(next(ks), (2 * DEC_SIZE, 4 * DEC_SIZE), inv_h),
        _uniform(next(ks), (DEC_SIZE, 4 * DEC_SIZE), inv_h),
        _uniform(next(ks), (4 * DEC_SIZE,), inv_h),
    )
    p["Qw"] = _uniform(next(ks), (ENC_SIZE, ATTN_SIZE), inv_e)
    p["Qb"] = _uniform(next(ks), (ATTN_SIZE,), inv_e)
    p["Kw"] = _uniform(next(ks), (ENC_SIZE, ATTN_SIZE), inv_e)
    p["Kb"] = _uniform(next(ks), (ATTN_SIZE,), inv_e)
    p["Vw"] = _uniform(next(ks), (ENC_SIZE, ATTN_SIZE), inv_e)
    p["Vb"] = _uniform(next(ks), (ATTN_SIZE,), inv_e)
    p["Ww"] = _uniform(next(ks), (ATTN_SIZE,), inv_a)     # Linear(ATTN, 1)
    p["Wb"] = _uniform(next(ks), (1,), inv_a)
    inv_d = 1.0 / jnp.sqrt(jnp.float32(DEC_SIZE))
    p["fcw"] = _uniform(next(ks), (DEC_SIZE, DICT_WORD), inv_d)
    p["fcb"] = _uniform(next(ks), (DICT_WORD,), inv_d)
    return p


# -------------------------------- main ---------------------------------------

if __name__ == "__main__":
    key = jax.random.PRNGKey(0)
    kp, kd, ke, kh, kc = jax.random.split(key, 5)

    B, Tq, Tk = 2, 6, 8
    params = init_params(kp)

    dec_ids = jax.random.randint(kd, (Tq, B), 0, DICT_WORD, jnp.int32)
    enc = 0.1 * jax.random.normal(ke, (Tk, B, ENC_SIZE), jnp.float32)
    h = 0.1 * jax.random.normal(kh, (B, DEC_SIZE), jnp.float32)
    c = 0.1 * jax.random.normal(kc, (B, DEC_SIZE), jnp.float32)
    # l_states = [(h, c)] * NUM_LAYER  (same initial state per layer, as in get_loss)
    h0s = jnp.stack([h] * NUM_LAYER)
    c0s = jnp.stack([c] * NUM_LAYER)
    # ragged source lengths -> attention mask (tk < len[b]); batch 1 is padded
    src_len = jnp.array([Tk, Tk - 3], jnp.int32)

    logits = decoder_forward_jit(params, dec_ids, h0s, c0s, enc, src_len)
    jax.block_until_ready(logits)
    assert logits.shape == (Tq, B, DICT_WORD)
    assert bool(jnp.all(jnp.isfinite(logits)))
    print("KERNEL_OK")
</pallas_src>

<mosaic_0001>
module attributes {stable_mosaic.version = 11 : i64} {
  func.func @_decoder_kernel(%arg0: memref<12x32xf32, #tpu.memory_space<vmem>>, %arg1: memref<8x32xf32, #tpu.memory_space<vmem>>, %arg2: memref<16x32xf32, #tpu.memory_space<vmem>>, %arg3: memref<2x8xf32, #tpu.memory_space<vmem>>, %arg4: memref<160x128xf32, #tpu.memory_space<vmem>>, %arg5: memref<2x128xf32, #tpu.memory_space<vmem>>, %arg6: memref<32x32xf32, #tpu.memory_space<vmem>>, %arg7: memref<1x32xf32, #tpu.memory_space<vmem>>, %arg8: memref<32x64xf32, #tpu.memory_space<vmem>>, %arg9: memref<1x64xf32, #tpu.memory_space<vmem>>, %arg10: memref<1x32xf32, #tpu.memory_space<vmem>>, %arg11: memref<32x128xf32, #tpu.memory_space<vmem>>, %arg12: memref<1x128xf32, #tpu.memory_space<vmem>>, %arg13: memref<12x128xf32, #tpu.memory_space<vmem>>, %arg14: memref<12x32xf32, #tpu.memory_space<vmem>>) attributes {dimension_semantics = [], scalar_prefetch = 0 : i64, scratch_operands = 1 : i64, tpu.core_type = #tpu.core_type<tc>} {
    %0 = tpu.iota {dimensions = array<i32: 1>} : vector<2x128xi32>
    %c64_i32 = arith.constant 64 : i32
    %1 = vector.broadcast %c64_i32 : i32 to vector<2x128xi32>
    %2 = arith.cmpi sge, %0, %1 : vector<2x128xi32>
    %c96_i32 = arith.constant 96 : i32
    %3 = vector.broadcast %c96_i32 : i32 to vector<2x128xi32>
    %4 = arith.cmpi slt, %0, %3 : vector<2x128xi32>
    %5 = arith.andi %2, %4 : vector<2x128xi1>
    %cst = arith.constant 1.000000e+00 : f32
    %cst_0 = arith.constant 5.000000e-01 : f32
    %6 = vector.broadcast %cst : f32 to vector<2x128xf32>
    %7 = vector.broadcast %cst_0 : f32 to vector<2x128xf32>
    %8 = arith.select %5, %6, %7 : vector<2x128xi1>, vector<2x128xf32>
    %c0 = arith.constant 0 : index
    %c0_1 = arith.constant 0 : index
    %9 = vector.load %arg0[%c0, %c0_1] : memref<12x32xf32, #tpu.memory_space<vmem>>, vector<12x32xf32>
    %c0_2 = arith.constant 0 : index
    %c0_3 = arith.constant 0 : index
    %10 = vector.load %arg4[%c0_2, %c0_3] : memref<160x128xf32, #tpu.memory_space<vmem>>, vector<32x128xf32>
    %cst_4 = arith.constant dense<0.000000e+00> : vector<12x128xf32>
    %11 = tpu.matmul %9, %10, %cst_4 {dimension_numbers = #tpu.dot_dimension_numbers<[1], [0], [0], [1], [0, 0, 1, 1], [], []>} : vector<12x32xf32>, vector<32x128xf32>, vector<12x128xf32> -> vector<12x128xf32>
    %c0_5 = arith.constant 0 : index
    %c0_6 = arith.constant 0 : index
    %12 = vector.load %arg5[%c0_5, %c0_6] : memref<2x128xf32, #tpu.memory_space<vmem>>, vector<1x128xf32>
    %13 = vector.broadcast %12 : vector<1x128xf32> to vector<12x128xf32>
    %14 = arith.addf %11, %13 : vector<12x128xf32>
    %c32 = arith.constant 32 : index
    %c0_7 = arith.constant 0 : index
    %15 = vector.load %arg4[%c32, %c0_7] : memref<160x128xf32, #tpu.memory_space<vmem>>, vector<32x128xf32>
    %c0_8 = arith.constant 0 : index
    %c0_9 = arith.constant 0 : index
    %16 = vector.load %arg1[%c0_8, %c0_9] : memref<8x32xf32, #tpu.memory_space<vmem>>, vector<2x32xf32>
    %c4 = arith.constant 4 : index
    %c0_10 = arith.constant 0 : index
    %17 = vector.load %arg1[%c4, %c0_10] : memref<8x32xf32, #tpu.memory_space<vmem>>, vector<2x32xf32>
    %18 = vector.extract_strided_slice %14 {offsets = [0, 0], sizes = [2, 128], strides = [1, 1]} : vector<12x128xf32> to vector<2x128xf32>
    %cst_11 = arith.constant dense<0.000000e+00> : vector<2x128xf32>
    %19 = tpu.matmul %16, %15, %cst_11 {dimension_numbers = #tpu.dot_dimension_numbers<[1], [0], [0], [1], [0, 0, 1, 1], [], []>} : vector<2x32xf32>, vector<32x128xf32>, vector<2x128xf32> -> vector<2x128xf32>
    %20 = arith.addf %18, %19 : vector<2x128xf32>
    %21 = arith.mulf %20, %8 : vector<2x128xf32>
    %22 = math.tanh %21 : vector<2x128xf32>
    %cst_12 = arith.constant 5.000000e-01 : f32
    %23 = vector.broadcast %cst_12 : f32 to vector<2x128xf32>
    %24 = arith.mulf %23, %22 : vector<2x128xf32>
    %cst_13 = arith.constant 5.000000e-01 : f32
    %25 = vector.broadcast %cst_13 : f32 to vector<2x128xf32>
    %26 = arith.addf %24, %25 : vector<2x128xf32>
    %27 = arith.select %5, %22, %26 : vector<2x128xi1>, vector<2x128xf32>
    %28 = vector.extract_strided_slice %27 {offsets = [0, 0], sizes = [2, 32], strides = [1, 1]} : vector<2x128xf32> to vector<2x32xf32>
    %29 = vector.extract_strided_slice %27 {offsets = [0, 32], sizes = [2, 32], strides = [1, 1]} : vector<2x128xf32> to vector<2x32xf32>
    %30 = vector.extract_strided_slice %27 {offsets = [0, 64], sizes = [2, 32], strides = [1, 1]} : vector<2x128xf32> to vector<2x32xf32>
    %31 = vector.extract_strided_slice %27 {offsets = [0, 96], sizes = [2, 32], strides = [1, 1]} : vector<2x128xf32> to vector<2x32xf32>
    %32 = arith.mulf %29, %17 : vector<2x32xf32>
    %33 = arith.mulf %28, %30 : vector<2x32xf32>
    %34 = arith.addf %32, %33 : vector<2x32xf32>
    %35 = math.tanh %34 : vector<2x32xf32>
    %36 = arith.mulf %31, %35 : vector<2x32xf32>
    %c0_14 = arith.constant 0 : index
    %c0_15 = arith.constant 0 : index
    %37 = vector.load %arg14[%c0_14, %c0_15] : memref<12x32xf32, #tpu.memory_space<vmem>>, vector<2x32xf32>
    tpu.vector_store %arg14[%c0_14, %c0_15], %36 {strides = array<i32>} : memref<12x32xf32, #tpu.memory_space<vmem>>, vector<2x32xf32>,
    %38 = vector.extract_strided_slice %14 {offsets = [2, 0], sizes = [2, 128], strides = [1, 1]} : vector<12x128xf32> to vector<2x128xf32>
    %cst_16 = arith.constant dense<0.000000e+00> : vector<2x128xf32>
    %39 = tpu.matmul %36, %15, %cst_16 {dimension_numbers = #tpu.dot_dimension_numbers<[1], [0], [0], [1], [0, 0, 1, 1], [], []>} : vector<2x32xf32>, vector<32x128xf32>, vector<2x128xf32> -> vector<2x128xf32>
    %40 = arith.addf %38, %39 : vector<2x128xf32>
    %41 = arith.mulf %40, %8 : vector<2x128xf32>
    %42 = math.tanh %41 : vector<2x128xf32>
    %cst_17 = arith.constant 5.000000e-01 : f32
    %43 = vector.broadcast %cst_17 : f32 to vector<2x128xf32>
    %44 = arith.mulf %43, %42 : vector<2x128xf32>
    %cst_18 = arith.constant 5.000000e-01 : f32
    %45 = vector.broadcast %cst_18 : f32 to vector<2x128xf32>
    %46 = arith.addf %44, %45 : vector<2x128xf32>
    %47 = arith.select %5, %42, %46 : vector<2x128xi1>, vector<2x128xf32>
    %48 = vector.extract_strided_slice %47 {offsets = [0, 0], sizes = [2, 32], strides = [1, 1]} : vector<2x128xf32> to vector<2x32xf32>
    %49 = vector.extract_strided_slice %47 {offsets = [0, 32], sizes = [2, 32], strides = [1, 1]} : vector<2x128xf32> to vector<2x32xf32>
    %50 = vector.extract_strided_slice %47 {offsets = [0, 64], sizes = [2, 32], strides = [1, 1]} : vector<2x128xf32> to vector<2x32xf32>
    %51 = vector.extract_strided_slice %47 {offsets = [0, 96], sizes = [2, 32], strides = [1, 1]} : vector<2x128xf32> to vector<2x32xf32>
    %52 = arith.mulf %49, %34 : vector<2x32xf32>
    %53 = arith.mulf %48, %50 : vector<2x32xf32>
    %54 = arith.addf %52, %53 : vector<2x32xf32>
    %55 = math.tanh %54 : vector<2x32xf32>
    %56 = arith.mulf %51, %55 : vector<2x32xf32>
    %c2 = arith.constant 2 : index
    %c0_19 = arith.constant 0 : index
    %57 = vector.load %arg14[%c2, %c0_19] : memref<12x32xf32, #tpu.memory_space<vmem>>, vector<2x32xf32>
    tpu.vector_store %arg14[%c2, %c0_19], %56 {strides = array<i32>} : memref<12x32xf32, #tpu.memory_space<vmem>>, vector<2x32xf32>,
    %58 = vector.extract_strided_slice %14 {offsets = [4, 0], sizes = [2, 128], strides = [1, 1]} : vector<12x128xf32> to vector<2x128xf32>
    %cst_20 = arith.constant dense<0.000000e+00> : vector<2x128xf32>
    %59 = tpu.matmul %56, %15, %cst_20 {dimension_numbers = #tpu.dot_dimension_numbers<[1], [0], [0], [1], [0, 0, 1, 1], [], []>} : vector<2x32xf32>, vector<32x128xf32>, vector<2x128xf32> -> vector<2x128xf32>
    %60 = arith.addf %58, %59 : vector<2x128xf32>
    %61 = arith.mulf %60, %8 : vector<2x128xf32>
    %62 = math.tanh %61 : vector<2x128xf32>
    %cst_21 = arith.constant 5.000000e-01 : f32
    %63 = vector.broadcast %cst_21 : f32 to vector<2x128xf32>
    %64 = arith.mulf %63, %62 : vector<2x128xf32>
    %cst_22 = arith.constant 5.000000e-01 : f32
    %65 = vector.broadcast %cst_22 : f32 to vector<2x128xf32>
    %66 = arith.addf %64, %65 : vector<2x128xf32>
    %67 = arith.select %5, %62, %66 : vector<2x128xi1>, vector<2x128xf32>
    %68 = vector.extract_strided_slice %67 {offsets = [0, 0], sizes = [2, 32], strides = [1, 1]} : vector<2x128xf32> to vector<2x32xf32>
    %69 = vector.extract_strided_slice %67 {offsets = [0, 32], sizes = [2, 32], strides = [1, 1]} : vector<2x128xf32> to vector<2x32xf32>
    %70 = vector.extract_strided_slice %67 {offsets = [0, 64], sizes = [2, 32], strides = [1, 1]} : vector<2x128xf32> to vector<2x32xf32>
    %71 = vector.extract_strided_slice %67 {offsets = [0, 96], sizes = [2, 32], strides = [1, 1]} : vector<2x128xf32> to vector<2x32xf32>
    %72 = arith.mulf %69, %54 : vector<2x32xf32>
    %73 = arith.mulf %68, %70 : vector<2x32xf32>
    %74 = arith.addf %72, %73 : vector<2x32xf32>
    %75 = math.tanh %74 : vector<2x32xf32>
    %76 = arith.mulf %71, %75 : vector<2x32xf32>
    %c4_23 = arith.constant 4 : index
    %c0_24 = arith.constant 0 : index
    %77 = vector.load %arg14[%c4_23, %c0_24] : memref<12x32xf32, #tpu.memory_space<vmem>>, vector<2x32xf32>
    tpu.vector_store %arg14[%c4_23, %c0_24], %76 {strides = array<i32>} : memref<12x32xf32, #tpu.memory_space<vmem>>, vector<2x32xf32>,
    %78 = vector.extract_strided_slice %14 {offsets = [6, 0], sizes = [2, 128], strides = [1, 1]} : vector<12x128xf32> to vector<2x128xf32>
    %cst_25 = arith.constant dense<0.000000e+00> : vector<2x128xf32>
    %79 = tpu.matmul %76, %15, %cst_25 {dimension_numbers = #tpu.dot_dimension_numbers<[1], [0], [0], [1], [0, 0, 1, 1], [], []>} : vector<2x32xf32>, vector<32x128xf32>, vector<2x128xf32> -> vector<2x128xf32>
    %80 = arith.addf %78, %79 : vector<2x128xf32>
    %81 = arith.mulf %80, %8 : vector<2x128xf32>
    %82 = math.tanh %81 : vector<2x128xf32>
    %cst_26 = arith.constant 5.000000e-01 : f32
    %83 = vector.broadcast %cst_26 : f32 to vector<2x128xf32>
    %84 = arith.mulf %83, %82 : vector<2x128xf32>
    %cst_27 = arith.constant 5.000000e-01 : f32
    %85 = vector.broadcast %cst_27 : f32 to vector<2x128xf32>
    %86 = arith.addf %84, %85 : vector<2x128xf32>
    %87 = arith.select %5, %82, %86 : vector<2x128xi1>, vector<2x128xf32>
    %88 = vector.extract_strided_slice %87 {offsets = [0, 0], sizes = [2, 32], strides = [1, 1]} : vector<2x128xf32> to vector<2x32xf32>
    %89 = vector.extract_strided_slice %87 {offsets = [0, 32], sizes = [2, 32], strides = [1, 1]} : vector<2x128xf32> to vector<2x32xf32>
    %90 = vector.extract_strided_slice %87 {offsets = [0, 64], sizes = [2, 32], strides = [1, 1]} : vector<2x128xf32> to vector<2x32xf32>
    %91 = vector.extract_strided_slice %87 {offsets = [0, 96], sizes = [2, 32], strides = [1, 1]} : vector<2x128xf32> to vector<2x32xf32>
    %92 = arith.mulf %89, %74 : vector<2x32xf32>
    %93 = arith.mulf %88, %90 : vector<2x32xf32>
    %94 = arith.addf %92, %93 : vector<2x32xf32>
    %95 = math.tanh %94 : vector<2x32xf32>
    %96 = arith.mulf %91, %95 : vector<2x32xf32>
    %c6 = arith.constant 6 : index
    %c0_28 = arith.constant 0 : index
    %97 = vector.load %arg14[%c6, %c0_28] : memref<12x32xf32, #tpu.memory_space<vmem>>, vector<2x32xf32>
    tpu.vector_store %arg14[%c6, %c0_28], %96 {strides = array<i32>} : memref<12x32xf32, #tpu.memory_space<vmem>>, vector<2x32xf32>,
    %98 = vector.extract_strided_slice %14 {offsets = [8, 0], sizes = [2, 128], strides = [1, 1]} : vector<12x128xf32> to vector<2x128xf32>
    %cst_29 = arith.constant dense<0.000000e+00> : vector<2x128xf32>
    %99 = tpu.matmul %96, %15, %cst_29 {dimension_numbers = #tpu.dot_dimension_numbers<[1], [0], [0], [1], [0, 0, 1, 1], [], []>} : vector<2x32xf32>, vector<32x128xf32>, vector<2x128xf32> -> vector<2x128xf32>
    %100 = arith.addf %98, %99 : vector<2x128xf32>
    %101 = arith.mulf %100, %8 : vector<2x128xf32>
    %102 = math.tanh %101 : vector<2x128xf32>
    %cst_30 = arith.constant 5.000000e-01 : f32
    %103 = vector.broadcast %cst_30 : f32 to vector<2x128xf32>
    %104 = arith.mulf %103, %102 : vector<2x128xf32>
    %cst_31 = arith.constant 5.000000e-01 : f32
    %105 = vector.broadcast %cst_31 : f32 to vector<2x128xf32>
    %106 = arith.addf %104, %105 : vector<2x128xf32>
    %107 = arith.select %5, %102, %106 : vector<2x128xi1>, vector<2x128xf32>
    %108 = vector.extract_strided_slice %107 {offsets = [0, 0], sizes = [2, 32], strides = [1, 1]} : vector<2x128xf32> to vector<2x32xf32>
    %109 = vector.extract_strided_slice %107 {offsets = [0, 32], sizes = [2, 32], strides = [1, 1]} : vector<2x128xf32> to vector<2x32xf32>
    %110 = vector.extract_strided_slice %107 {offsets = [0, 64], sizes = [2, 32], strides = [1, 1]} : vector<2x128xf32> to vector<2x32xf32>
    %111 = vector.extract_strided_slice %107 {offsets = [0, 96], sizes = [2, 32], strides = [1, 1]} : vector<2x128xf32> to vector<2x32xf32>
    %112 = arith.mulf %109, %94 : vector<2x32xf32>
    %113 = arith.mulf %108, %110 : vector<2x32xf32>
    %114 = arith.addf %112, %113 : vector<2x32xf32>
    %115 = math.tanh %114 : vector<2x32xf32>
    %116 = arith.mulf %111, %115 : vector<2x32xf32>
    %c8 = arith.constant 8 : index
    %c0_32 = arith.constant 0 : index
    %117 = vector.load %arg14[%c8, %c0_32] : memref<12x32xf32, #tpu.memory_space<vmem>>, vector<2x32xf32>
    tpu.vector_store %arg14[%c8, %c0_32], %116 {strides = array<i32>} : memref<12x32xf32, #tpu.memory_space<vmem>>, vector<2x32xf32>,
    %118 = vector.extract_strided_slice %14 {offsets = [10, 0], sizes = [2, 128], strides = [1, 1]} : vector<12x128xf32> to vector<2x128xf32>
    %cst_33 = arith.constant dense<0.000000e+00> : vector<2x128xf32>
    %119 = tpu.matmul %116, %15, %cst_33 {dimension_numbers = #tpu.dot_dimension_numbers<[1], [0], [0], [1], [0, 0, 1, 1], [], []>} : vector<2x32xf32>, vector<32x128xf32>, vector<2x128xf32> -> vector<2x128xf32>
    %120 = arith.addf %118, %119 : vector<2x128xf32>
    %121 = arith.mulf %120, %8 : vector<2x128xf32>
    %122 = math.tanh %121 : vector<2x128xf32>
    %cst_34 = arith.constant 5.000000e-01 : f32
    %123 = vector.broadcast %cst_34 : f32 to vector<2x128xf32>
    %124 = arith.mulf %123, %122 : vector<2x128xf32>
    %cst_35 = arith.constant 5.000000e-01 : f32
    %125 = vector.broadcast %cst_35 : f32 to vector<2x128xf32>
    %126 = arith.addf %124, %125 : vector<2x128xf32>
    %127 = arith.select %5, %122, %126 : vector<2x128xi1>, vector<2x128xf32>
    %128 = vector.extract_strided_slice %127 {offsets = [0, 0], sizes = [2, 32], strides = [1, 1]} : vector<2x128xf32> to vector<2x32xf32>
    %129 = vector.extract_strided_slice %127 {offsets = [0, 32], sizes = [2, 32], strides = [1, 1]} : vector<2x128xf32> to vector<2x32xf32>
    %130 = vector.extract_strided_slice %127 {offsets = [0, 64], sizes = [2, 32], strides = [1, 1]} : vector<2x128xf32> to vector<2x32xf32>
    %131 = vector.extract_strided_slice %127 {offsets = [0, 96], sizes = [2, 32], strides = [1, 1]} : vector<2x128xf32> to vector<2x32xf32>
    %132 = arith.mulf %129, %114 : vector<2x32xf32>
    %133 = arith.mulf %128, %130 : vector<2x32xf32>
    %134 = arith.addf %132, %133 : vector<2x32xf32>
    %135 = math.tanh %134 : vector<2x32xf32>
    %136 = arith.mulf %131, %135 : vector<2x32xf32>
    %c10 = arith.constant 10 : index
    %c0_36 = arith.constant 0 : index
    %137 = vector.load %arg14[%c10, %c0_36] : memref<12x32xf32, #tpu.memory_space<vmem>>, vector<2x32xf32>
    tpu.vector_store %arg14[%c10, %c0_36], %136 {strides = array<i32>} : memref<12x32xf32, #tpu.memory_space<vmem>>, vector<2x32xf32>,
    %c0_37 = arith.constant 0 : index
    %c0_38 = arith.constant 0 : index
    %138 = vector.load %arg14[%c0_37, %c0_38] : memref<12x32xf32, #tpu.memory_space<vmem>>, vector<12x32xf32>
    %139 = arith.addf %138, %9 : vector<12x32xf32>
    %c0_39 = arith.constant 0 : index
    %c0_40 = arith.constant 0 : index
    %140 = vector.load %arg6[%c0_39, %c0_40] : memref<32x32xf32, #tpu.memory_space<vmem>>, vector<32x32xf32>
    %cst_41 = arith.constant dense<0.000000e+00> : vector<12x32xf32>
    %141 = tpu.matmul %139, %140, %cst_41 {dimension_numbers = #tpu.dot_dimension_numbers<[1], [0], [0], [1], [0, 0, 1, 1], [], []>} : vector<12x32xf32>, vector<32x32xf32>, vector<12x32xf32> -> vector<12x32xf32>
    %c0_42 = arith.constant 0 : index
    %c0_43 = arith.constant 0 : index
    %142 = vector.load %arg7[%c0_42, %c0_43] : memref<1x32xf32, #tpu.memory_space<vmem>>, vector<1x32xf32>
    %143 = vector.broadcast %142 : vector<1x32xf32> to vector<12x32xf32>
    %144 = arith.addf %141, %143 : vector<12x32xf32>
    %c0_44 = arith.constant 0 : index
    %c0_45 = arith.constant 0 : index
    %145 = vector.load %arg2[%c0_44, %c0_45] : memref<16x32xf32, #tpu.memory_space<vmem>>, vector<16x32xf32>
    %c0_46 = arith.constant 0 : index
    %c0_47 = arith.constant 0 : index
    %146 = vector.load %arg8[%c0_46, %c0_47] : memref<32x64xf32, #tpu.memory_space<vmem>>, vector<32x64xf32>
    %cst_48 = arith.constant dense<0.000000e+00> : vector<16x64xf32>
    %147 = tpu.matmul %145, %146, %cst_48 {dimension_numbers = #tpu.dot_dimension_numbers<[1], [0], [0], [1], [0, 0, 1, 1], [], []>} : vector<16x32xf32>, vector<32x64xf32>, vector<16x64xf32> -> vector<16x64xf32>
    %c0_49 = arith.constant 0 : index
    %c0_50 = arith.constant 0 : index
    %148 = vector.load %arg9[%c0_49, %c0_50] : memref<1x64xf32, #tpu.memory_space<vmem>>, vector<1x64xf32>
    %149 = vector.broadcast %148 : vector<1x64xf32> to vector<16x64xf32>
    %150 = arith.addf %147, %149 : vector<16x64xf32>
    %151 = vector.shape_cast %144 : vector<12x32xf32> to vector<6x2x32xf32>
    %152 = vector.shape_cast %150 : vector<16x64xf32> to vector<2x8x64xf32>
    %153 = vector.extract_strided_slice %152 {offsets = [0, 0, 0], sizes = [2, 8, 32], strides = [1, 1, 1]} : vector<2x8x64xf32> to vector<2x8x32xf32>
    %154 = vector.extract_strided_slice %152 {offsets = [0, 0, 32], sizes = [2, 8, 32], strides = [1, 1, 1]} : vector<2x8x64xf32> to vector<2x8x32xf32>
    %155 = vector.shape_cast %151 : vector<6x2x32xf32> to vector<6x2x1x32xf32>
    %156 = vector.shape_cast %153 : vector<2x8x32xf32> to vector<1x2x8x32xf32>
    %157 = vector.broadcast %155 : vector<6x2x1x32xf32> to vector<6x2x8x32xf32>
    %158 = vector.broadcast %156 : vector<1x2x8x32xf32> to vector<6x2x8x32xf32>
    %159 = arith.addf %157, %158 : vector<6x2x8x32xf32>
    %160 = math.tanh %159 : vector<6x2x8x32xf32>
    %c0_51 = arith.constant 0 : index
    %c0_52 = arith.constant 0 : index
    %161 = vector.load %arg10[%c0_51, %c0_52] : memref<1x32xf32, #tpu.memory_space<vmem>>, vector<1x32xf32>
    %162 = vector.shape_cast %161 : vector<1x32xf32> to vector<1x1x1x32xf32>
    %163 = vector.broadcast %162 : vector<1x1x1x32xf32> to vector<6x2x8x32xf32>
    %164 = arith.mulf %160, %163 : vector<6x2x8x32xf32>
    %cst_53 = arith.constant dense<0.000000e+00> : vector<6x2x8xf32>
    %165 = vector.multi_reduction <add>, %164, %cst_53 [3] : vector<6x2x8x32xf32> to vector<6x2x8xf32>
    %c0_54 = arith.constant 0 : index
    %c0_55 = arith.constant 0 : index
    %166 = vector.load %arg3[%c0_54, %c0_55] : memref<2x8xf32, #tpu.memory_space<vmem>>, vector<2x8xf32>
    %167 = vector.shape_cast %166 : vector<2x8xf32> to vector<1x2x8xf32>
    %168 = vector.broadcast %167 : vector<1x2x8xf32> to vector<6x2x8xf32>
    %169 = arith.addf %165, %168 : vector<6x2x8xf32>
    %cst_56 = arith.constant dense<0xFF800000> : vector<6x2xf32>
    %170 = vector.multi_reduction <maximumf>, %169, %cst_56 [2] : vector<6x2x8xf32> to vector<6x2xf32>
    %171 = vector.shape_cast %170 : vector<6x2xf32> to vector<6x2x1xf32>
    %172 = vector.broadcast %171 : vector<6x2x1xf32> to vector<6x2x8xf32>
    %173 = arith.subf %169, %172 : vector<6x2x8xf32>
    %174 = math.exp %173 : vector<6x2x8xf32>
    %cst_57 = arith.constant dense<0.000000e+00> : vector<6x2xf32>
    %175 = vector.multi_reduction <add>, %174, %cst_57 [2] : vector<6x2x8xf32> to vector<6x2xf32>
    %176 = vector.shape_cast %175 : vector<6x2xf32> to vector<6x2x1xf32>
    %177 = tpu.reciprocal %176 {approx = true} : vector<6x2x1xf32> -> vector<6x2x1xf32>
    %178 = vector.broadcast %177 : vector<6x2x1xf32> to vector<6x2x8xf32>
    %179 = arith.mulf %174, %178 : vector<6x2x8xf32>
    %180 = vector.shape_cast %179 : vector<6x2x8xf32> to vector<6x2x8x1xf32>
    %181 = vector.shape_cast %154 : vector<2x8x32xf32> to vector<1x2x8x32xf32>
    %182 = vector.broadcast %180 : vector<6x2x8x1xf32> to vector<6x2x8x32xf32>
    %183 = vector.broadcast %181 : vector<1x2x8x32xf32> to vector<6x2x8x32xf32>
    %184 = arith.mulf %182, %183 : vector<6x2x8x32xf32>
    %cst_58 = arith.constant dense<0.000000e+00> : vector<6x2x32xf32>
    %185 = vector.multi_reduction <add>, %184, %cst_58 [2] : vector<6x2x8x32xf32> to vector<6x2x32xf32>
    %186 = vector.shape_cast %185 : vector<6x2x32xf32> to vector<12x32xf32>
    %c64 = arith.constant 64 : index
    %c0_59 = arith.constant 0 : index
    %187 = vector.load %arg4[%c64, %c0_59] : memref<160x128xf32, #tpu.memory_space<vmem>>, vector<32x128xf32>
    %cst_60 = arith.constant dense<0.000000e+00> : vector<12x128xf32>
    %188 = tpu.matmul %139, %187, %cst_60 {dimension_numbers = #tpu.dot_dimension_numbers<[1], [0], [0], [1], [0, 0, 1, 1], [], []>} : vector<12x32xf32>, vector<32x128xf32>, vector<12x128xf32> -> vector<12x128xf32>
    %c96 = arith.constant 96 : index
    %c0_61 = arith.constant 0 : index
    %189 = vector.load %arg4[%c96, %c0_61] : memref<160x128xf32, #tpu.memory_space<vmem>>, vector<32x128xf32>
    %cst_62 = arith.constant dense<0.000000e+00> : vector<12x128xf32>
    %190 = tpu.matmul %186, %189, %cst_62 {dimension_numbers = #tpu.dot_dimension_numbers<[1], [0], [0], [1], [0, 0, 1, 1], [], []>} : vector<12x32xf32>, vector<32x128xf32>, vector<12x128xf32> -> vector<12x128xf32>
    %191 = arith.addf %188, %190 : vector<12x128xf32>
    %c1 = arith.constant 1 : index
    %c0_63 = arith.constant 0 : index
    %192 = vector.load %arg5[%c1, %c0_63] : memref<2x128xf32, #tpu.memory_space<vmem>>, vector<1x128xf32>
    %193 = vector.broadcast %192 : vector<1x128xf32> to vector<12x128xf32>
    %194 = arith.addf %191, %193 : vector<12x128xf32>
    %c128 = arith.constant 128 : index
    %c0_64 = arith.constant 0 : index
    %195 = vector.load %arg4[%c128, %c0_64] : memref<160x128xf32, #tpu.memory_space<vmem>>, vector<32x128xf32>
    %c2_65 = arith.constant 2 : index
    %c0_66 = arith.constant 0 : index
    %196 = vector.load %arg1[%c2_65, %c0_66] : memref<8x32xf32, #tpu.memory_space<vmem>>, vector<2x32xf32>
    %c6_67 = arith.constant 6 : index
    %c0_68 = arith.constant 0 : index
    %197 = vector.load %arg1[%c6_67, %c0_68] : memref<8x32xf32, #tpu.memory_space<vmem>>, vector<2x32xf32>
    %198 = vector.extract_strided_slice %194 {offsets = [0, 0], sizes = [2, 128], strides = [1, 1]} : vector<12x128xf32> to vector<2x128xf32>
    %cst_69 = arith.constant dense<0.000000e+00> : vector<2x128xf32>
    %199 = tpu.matmul %196, %195, %cst_69 {dimension_numbers = #tpu.dot_dimension_numbers<[1], [0], [0], [1], [0, 0, 1, 1], [], []>} : vector<2x32xf32>, vector<32x128xf32>, vector<2x128xf32> -> vector<2x128xf32>
    %200 = arith.addf %198, %199 : vector<2x128xf32>
    %201 = arith.mulf %200, %8 : vector<2x128xf32>
    %202 = math.tanh %201 : vector<2x128xf32>
    %cst_70 = arith.constant 5.000000e-01 : f32
    %203 = vector.broadcast %cst_70 : f32 to vector<2x128xf32>
    %204 = arith.mulf %203, %202 : vector<2x128xf32>
    %cst_71 = arith.constant 5.000000e-01 : f32
    %205 = vector.broadcast %cst_71 : f32 to vector<2x128xf32>
    %206 = arith.addf %204, %205 : vector<2x128xf32>
    %207 = arith.select %5, %202, %206 : vector<2x128xi1>, vector<2x128xf32>
    %208 = vector.extract_strided_slice %207 {offsets = [0, 0], sizes = [2, 32], strides = [1, 1]} : vector<2x128xf32> to vector<2x32xf32>
    %209 = vector.extract_strided_slice %207 {offsets = [0, 32], sizes = [2, 32], strides = [1, 1]} : vector<2x128xf32> to vector<2x32xf32>
    %210 = vector.extract_strided_slice %207 {offsets = [0, 64], sizes = [2, 32], strides = [1, 1]} : vector<2x128xf32> to vector<2x32xf32>
    %211 = vector.extract_strided_slice %207 {offsets = [0, 96], sizes = [2, 32], strides = [1, 1]} : vector<2x128xf32> to vector<2x32xf32>
    %212 = arith.mulf %209, %197 : vector<2x32xf32>
    %213 = arith.mulf %208, %210 : vector<2x32xf32>
    %214 = arith.addf %212, %213 : vector<2x32xf32>
    %215 = math.tanh %214 : vector<2x32xf32>
    %216 = arith.mulf %211, %215 : vector<2x32xf32>
    %c0_72 = arith.constant 0 : index
    %c0_73 = arith.constant 0 : index
    %217 = vector.load %arg14[%c0_72, %c0_73] : memref<12x32xf32, #tpu.memory_space<vmem>>, vector<2x32xf32>
    tpu.vector_store %arg14[%c0_72, %c0_73], %216 {strides = array<i32>} : memref<12x32xf32, #tpu.memory_space<vmem>>, vector<2x32xf32>,
    %218 = vector.extract_strided_slice %194 {offsets = [2, 0], sizes = [2, 128], strides = [1, 1]} : vector<12x128xf32> to vector<2x128xf32>
    %cst_74 = arith.constant dense<0.000000e+00> : vector<2x128xf32>
    %219 = tpu.matmul %216, %195, %cst_74 {dimension_numbers = #tpu.dot_dimension_numbers<[1], [0], [0], [1], [0, 0, 1, 1], [], []>} : vector<2x32xf32>, vector<32x128xf32>, vector<2x128xf32> -> vector<2x128xf32>
    %220 = arith.addf %218, %219 : vector<2x128xf32>
    %221 = arith.mulf %220, %8 : vector<2x128xf32>
    %222 = math.tanh %221 : vector<2x128xf32>
    %cst_75 = arith.constant 5.000000e-01 : f32
    %223 = vector.broadcast %cst_75 : f32 to vector<2x128xf32>
    %224 = arith.mulf %223, %222 : vector<2x128xf32>
    %cst_76 = arith.constant 5.000000e-01 : f32
    %225 = vector.broadcast %cst_76 : f32 to vector<2x128xf32>
    %226 = arith.addf %224, %225 : vector<2x128xf32>
    %227 = arith.select %5, %222, %226 : vector<2x128xi1>, vector<2x128xf32>
    %228 = vector.extract_strided_slice %227 {offsets = [0, 0], sizes = [2, 32], strides = [1, 1]} : vector<2x128xf32> to vector<2x32xf32>
    %229 = vector.extract_strided_slice %227 {offsets = [0, 32], sizes = [2, 32], strides = [1, 1]} : vector<2x128xf32> to vector<2x32xf32>
    %230 = vector.extract_strided_slice %227 {offsets = [0, 64], sizes = [2, 32], strides = [1, 1]} : vector<2x128xf32> to vector<2x32xf32>
    %231 = vector.extract_strided_slice %227 {offsets = [0, 96], sizes = [2, 32], strides = [1, 1]} : vector<2x128xf32> to vector<2x32xf32>
    %232 = arith.mulf %229, %214 : vector<2x32xf32>
    %233 = arith.mulf %228, %230 : vector<2x32xf32>
    %234 = arith.addf %232, %233 : vector<2x32xf32>
    %235 = math.tanh %234 : vector<2x32xf32>
    %236 = arith.mulf %231, %235 : vector<2x32xf32>
    %c2_77 = arith.constant 2 : index
    %c0_78 = arith.constant 0 : index
    %237 = vector.load %arg14[%c2_77, %c0_78] : memref<12x32xf32, #tpu.memory_space<vmem>>, vector<2x32xf32>
    tpu.vector_store %arg14[%c2_77, %c0_78], %236 {strides = array<i32>} : memref<12x32xf32, #tpu.memory_space<vmem>>, vector<2x32xf32>,
    %238 = vector.extract_strided_slice %194 {offsets = [4, 0], sizes = [2, 128], strides = [1, 1]} : vector<12x128xf32> to vector<2x128xf32>
    %cst_79 = arith.constant dense<0.000000e+00> : vector<2x128xf32>
    %239 = tpu.matmul %236, %195, %cst_79 {dimension_numbers = #tpu.dot_dimension_numbers<[1], [0], [0], [1], [0, 0, 1, 1], [], []>} : vector<2x32xf32>, vector<32x128xf32>, vector<2x128xf32> -> vector<2x128xf32>
    %240 = arith.addf %238, %239 : vector<2x128xf32>
    %241 = arith.mulf %240, %8 : vector<2x128xf32>
    %242 = math.tanh %241 : vector<2x128xf32>
    %cst_80 = arith.constant 5.000000e-01 : f32
    %243 = vector.broadcast %cst_80 : f32 to vector<2x128xf32>
    %244 = arith.mulf %243, %242 : vector<2x128xf32>
    %cst_81 = arith.constant 5.000000e-01 : f32
    %245 = vector.broadcast %cst_81 : f32 to vector<2x128xf32>
    %246 = arith.addf %244, %245 : vector<2x128xf32>
    %247 = arith.select %5, %242, %246 : vector<2x128xi1>, vector<2x128xf32>
    %248 = vector.extract_strided_slice %247 {offsets = [0, 0], sizes = [2, 32], strides = [1, 1]} : vector<2x128xf32> to vector<2x32xf32>
    %249 = vector.extract_strided_slice %247 {offsets = [0, 32], sizes = [2, 32], strides = [1, 1]} : vector<2x128xf32> to vector<2x32xf32>
    %250 = vector.extract_strided_slice %247 {offsets = [0, 64], sizes = [2, 32], strides = [1, 1]} : vector<2x128xf32> to vector<2x32xf32>
    %251 = vector.extract_strided_slice %247 {offsets = [0, 96], sizes = [2, 32], strides = [1, 1]} : vector<2x128xf32> to vector<2x32xf32>
    %252 = arith.mulf %249, %234 : vector<2x32xf32>
    %253 = arith.mulf %248, %250 : vector<2x32xf32>
    %254 = arith.addf %252, %253 : vector<2x32xf32>
    %255 = math.tanh %254 : vector<2x32xf32>
    %256 = arith.mulf %251, %255 : vector<2x32xf32>
    %c4_82 = arith.constant 4 : index
    %c0_83 = arith.constant 0 : index
    %257 = vector.load %arg14[%c4_82, %c0_83] : memref<12x32xf32, #tpu.memory_space<vmem>>, vector<2x32xf32>
    tpu.vector_store %arg14[%c4_82, %c0_83], %256 {strides = array<i32>} : memref<12x32xf32, #tpu.memory_space<vmem>>, vector<2x32xf32>,
    %258 = vector.extract_strided_slice %194 {offsets = [6, 0], sizes = [2, 128], strides = [1, 1]} : vector<12x128xf32> to vector<2x128xf32>
    %cst_84 = arith.constant dense<0.000000e+00> : vector<2x128xf32>
    %259 = tpu.matmul %256, %195, %cst_84 {dimension_numbers = #tpu.dot_dimension_numbers<[1], [0], [0], [1], [0, 0, 1, 1], [], []>} : vector<2x32xf32>, vector<32x128xf32>, vector<2x128xf32> -> vector<2x128xf32>
    %260 = arith.addf %258, %259 : vector<2x128xf32>
    %261 = arith.mulf %260, %8 : vector<2x128xf32>
    %262 = math.tanh %261 : vector<2x128xf32>
    %cst_85 = arith.constant 5.000000e-01 : f32
    %263 = vector.broadcast %cst_85 : f32 to vector<2x128xf32>
    %264 = arith.mulf %263, %262 : vector<2x128xf32>
    %cst_86 = arith.constant 5.000000e-01 : f32
    %265 = vector.broadcast %cst_86 : f32 to vector<2x128xf32>
    %266 = arith.addf %264, %265 : vector<2x128xf32>
    %267 = arith.select %5, %262, %266 : vector<2x128xi1>, vector<2x128xf32>
    %268 = vector.extract_strided_slice %267 {offsets = [0, 0], sizes = [2, 32], strides = [1, 1]} : vector<2x128xf32> to vector<2x32xf32>
    %269 = vector.extract_strided_slice %267 {offsets = [0, 32], sizes = [2, 32], strides = [1, 1]} : vector<2x128xf32> to vector<2x32xf32>
    %270 = vector.extract_strided_slice %267 {offsets = [0, 64], sizes = [2, 32], strides = [1, 1]} : vector<2x128xf32> to vector<2x32xf32>
    %271 = vector.extract_strided_slice %267 {offsets = [0, 96], sizes = [2, 32], strides = [1, 1]} : vector<2x128xf32> to vector<2x32xf32>
    %272 = arith.mulf %269, %254 : vector<2x32xf32>
    %273 = arith.mulf %268, %270 : vector<2x32xf32>
    %274 = arith.addf %272, %273 : vector<2x32xf32>
    %275 = math.tanh %274 : vector<2x32xf32>
    %276 = arith.mulf %271, %275 : vector<2x32xf32>
    %c6_87 = arith.constant 6 : index
    %c0_88 = arith.constant 0 : index
    %277 = vector.load %arg14[%c6_87, %c0_88] : memref<12x32xf32, #tpu.memory_space<vmem>>, vector<2x32xf32>
    tpu.vector_store %arg14[%c6_87, %c0_88], %276 {strides = array<i32>} : memref<12x32xf32, #tpu.memory_space<vmem>>, vector<2x32xf32>,
    %278 = vector.extract_strided_slice %194 {offsets = [8, 0], sizes = [2, 128], strides = [1, 1]} : vector<12x128xf32> to vector<2x128xf32>
    %cst_89 = arith.constant dense<0.000000e+00> : vector<2x128xf32>
    %279 = tpu.matmul %276, %195, %cst_89 {dimension_numbers = #tpu.dot_dimension_numbers<[1], [0], [0], [1], [0, 0, 1, 1], [], []>} : vector<2x32xf32>, vector<32x128xf32>, vector<2x128xf32> -> vector<2x128xf32>
    %280 = arith.addf %278, %279 : vector<2x128xf32>
    %281 = arith.mulf %280, %8 : vector<2x128xf32>
    %282 = math.tanh %281 : vector<2x128xf32>
    %cst_90 = arith.constant 5.000000e-01 : f32
    %283 = vector.broadcast %cst_90 : f32 to vector<2x128xf32>
    %284 = arith.mulf %283, %282 : vector<2x128xf32>
    %cst_91 = arith.constant 5.000000e-01 : f32
    %285 = vector.broadcast %cst_91 : f32 to vector<2x128xf32>
    %286 = arith.addf %284, %285 : vector<2x128xf32>
    %287 = arith.select %5, %282, %286 : vector<2x128xi1>, vector<2x128xf32>
    %288 = vector.extract_strided_slice %287 {offsets = [0, 0], sizes = [2, 32], strides = [1, 1]} : vector<2x128xf32> to vector<2x32xf32>
    %289 = vector.extract_strided_slice %287 {offsets = [0, 32], sizes = [2, 32], strides = [1, 1]} : vector<2x128xf32> to vector<2x32xf32>
    %290 = vector.extract_strided_slice %287 {offsets = [0, 64], sizes = [2, 32], strides = [1, 1]} : vector<2x128xf32> to vector<2x32xf32>
    %291 = vector.extract_strided_slice %287 {offsets = [0, 96], sizes = [2, 32], strides = [1, 1]} : vector<2x128xf32> to vector<2x32xf32>
    %292 = arith.mulf %289, %274 : vector<2x32xf32>
    %293 = arith.mulf %288, %290 : vector<2x32xf32>
    %294 = arith.addf %292, %293 : vector<2x32xf32>
    %295 = math.tanh %294 : vector<2x32xf32>
    %296 = arith.mulf %291, %295 : vector<2x32xf32>
    %c8_92 = arith.constant 8 : index
    %c0_93 = arith.constant 0 : index
    %297 = vector.load %arg14[%c8_92, %c0_93] : memref<12x32xf32, #tpu.memory_space<vmem>>, vector<2x32xf32>
    tpu.vector_store %arg14[%c8_92, %c0_93], %296 {strides = array<i32>} : memref<12x32xf32, #tpu.memory_space<vmem>>, vector<2x32xf32>,
    %298 = vector.extract_strided_slice %194 {offsets = [10, 0], sizes = [2, 128], strides = [1, 1]} : vector<12x128xf32> to vector<2x128xf32>
    %cst_94 = arith.constant dense<0.000000e+00> : vector<2x128xf32>
    %299 = tpu.matmul %296, %195, %cst_94 {dimension_numbers = #tpu.dot_dimension_numbers<[1], [0], [0], [1], [0, 0, 1, 1], [], []>} : vector<2x32xf32>, vector<32x128xf32>, vector<2x128xf32> -> vector<2x128xf32>
    %300 = arith.addf %298, %299 : vector<2x128xf32>
    %301 = arith.mulf %300, %8 : vector<2x128xf32>
    %302 = math.tanh %301 : vector<2x128xf32>
    %cst_95 = arith.constant 5.000000e-01 : f32
    %303 = vector.broadcast %cst_95 : f32 to vector<2x128xf32>
    %304 = arith.mulf %303, %302 : vector<2x128xf32>
    %cst_96 = arith.constant 5.000000e-01 : f32
    %305 = vector.broadcast %cst_96 : f32 to vector<2x128xf32>
    %306 = arith.addf %304, %305 : vector<2x128xf32>
    %307 = arith.select %5, %302, %306 : vector<2x128xi1>, vector<2x128xf32>
    %308 = vector.extract_strided_slice %307 {offsets = [0, 0], sizes = [2, 32], strides = [1, 1]} : vector<2x128xf32> to vector<2x32xf32>
    %309 = vector.extract_strided_slice %307 {offsets = [0, 32], sizes = [2, 32], strides = [1, 1]} : vector<2x128xf32> to vector<2x32xf32>
    %310 = vector.extract_strided_slice %307 {offsets = [0, 64], sizes = [2, 32], strides = [1, 1]} : vector<2x128xf32> to vector<2x32xf32>
    %311 = vector.extract_strided_slice %307 {offsets = [0, 96], sizes = [2, 32], strides = [1, 1]} : vector<2x128xf32> to vector<2x32xf32>
    %312 = arith.mulf %309, %294 : vector<2x32xf32>
    %313 = arith.mulf %308, %310 : vector<2x32xf32>
    %314 = arith.addf %312, %313 : vector<2x32xf32>
    %315 = math.tanh %314 : vector<2x32xf32>
    %316 = arith.mulf %311, %315 : vector<2x32xf32>
    %c10_97 = arith.constant 10 : index
    %c0_98 = arith.constant 0 : index
    %317 = vector.load %arg14[%c10_97, %c0_98] : memref<12x32xf32, #tpu.memory_space<vmem>>, vector<2x32xf32>
    tpu.vector_store %arg14[%c10_97, %c0_98], %316 {strides = array<i32>} : memref<12x32xf32, #tpu.memory_space<vmem>>, vector<2x32xf32>,
    %c0_99 = arith.constant 0 : index
    %c0_100 = arith.constant 0 : index
    %318 = vector.load %arg14[%c0_99, %c0_100] : memref<12x32xf32, #tpu.memory_space<vmem>>, vector<12x32xf32>
    %c0_101 = arith.constant 0 : index
    %c0_102 = arith.constant 0 : index
    %319 = vector.load %arg11[%c0_101, %c0_102] : memref<32x128xf32, #tpu.memory_space<vmem>>, vector<32x128xf32>
    %cst_103 = arith.constant dense<0.000000e+00> : vector<12x128xf32>
    %320 = tpu.matmul %318, %319, %cst_103 {dimension_numbers = #tpu.dot_dimension_numbers<[1], [0], [0], [1], [0, 0, 1, 1], [], []>} : vector<12x32xf32>, vector<32x128xf32>, vector<12x128xf32> -> vector<12x128xf32>
    %c0_104 = arith.constant 0 : index
    %c0_105 = arith.constant 0 : index
    %321 = vector.load %arg12[%c0_104, %c0_105] : memref<1x128xf32, #tpu.memory_space<vmem>>, vector<1x128xf32>
    %322 = vector.broadcast %321 : vector<1x128xf32> to vector<12x128xf32>
    %323 = arith.addf %320, %322 : vector<12x128xf32>
    %c0_106 = arith.constant 0 : index
    %c0_107 = arith.constant 0 : index
    %324 = vector.load %arg13[%c0_106, %c0_107] : memref<12x128xf32, #tpu.memory_space<vmem>>, vector<12x128xf32>
    tpu.vector_store %arg13[%c0_106, %c0_107], %323 {strides = array<i32>} : memref<12x128xf32, #tpu.memory_space<vmem>>, vector<12x128xf32>,
    return
  }
}

</mosaic_0001>

<llo_original>
// kernel: decoder_forward.1
$region0: #{decoder_forward.1}
  #allocation0 [shape = 'u32[]', space=smem, size = 0x4, offset = 0x4, fixed_abs, tag = 'smem constant byte address 0x4 - core index']
  #allocation1 [shape = 'u32[144,128]{1,0:T(1,128)}', space=vmem, size = 0x12000, scoped, tag = 'internal scratch']
  #allocation2 [shape = 'f32[12,32]{1,0:T(8,128)}', space=vmem, size = 0x2000, scoped, tag = 'scratch operand']
  %s0 = inlined_call_operand.vmem [shape: f32[12,32], index: 0, kind: input, shape index: {}]
  %s1 = inlined_call_operand.vmem [shape: f32[8,32], index: 1, kind: input, shape index: {}]
  %s2 = inlined_call_operand.vmem [shape: f32[16,32], index: 2, kind: input, shape index: {}]
  %s3 = inlined_call_operand.vmem [shape: f32[2,8], index: 3, kind: input, shape index: {}]
  %s4 = inlined_call_operand.vmem [shape: f32[160,128], index: 4, kind: input, shape index: {}]
  %s5 = inlined_call_operand.vmem [shape: f32[2,128], index: 5, kind: input, shape index: {}]
  %s6 = inlined_call_operand.vmem [shape: f32[32,32], index: 6, kind: input, shape index: {}]
  %s7 = inlined_call_operand.vmem [shape: f32[1,32], index: 7, kind: input, shape index: {}]
  %s8 = inlined_call_operand.vmem [shape: f32[32,64], index: 8, kind: input, shape index: {}]
  %s9 = inlined_call_operand.vmem [shape: f32[1,64], index: 9, kind: input, shape index: {}]
  %s10 = inlined_call_operand.vmem [shape: f32[1,32], index: 10, kind: input, shape index: {}]
  %s11 = inlined_call_operand.vmem [shape: f32[32,128], index: 11, kind: input, shape index: {}]
  %s12 = inlined_call_operand.vmem [shape: f32[1,128], index: 12, kind: input, shape index: {}]
  %s13 = inlined_call_operand.vmem [shape: f32[12,128], index: 13, kind: output, shape index: {}]
  %s14 = sld [smem:[#allocation0]]
  $region62: #{decoder_forward.1} parent=0
    _
  %s16 = ssub.s32 1, %s14
  %s17 = scalar_select 0, %s16, %s14
  // Predicated region
  $region2: #{decoder_forward.1} parent=0 // pred_check
    _
  $region3: #{decoder_forward.1} parent=0 // pred_check_branch
    %19 = sbr.rel (0) target = $region5
  $region4: #{decoder_forward.1} parent=0 // pred_region
    _
  $region5: #{decoder_forward.1} parent=0 // pred_fallthru
    _
  // Predicated region
  $region6: #{decoder_forward.1} parent=0 // pred_check
    _
  $region7: #{decoder_forward.1} parent=0 // pred_check_branch
    %21 = sbr.rel (0) target = $region9
  $region8: #{decoder_forward.1} parent=0 // pred_region
    _
  $region9: #{decoder_forward.1} parent=0 // pred_fallthru
    _
  // Predicated region
  $region10: #{decoder_forward.1} parent=0 // pred_check
    _
  $region11: #{decoder_forward.1} parent=0 // pred_check_branch
    %23 = sbr.rel (0) target = $region13
  $region12: #{decoder_forward.1} parent=0 // pred_region
    _
  $region13: #{decoder_forward.1} parent=0 // pred_fallthru
    _
  // Predicated region
  $region14: #{decoder_forward.1} parent=0 // pred_check
    _
  $region15: #{decoder_forward.1} parent=0 // pred_check_branch
    %25 = sbr.rel (0) target = $region17
  $region16: #{decoder_forward.1} parent=0 // pred_region
    _
  $region17: #{decoder_forward.1} parent=0 // pred_fallthru
    _
  // Predicated region
  $region18: #{decoder_forward.1} parent=0 // pred_check
    _
  $region19: #{decoder_forward.1} parent=0 // pred_check_branch
    %27 = sbr.rel (0) target = $region21
  $region20: #{decoder_forward.1} parent=0 // pred_region
    _
  $region21: #{decoder_forward.1} parent=0 // pred_fallthru
    _
  // Predicated region
  $region22: #{decoder_forward.1} parent=0 // pred_check
    _
  $region23: #{decoder_forward.1} parent=0 // pred_check_branch
    %29 = sbr.rel (0) target = $region25
  $region24: #{decoder_forward.1} parent=0 // pred_region
    _
  $region25: #{decoder_forward.1} parent=0 // pred_fallthru
    _
  // Predicated region
  $region26: #{decoder_forward.1} parent=0 // pred_check
    _
  $region27: #{decoder_forward.1} parent=0 // pred_check_branch
    %31 = sbr.rel (0) target = $region29
  $region28: #{decoder_forward.1} parent=0 // pred_region
    _
  $region29: #{decoder_forward.1} parent=0 // pred_fallthru
    _
  // Predicated region
  $region30: #{decoder_forward.1} parent=0 // pred_check
    _
  $region31: #{decoder_forward.1} parent=0 // pred_check_branch
    %33 = sbr.rel (0) target = $region33
  $region32: #{decoder_forward.1} parent=0 // pred_region
    _
  $region33: #{decoder_forward.1} parent=0 // pred_fallthru
    _
  // Predicated region
  $region34: #{decoder_forward.1} parent=0 // pred_check
    _
  $region35: #{decoder_forward.1} parent=0 // pred_check_branch
    %35 = sbr.rel (0) target = $region37
  $region36: #{decoder_forward.1} parent=0 // pred_region
    _
  $region37: #{decoder_forward.1} parent=0 // pred_fallthru
    _
  // Predicated region
  $region38: #{decoder_forward.1} parent=0 // pred_check
    _
  $region39: #{decoder_forward.1} parent=0 // pred_check_branch
    %37 = sbr.rel (0) target = $region41
  $region40: #{decoder_forward.1} parent=0 // pred_region
    _
  $region41: #{decoder_forward.1} parent=0 // pred_fallthru
    _
  // Predicated region
  $region42: #{decoder_forward.1} parent=0 // pred_check
    _
  $region43: #{decoder_forward.1} parent=0 // pred_check_branch
    %39 = sbr.rel (0) target = $region45
  $region44: #{decoder_forward.1} parent=0 // pred_region
    _
  $region45: #{decoder_forward.1} parent=0 // pred_fallthru
    _
  // Predicated region
  $region46: #{decoder_forward.1} parent=0 // pred_check
    _
  $region47: #{decoder_forward.1} parent=0 // pred_check_branch
    %41 = sbr.rel (0) target = $region49
  $region48: #{decoder_forward.1} parent=0 // pred_region
    _
  $region49: #{decoder_forward.1} parent=0 // pred_fallthru
    _
  // Predicated region
  $region50: #{decoder_forward.1} parent=0 // pred_check
    _
  $region51: #{decoder_forward.1} parent=0 // pred_check_branch
    %43 = sbr.rel (0) target = $region53
  $region52: #{decoder_forward.1} parent=0 // pred_region
    _
  $region53: #{decoder_forward.1} parent=0 // pred_fallthru
    _
  %v44 = vlaneseq
  %v45 = vand.u32 %v44, 127
  %vm46 = vcmp.ge.s32.totalorder %v45, 64
  %vm47 = vcmp.lt.s32.totalorder %v45, 96
  %vm48 = vmand %vm46, %vm47
  %v49 = vsel %vm48, 1.0, 0.5
  %v50 = vld [vmem:[%s0] sm:$0xff]
  %v51 = vld [vmem:[%s0 + $0x8] sm:$0xf]
  %v52 = vld [vmem:[%s4] sm:$0xff]
  %v53 = vld [vmem:[%s4 + $0x8] sm:$0xff]
  %v54 = vld [vmem:[%s4 + $0x10] sm:$0xff]
  %v55 = vld [vmem:[%s4 + $0x18] sm:$0xff]
  %v56 = vld [vmem:[%s5] sm:$0x1]
  %v57 = vlaneseq
  %v58 = vshrl.u32 %v57, 7
  %v59 = vsub.s32 0, %v58
  %v60 = vrot.slane %v56, %v59
  %vm61 = vcmask 261120
  %v63 = vsel %vm61, %v50, 0
  %v66 = vsel %vm61, %v51, 0
  %68 = vmatprep.subr.mxu0 0.0
  %69 = vmatpush1.msra.mxu0 %v52
  %70 = vmatprep.subr.mxu0 0.0
  %71 = vmatpush1.msra.mxu0 %v53
  %72 = vmatprep.subr.mxu0 0.0
  %73 = vmatpush1.msra.mxu0 %v54
  %74 = vmatprep.subr.mxu0 0.0
  %75 = vmatpush1.msra.mxu0 %v55
  %76 = vmatprep.subr.mxu0 0.0
  %77 = vmatpush1.msra.mxu0 0.0
  %78 = vmatprep.subr.mxu0 0.0
  %79 = vmatpush1.msra.mxu0 0.0
  %80 = vmatprep.subr.mxu0 0.0
  %81 = vmatpush1.msra.mxu0 0.0
  %82 = vmatprep.subr.mxu0 0.0
  %83 = vmatpush1.msra.mxu0 0.0
  %84 = vmatprep.subr.mxu0 0.0
  %85 = vmatpush1.msra.mxu0 0.0
  %86 = vmatprep.subr.mxu0 0.0
  %87 = vmatpush1.msra.mxu0 0.0
  %88 = vmatprep.subr.mxu0 0.0
  %89 = vmatpush1.msra.mxu0 0.0
  %90 = vmatprep.subr.mxu0 0.0
  %91 = vmatpush1.msra.mxu0 0.0
  %92 = vmatprep.subr.mxu0 0.0
  %93 = vmatpush1.msra.mxu0 0.0
  %94 = vmatprep.subr.mxu0 0.0
  %95 = vmatpush1.msra.mxu0 0.0
  %96 = vmatprep.subr.mxu0 0.0
  %97 = vmatpush1.msra.mxu0 0.0
  %98 = vmatprep.subr.mxu0 0.0
  %99 = vmatpush1.msra.mxu0 0.0
  %100 = vmatprep.subr.mxu0 0.0
  %101 = vmatpush1.msra.mxu0 0.0
  %102 = vmatprep.subr.mxu0 0.0
  %103 = vmatpush1.msra.mxu0 0.0
  %104 = vmatprep.subr.mxu0 0.0
  %105 = vmatpush1.msra.mxu0 0.0
  %106 = vmatprep.subr.mxu0 0.0
  %107 = vmatpush1.msra.mxu0 0.0
  %108 = vmatprep.subr.mxu0 0.0
  %109 = vmatpush1.msra.mxu0 0.0
  %110 = vmatprep.subr.mxu0 0.0
  %111 = vmatpush1.msra.mxu0 0.0
  %112 = vmatprep.subr.mxu0 0.0
  %113 = vmatpush1.msra.mxu0 0.0
  %114 = vmatprep.subr.mxu0 0.0
  %115 = vmatpush1.msra.mxu0 0.0
  %116 = vmatprep.subr.mxu0 0.0
  %117 = vmatpush1.msra.mxu0 0.0
  %118 = vmatprep.subr.mxu0 0.0
  %119 = vmatpush1.msra.mxu0 0.0
  %120 = vmatprep.subr.mxu0 0.0
  %121 = vmatpush1.msra.mxu0 0.0
  %122 = vmatprep.subr.mxu0 0.0
  %123 = vmatpush1.msra.mxu0 0.0
  %124 = vmatprep.subr.mxu0 0.0
  %125 = vmatpush1.msra.mxu0 0.0
  %126 = vmatprep.subr.mxu0 0.0
  %127 = vmatpush1.msra.mxu0 0.0
  %128 = vmatprep.subr.mxu0 0.0
  %129 = vmatpush1.msra.mxu0 0.0
  %130 = vmatprep.subr.mxu0 0.0
  %131 = vmatpush1.msra.mxu0 0.0
  %132 = vmatprep.mubr.f32.mxu0 0.0
  %133 = vmatmul.mubr.f32.gmra.mrb[0].mxu0 %v63
  %v134 = vpop.f32.mrb[0].mxu0
  %v135 = vadd.f32 %v60, %v134
  %v136 = vpop.f32.mrb[0].mxu0
  %137 = vmatprep.mubr.f32.mxu0 0.0
  %138 = vmatmul.mubr.f32.gmra.mrb[0].mxu0 %v66
  %v139 = vpop.f32.mrb[0].mxu0
  %v140 = vadd.f32 %v60, %v139
  %v141 = vpop.f32.mrb[0].mxu0
  %142 = vdwg.mxu0
  %v143 = vld [vmem:[%s4 + $0x20] sm:$0xff]
  %v144 = vld [vmem:[%s4 + $0x28] sm:$0xff]
  %v145 = vld [vmem:[%s4 + $0x30] sm:$0xff]
  %v146 = vld [vmem:[%s4 + $0x38] sm:$0xff]
  %v147 = vld [vmem:[%s1] sm:$0x3]
  %v148 = vld [vmem:[%s1 + $0x4] sm:$0x3]
  %v150 = vsel %vm61, %v147, 0
  %152 = vmatprep.subr.mxu0 0.0
  %153 = vmatpush1.msra.mxu0 %v143
  %154 = vmatprep.subr.mxu0 0.0
  %155 = vmatpush1.msra.mxu0 %v144
  %156 = vmatprep.subr.mxu0 0.0
  %157 = vmatpush1.msra.mxu0 %v145
  %158 = vmatprep.subr.mxu0 0.0
  %159 = vmatpush1.msra.mxu0 %v146
  %160 = vmatprep.subr.mxu0 0.0
  %161 = vmatpush1.msra.mxu0 0.0
  %162 = vmatprep.subr.mxu0 0.0
  %163 = vmatpush1.msra.mxu0 0.0
  %164 = vmatprep.subr.mxu0 0.0
  %165 = vmatpush1.msra.mxu0 0.0
  %166 = vmatprep.subr.mxu0 0.0
  %167 = vmatpush1.msra.mxu0 0.0
  %168 = vmatprep.subr.mxu0 0.0
  %169 = vmatpush1.msra.mxu0 0.0
  %170 = vmatprep.subr.mxu0 0.0
  %171 = vmatpush1.msra.mxu0 0.0
  %172 = vmatprep.subr.mxu0 0.0
  %173 = vmatpush1.msra.mxu0 0.0
  %174 = vmatprep.subr.mxu0 0.0
  %175 = vmatpush1.msra.mxu0 0.0
  %176 = vmatprep.subr.mxu0 0.0
  %177 = vmatpush1.msra.mxu0 0.0
  %178 = vmatprep.subr.mxu0 0.0
  %179 = vmatpush1.msra.mxu0 0.0
  %180 = vmatprep.subr.mxu0 0.0
  %181 = vmatpush1.msra.mxu0 0.0
  %182 = vmatprep.subr.mxu0 0.0
  %183 = vmatpush1.msra.mxu0 0.0
  %184 = vmatprep.subr.mxu0 0.0
  %185 = vmatpush1.msra.mxu0 0.0
  %186 = vmatprep.subr.mxu0 0.0
  %187 = vmatpush1.msra.mxu0 0.0
  %188 = vmatprep.subr.mxu0 0.0
  %189 = vmatpush1.msra.mxu0 0.0
  %190 = vmatprep.subr.mxu0 0.0
  %191 = vmatpush1.msra.mxu0 0.0
  %192 = vmatprep.subr.mxu0 0.0
  %193 = vmatpush1.msra.mxu0 0.0
  %194 = vmatprep.subr.mxu0 0.0
  %195 = vmatpush1.msra.mxu0 0.0
  %196 = vmatprep.subr.mxu0 0.0
  %197 = vmatpush1.msra.mxu0 0.0
  %198 = vmatprep.subr.mxu0 0.0
  %199 = vmatpush1.msra.mxu0 0.0
  %200 = vmatprep.subr.mxu0 0.0
  %201 = vmatpush1.msra.mxu0 0.0
  %202 = vmatprep.subr.mxu0 0.0
  %203 = vmatpush1.msra.mxu0 0.0
  %204 = vmatprep.subr.mxu0 0.0
  %205 = vmatpush1.msra.mxu0 0.0
  %206 = vmatprep.subr.mxu0 0.0
  %207 = vmatpush1.msra.mxu0 0.0
  %208 = vmatprep.subr.mxu0 0.0
  %209 = vmatpush1.msra.mxu0 0.0
  %210 = vmatprep.subr.mxu0 0.0
  %211 = vmatpush1.msra.mxu0 0.0
  %212 = vmatprep.subr.mxu0 0.0
  %213 = vmatpush1.msra.mxu0 0.0
  %214 = vmatprep.subr.mxu0 0.0
  %215 = vmatpush1.msra.mxu0 0.0
  %216 = vmatprep.mubr.f32.mxu0 0.0
  %217 = vmatmul.mubr.f32.gmra.mrb[0].mxu0 %v150
  %v218 = vpop.f32.mrb[0].mxu0
  %v219 = vadd.f32 0.0, %v218
  %v220 = vpop.f32.mrb[0].mxu0
  %221 = vdwg.mxu0
  %v222 = vadd.f32 %v135, %v219
  %v223 = vmul.f32 %v222, %v49
  %v224 = vtanh.pop %v223
  %v225 = vmul.f32 %v224, 0.5
  %v226 = vadd.f32 %v225, 0.5
  %v227 = vsel %vm48, %v224, %v226
  %229 = vrot.lane.b32.xlu0 %v148, 32
  %v230 = vpop.permute.xlu0 %229
  %v232 = vmul.f32 %v227, %v230
  %234 = vrot.lane.b32.xlu0 %v227, 64
  %v235 = vpop.permute.xlu0 %234
  %v237 = vmul.f32 %v227, %v235
  %239 = vrot.lane.b32.xlu0 %v237, 32
  %v240 = vpop.permute.xlu0 %239
  %v242 = vadd.f32 %v232, %v240
  %v243 = vtanh.pop %v242
  %245 = vrot.lane.b32.xlu0 %v243, 64
  %v246 = vpop.permute.xlu0 %245
  %v248 = vmul.f32 %v227, %v246
  %250 = vrot.lane.b32.xlu0 %v248, 32
  %v251 = vpop.permute.xlu0 %250
  %vm253 = vcmask 254976
  %254 = vst.msk [vmem:[#allocation2] sm:$0x3] %vm253, %v251
  %v255 = vsel %vm61, %v251, 0
  %257 = vmatprep.subr.mxu0 0.0
  %258 = vmatpush1.msra.mxu0 %v143
  %259 = vmatprep.subr.mxu0 0.0
  %260 = vmatpush1.msra.mxu0 %v144
  %261 = vmatprep.subr.mxu0 0.0
  %262 = vmatpush1.msra.mxu0 %v145
  %263 = vmatprep.subr.mxu0 0.0
  %264 = vmatpush1.msra.mxu0 %v146
  %265 = vmatprep.subr.mxu0 0.0
  %266 = vmatpush1.msra.mxu0 0.0
  %267 = vmatprep.subr.mxu0 0.0
  %268 = vmatpush1.msra.mxu0 0.0
  %269 = vmatprep.subr.mxu0 0.0
  %270 = vmatpush1.msra.mxu0 0.0
  %271 = vmatprep.subr.mxu0 0.0
  %272 = vmatpush1.msra.mxu0 0.0
  %273 = vmatprep.subr.mxu0 0.0
  %274 = vmatpush1.msra.mxu0 0.0
  %275 = vmatprep.subr.mxu0 0.0
  %276 = vmatpush1.msra.mxu0 0.0
  %277 = vmatprep.subr.mxu0 0.0
  %278 = vmatpush1.msra.mxu0 0.0
  %279 = vmatprep.subr.mxu0 0.0
  %280 = vmatpush1.msra.mxu0 0.0
  %281 = vmatprep.subr.mxu0 0.0
  %282 = vmatpush1.msra.mxu0 0.0
  %283 = vmatprep.subr.mxu0 0.0
  %284 = vmatpush1.msra.mxu0 0.0
  %285 = vmatprep.subr.mxu0 0.0
  %286 = vmatpush1.msra.mxu0 0.0
  %287 = vmatprep.subr.mxu0 0.0
  %288 = vmatpush1.msra.mxu0 0.0
  %289 = vmatprep.subr.mxu0 0.0
  %290 = vmatpush1.msra.mxu0 0.0
  %291 = vmatprep.subr.mxu0 0.0
  %292 = vmatpush1.msra.mxu0 0.0
  %293 = vmatprep.subr.mxu0 0.0
  %294 = vmatpush1.msra.mxu0 0.0
  %295 = vmatprep.subr.mxu0 0.0
  %296 = vmatpush1.msra.mxu0 0.0
  %297 = vmatprep.subr.mxu0 0.0
  %298 = vmatpush1.msra.mxu0 0.0
  %299 = vmatprep.subr.mxu0 0.0
  %300 = vmatpush1.msra.mxu0 0.0
  %301 = vmatprep.subr.mxu0 0.0
  %302 = vmatpush1.msra.mxu0 0.0
  %303 = vmatprep.subr.mxu0 0.0
  %304 = vmatpush1.msra.mxu0 0.0
  %305 = vmatprep.subr.mxu0 0.0
  %306 = vmatpush1.msra.mxu0 0.0
  %307 = vmatprep.subr.mxu0 0.0
  %308 = vmatpush1.msra.mxu0 0.0
  %309 = vmatprep.subr.mxu0 0.0
  %310 = vmatpush1.msra.mxu0 0.0
  %311 = vmatprep.subr.mxu0 0.0
  %312 = vmatpush1.msra.mxu0 0.0
  %313 = vmatprep.subr.mxu0 0.0
  %314 = vmatpush1.msra.mxu0 0.0
  %315 = vmatprep.subr.mxu0 0.0
  %316 = vmatpush1.msra.mxu0 0.0
  %317 = vmatprep.subr.mxu0 0.0
  %318 = vmatpush1.msra.mxu0 0.0
  %319 = vmatprep.subr.mxu0 0.0
  %320 = vmatpush1.msra.mxu0 0.0
  %321 = vmatprep.mubr.f32.mxu0 0.0
  %322 = vmatmul.mubr.f32.gmra.mrb[0].mxu0 %v255
  %v323 = vpop.f32.mrb[0].mxu0
  %v324 = vadd.f32 0.0, %v323
  %v325 = vpop.f32.mrb[0].mxu0
  %326 = vdwg.mxu0
  %v328 = vrot.slane %v324, 6
  %v330 = vadd.f32 %v135, %v328
  %v331 = vmul.f32 %v330, %v49
  %v332 = vtanh.pop %v331
  %v333 = vmul.f32 %v332, 0.5
  %v334 = vadd.f32 %v333, 0.5
  %v335 = vsel %vm48, %v332, %v334
  %v337 = vrot.slane %v242, 6
  %v339 = vmul.f32 %v335, %v337
  %341 = vrot.lane.b32.xlu0 %v335, 64
  %v342 = vpop.permute.xlu0 %341
  %v344 = vmul.f32 %v335, %v342
  %346 = vrot.lane.b32.xlu0 %v344, 32
  %v347 = vpop.permute.xlu0 %346
  %v349 = vadd.f32 %v339, %v347
  %v350 = vtanh.pop %v349
  %352 = vrot.lane.b32.xlu0 %v350, 64
  %v353 = vpop.permute.xlu0 %352
  %v355 = vmul.f32 %v335, %v353
  %357 = vrot.lane.b32.xlu0 %v355, 32
  %v358 = vpop.permute.xlu0 %357
  %vm360 = vcmask 257026
  %361 = vst.msk [vmem:[#allocation2] sm:$0xc] %vm360, %v358
  %v362 = vrot.slane %v355, 2
  %363 = vrot.lane.b32.xlu0 %v362, 32
  %v364 = vpop.permute.xlu0 %363
  %v365 = vsel %vm61, %v364, 0
  %367 = vmatprep.subr.mxu0 0.0
  %368 = vmatpush1.msra.mxu0 %v143
  %369 = vmatprep.subr.mxu0 0.0
  %370 = vmatpush1.msra.mxu0 %v144
  %371 = vmatprep.subr.mxu0 0.0
  %372 = vmatpush1.msra.mxu0 %v145
  %373 = vmatprep.subr.mxu0 0.0
  %374 = vmatpush1.msra.mxu0 %v146
  %375 = vmatprep.subr.mxu0 0.0
  %376 = vmatpush1.msra.mxu0 0.0
  %377 = vmatprep.subr.mxu0 0.0
  %378 = vmatpush1.msra.mxu0 0.0
  %379 = vmatprep.subr.mxu0 0.0
  %380 = vmatpush1.msra.mxu0 0.0
  %381 = vmatprep.subr.mxu0 0.0
  %382 = vmatpush1.msra.mxu0 0.0
  %383 = vmatprep.subr.mxu0 0.0
  %384 = vmatpush1.msra.mxu0 0.0
  %385 = vmatprep.subr.mxu0 0.0
  %386 = vmatpush1.msra.mxu0 0.0
  %387 = vmatprep.subr.mxu0 0.0
  %388 = vmatpush1.msra.mxu0 0.0
  %389 = vmatprep.subr.mxu0 0.0
  %390 = vmatpush1.msra.mxu0 0.0
  %391 = vmatprep.subr.mxu0 0.0
  %392 = vmatpush1.msra.mxu0 0.0
  %393 = vmatprep.subr.mxu0 0.0
  %394 = vmatpush1.msra.mxu0 0.0
  %395 = vmatprep.subr.mxu0 0.0
  %396 = vmatpush1.msra.mxu0 0.0
  %397 = vmatprep.subr.mxu0 0.0
  %398 = vmatpush1.msra.mxu0 0.0
  %399 = vmatprep.subr.mxu0 0.0
  %400 = vmatpush1.msra.mxu0 0.0
  %401 = vmatprep.subr.mxu0 0.0
  %402 = vmatpush1.msra.mxu0 0.0
  %403 = vmatprep.subr.mxu0 0.0
  %404 = vmatpush1.msra.mxu0 0.0
  %405 = vmatprep.subr.mxu0 0.0
  %406 = vmatpush1.msra.mxu0 0.0
  %407 = vmatprep.subr.mxu0 0.0
  %408 = vmatpush1.msra.mxu0 0.0
  %409 = vmatprep.subr.mxu0 0.0
  %410 = vmatpush1.msra.mxu0 0.0
  %411 = vmatprep.subr.mxu0 0.0
  %412 = vmatpush1.msra.mxu0 0.0
  %413 = vmatprep.subr.mxu0 0.0
  %414 = vmatpush1.msra.mxu0 0.0
  %415 = vmatprep.subr.mxu0 0.0
  %416 = vmatpush1.msra.mxu0 0.0
  %417 = vmatprep.subr.mxu0 0.0
  %418 = vmatpush1.msra.mxu0 0.0
  %419 = vmatprep.subr.mxu0 0.0
  %420 = vmatpush1.msra.mxu0 0.0
  %421 = vmatprep.subr.mxu0 0.0
  %422 = vmatpush1.msra.mxu0 0.0
  %423 = vmatprep.subr.mxu0 0.0
  %424 = vmatpush1.msra.mxu0 0.0
  %425 = vmatprep.subr.mxu0 0.0
  %426 = vmatpush1.msra.mxu0 0.0
  %427 = vmatprep.subr.mxu0 0.0
  %428 = vmatpush1.msra.mxu0 0.0
  %429 = vmatprep.subr.mxu0 0.0
  %430 = vmatpush1.msra.mxu0 0.0
  %431 = vmatprep.mubr.f32.mxu0 0.0
  %432 = vmatmul.mubr.f32.gmra.mrb[0].mxu0 %v365
  %v433 = vpop.f32.mrb[0].mxu0
  %v434 = vadd.f32 0.0, %v433
  %v435 = vpop.f32.mrb[0].mxu0
  %436 = vdwg.mxu0
  %v438 = vrot.slane %v434, 4
  %v440 = vadd.f32 %v135, %v438
  %v441 = vmul.f32 %v440, %v49
  %v442 = vtanh.pop %v441
  %v443 = vmul.f32 %v442, 0.5
  %v444 = vadd.f32 %v443, 0.5
  %v445 = vsel %vm48, %v442, %v444
  %v447 = vrot.slane %v349, 6
  %v449 = vmul.f32 %v445, %v447
  %451 = vrot.lane.b32.xlu0 %v445, 64
  %v452 = vpop.permute.xlu0 %451
  %v454 = vmul.f32 %v445, %v452
  %456 = vrot.lane.b32.xlu0 %v454, 32
  %v457 = vpop.permute.xlu0 %456
  %v459 = vadd.f32 %v449, %v457
  %v460 = vtanh.pop %v459
  %462 = vrot.lane.b32.xlu0 %v460, 64
  %v463 = vpop.permute.xlu0 %462
  %v465 = vmul.f32 %v445, %v463
  %467 = vrot.lane.b32.xlu0 %v465, 32
  %v468 = vpop.permute.xlu0 %467
  %vm470 = vcmask 259076
  %471 = vst.msk [vmem:[#allocation2] sm:$0x30] %vm470, %v468
  %v472 = vrot.slane %v465, 4
  %473 = vrot.lane.b32.xlu0 %v472, 32
  %v474 = vpop.permute.xlu0 %473
  %v475 = vsel %vm61, %v474, 0
  %477 = vmatprep.subr.mxu0 0.0
  %478 = vmatpush1.msra.mxu0 %v143
  %479 = vmatprep.subr.mxu0 0.0
  %480 = vmatpush1.msra.mxu0 %v144
  %481 = vmatprep.subr.mxu0 0.0
  %482 = vmatpush1.msra.mxu0 %v145
  %483 = vmatprep.subr.mxu0 0.0
  %484 = vmatpush1.msra.mxu0 %v146
  %485 = vmatprep.subr.mxu0 0.0
  %486 = vmatpush1.msra.mxu0 0.0
  %487 = vmatprep.subr.mxu0 0.0
  %488 = vmatpush1.msra.mxu0 0.0
  %489 = vmatprep.subr.mxu0 0.0
  %490 = vmatpush1.msra.mxu0 0.0
  %491 = vmatprep.subr.mxu0 0.0
  %492 = vmatpush1.msra.mxu0 0.0
  %493 = vmatprep.subr.mxu0 0.0
  %494 = vmatpush1.msra.mxu0 0.0
  %495 = vmatprep.subr.mxu0 0.0
  %496 = vmatpush1.msra.mxu0 0.0
  %497 = vmatprep.subr.mxu0 0.0
  %498 = vmatpush1.msra.mxu0 0.0
  %499 = vmatprep.subr.mxu0 0.0
  %500 = vmatpush1.msra.mxu0 0.0
  %501 = vmatprep.subr.mxu0 0.0
  %502 = vmatpush1.msra.mxu0 0.0
  %503 = vmatprep.subr.mxu0 0.0
  %504 = vmatpush1.msra.mxu0 0.0
  %505 = vmatprep.subr.mxu0 0.0
  %506 = vmatpush1.msra.mxu0 0.0
  %507 = vmatprep.subr.mxu0 0.0
  %508 = vmatpush1.msra.mxu0 0.0
  %509 = vmatprep.subr.mxu0 0.0
  %510 = vmatpush1.msra.mxu0 0.0
  %511 = vmatprep.subr.mxu0 0.0
  %512 = vmatpush1.msra.mxu0 0.0
  %513 = vmatprep.subr.mxu0 0.0
  %514 = vmatpush1.msra.mxu0 0.0
  %515 = vmatprep.subr.mxu0 0.0
  %516 = vmatpush1.msra.mxu0 0.0
  %517 = vmatprep.subr.mxu0 0.0
  %518 = vmatpush1.msra.mxu0 0.0
  %519 = vmatprep.subr.mxu0 0.0
  %520 = vmatpush1.msra.mxu0 0.0
  %521 = vmatprep.subr.mxu0 0.0
  %522 = vmatpush1.msra.mxu0 0.0
  %523 = vmatprep.subr.mxu0 0.0
  %524 = vmatpush1.msra.mxu0 0.0
  %525 = vmatprep.subr.mxu0 0.0
  %526 = vmatpush1.msra.mxu0 0.0
  %527 = vmatprep.subr.mxu0 0.0
  %528 = vmatpush1.msra.mxu0 0.0
  %529 = vmatprep.subr.mxu0 0.0
  %530 = vmatpush1.msra.mxu0 0.0
  %531 = vmatprep.subr.mxu0 0.0
  %532 = vmatpush1.msra.mxu0 0.0
  %533 = vmatprep.subr.mxu0 0.0
  %534 = vmatpush1.msra.mxu0 0.0
  %535 = vmatprep.subr.mxu0 0.0
  %536 = vmatpush1.msra.mxu0 0.0
  %537 = vmatprep.subr.mxu0 0.0
  %538 = vmatpush1.msra.mxu0 0.0
  %539 = vmatprep.subr.mxu0 0.0
  %540 = vmatpush1.msra.mxu0 0.0
  %541 = vmatprep.mubr.f32.mxu0 0.0
  %542 = vmatmul.mubr.f32.gmra.mrb[0].mxu0 %v475
  %v543 = vpop.f32.mrb[0].mxu0
  %v544 = vadd.f32 0.0, %v543
  %v545 = vpop.f32.mrb[0].mxu0
  %546 = vdwg.mxu0
  %v548 = vrot.slane %v544, 2
  %v550 = vadd.f32 %v135, %v548
  %v551 = vmul.f32 %v550, %v49
  %v552 = vtanh.pop %v551
  %v553 = vmul.f32 %v552, 0.5
  %v554 = vadd.f32 %v553, 0.5
  %v555 = vsel %vm48, %v552, %v554
  %v557 = vrot.slane %v459, 6
  %v559 = vmul.f32 %v555, %v557
  %561 = vrot.lane.b32.xlu0 %v555, 64
  %v562 = vpop.permute.xlu0 %561
  %v564 = vmul.f32 %v555, %v562
  %566 = vrot.lane.b32.xlu0 %v564, 32
  %v567 = vpop.permute.xlu0 %566
  %v569 = vadd.f32 %v559, %v567
  %v570 = vtanh.pop %v569
  %572 = vrot.lane.b32.xlu0 %v570, 64
  %v573 = vpop.permute.xlu0 %572
  %v575 = vmul.f32 %v555, %v573
  %577 = vrot.lane.b32.xlu0 %v575, 32
  %v578 = vpop.permute.xlu0 %577
  %vm580 = vcmask 261126
  %581 = vst.msk [vmem:[#allocation2] sm:$0xc0] %vm580, %v578
  %v582 = vrot.slane %v575, 6
  %583 = vrot.lane.b32.xlu0 %v582, 32
  %v584 = vpop.permute.xlu0 %583
  %v585 = vsel %vm61, %v584, 0
  %587 = vmatprep.subr.mxu0 0.0
  %588 = vmatpush1.msra.mxu0 %v143
  %589 = vmatprep.subr.mxu0 0.0
  %590 = vmatpush1.msra.mxu0 %v144
  %591 = vmatprep.subr.mxu0 0.0
  %592 = vmatpush1.msra.mxu0 %v145
  %593 = vmatprep.subr.mxu0 0.0
  %594 = vmatpush1.msra.mxu0 %v146
  %595 = vmatprep.subr.mxu0 0.0
  %596 = vmatpush1.msra.mxu0 0.0
  %597 = vmatprep.subr.mxu0 0.0
  %598 = vmatpush1.msra.mxu0 0.0
  %599 = vmatprep.subr.mxu0 0.0
  %600 = vmatpush1.msra.mxu0 0.0
  %601 = vmatprep.subr.mxu0 0.0
  %602 = vmatpush1.msra.mxu0 0.0
  %603 = vmatprep.subr.mxu0 0.0
  %604 = vmatpush1.msra.mxu0 0.0
  %605 = vmatprep.subr.mxu0 0.0
  %606 = vmatpush1.msra.mxu0 0.0
  %607 = vmatprep.subr.mxu0 0.0
  %608 = vmatpush1.msra.mxu0 0.0
  %609 = vmatprep.subr.mxu0 0.0
  %610 = vmatpush1.msra.mxu0 0.0
  %611 = vmatprep.subr.mxu0 0.0
  %612 = vmatpush1.msra.mxu0 0.0
  %613 = vmatprep.subr.mxu0 0.0
  %614 = vmatpush1.msra.mxu0 0.0
  %615 = vmatprep.subr.mxu0 0.0
  %616 = vmatpush1.msra.mxu0 0.0
  %617 = vmatprep.subr.mxu0 0.0
  %618 = vmatpush1.msra.mxu0 0.0
  %619 = vmatprep.subr.mxu0 0.0
  %620 = vmatpush1.msra.mxu0 0.0
  %621 = vmatprep.subr.mxu0 0.0
  %622 = vmatpush1.msra.mxu0 0.0
  %623 = vmatprep.subr.mxu0 0.0
  %624 = vmatpush1.msra.mxu0 0.0
  %625 = vmatprep.subr.mxu0 0.0
  %626 = vmatpush1.msra.mxu0 0.0
  %627 = vmatprep.subr.mxu0 0.0
  %628 = vmatpush1.msra.mxu0 0.0
  %629 = vmatprep.subr.mxu0 0.0
  %630 = vmatpush1.msra.mxu0 0.0
  %631 = vmatprep.subr.mxu0 0.0
  %632 = vmatpush1.msra.mxu0 0.0
  %633 = vmatprep.subr.mxu0 0.0
  %634 = vmatpush1.msra.mxu0 0.0
  %635 = vmatprep.subr.mxu0 0.0
  %636 = vmatpush1.msra.mxu0 0.0
  %637 = vmatprep.subr.mxu0 0.0
  %638 = vmatpush1.msra.mxu0 0.0
  %639 = vmatprep.subr.mxu0 0.0
  %640 = vmatpush1.msra.mxu0 0.0
  %641 = vmatprep.subr.mxu0 0.0
  %642 = vmatpush1.msra.mxu0 0.0
  %643 = vmatprep.subr.mxu0 0.0
  %644 = vmatpush1.msra.mxu0 0.0
  %645 = vmatprep.subr.mxu0 0.0
  %646 = vmatpush1.msra.mxu0 0.0
  %647 = vmatprep.subr.mxu0 0.0
  %648 = vmatpush1.msra.mxu0 0.0
  %649 = vmatprep.subr.mxu0 0.0
  %650 = vmatpush1.msra.mxu0 0.0
  %651 = vmatprep.mubr.f32.mxu0 0.0
  %652 = vmatmul.mubr.f32.gmra.mrb[0].mxu0 %v585
  %v653 = vpop.f32.mrb[0].mxu0
  %v654 = vadd.f32 0.0, %v653
  %v655 = vpop.f32.mrb[0].mxu0
  %656 = vdwg.mxu0
  %v657 = vadd.f32 %v140, %v654
  %v658 = vmul.f32 %v657, %v49
  %v659 = vtanh.pop %v658
  %v660 = vmul.f32 %v659, 0.5
  %v661 = vadd.f32 %v660, 0.5
  %v662 = vsel %vm48, %v659, %v661
  %v664 = vrot.slane %v569, 6
  %v666 = vmul.f32 %v662, %v664
  %668 = vrot.lane.b32.xlu0 %v662, 64
  %v669 = vpop.permute.xlu0 %668
  %v671 = vmul.f32 %v662, %v669
  %673 = vrot.lane.b32.xlu0 %v671, 32
  %v674 = vpop.permute.xlu0 %673
  %v676 = vadd.f32 %v666, %v674
  %v677 = vtanh.pop %v676
  %679 = vrot.lane.b32.xlu0 %v677, 64
  %v680 = vpop.permute.xlu0 %679
  %v682 = vmul.f32 %v662, %v680
  %684 = vrot.lane.b32.xlu0 %v682, 32
  %v685 = vpop.permute.xlu0 %684
  %687 = vst.msk [vmem:[#allocation2 + $0x8] sm:$0x3] %vm253, %v685
  %v688 = vsel %vm61, %v685, 0
  %690 = vmatprep.subr.mxu0 0.0
  %691 = vmatpush1.msra.mxu0 %v143
  %692 = vmatprep.subr.mxu0 0.0
  %693 = vmatpush1.msra.mxu0 %v144
  %694 = vmatprep.subr.mxu0 0.0
  %695 = vmatpush1.msra.mxu0 %v145
  %696 = vmatprep.subr.mxu0 0.0
  %697 = vmatpush1.msra.mxu0 %v146
  %698 = vmatprep.subr.mxu0 0.0
  %699 = vmatpush1.msra.mxu0 0.0
  %700 = vmatprep.subr.mxu0 0.0
  %701 = vmatpush1.msra.mxu0 0.0
  %702 = vmatprep.subr.mxu0 0.0
  %703 = vmatpush1.msra.mxu0 0.0
  %704 = vmatprep.subr.mxu0 0.0
  %705 = vmatpush1.msra.mxu0 0.0
  %706 = vmatprep.subr.mxu0 0.0
  %707 = vmatpush1.msra.mxu0 0.0
  %708 = vmatprep.subr.mxu0 0.0
  %709 = vmatpush1.msra.mxu0 0.0
  %710 = vmatprep.subr.mxu0 0.0
  %711 = vmatpush1.msra.mxu0 0.0
  %712 = vmatprep.subr.mxu0 0.0
  %713 = vmatpush1.msra.mxu0 0.0
  %714 = vmatprep.subr.mxu0 0.0
  %715 = vmatpush1.msra.mxu0 0.0
  %716 = vmatprep.subr.mxu0 0.0
  %717 = vmatpush1.msra.mxu0 0.0
  %718 = vmatprep.subr.mxu0 0.0
  %719 = vmatpush1.msra.mxu0 0.0
  %720 = vmatprep.subr.mxu0 0.0
  %721 = vmatpush1.msra.mxu0 0.0
  %722 = vmatprep.subr.mxu0 0.0
  %723 = vmatpush1.msra.mxu0 0.0
  %724 = vmatprep.subr.mxu0 0.0
  %725 = vmatpush1.msra.mxu0 0.0
  %726 = vmatprep.subr.mxu0 0.0
  %727 = vmatpush1.msra.mxu0 0.0
  %728 = vmatprep.subr.mxu0 0.0
  %729 = vmatpush1.msra.mxu0 0.0
  %730 = vmatprep.subr.mxu0 0.0
  %731 = vmatpush1.msra.mxu0 0.0
  %732 = vmatprep.subr.mxu0 0.0
  %733 = vmatpush1.msra.mxu0 0.0
  %734 = vmatprep.subr.mxu0 0.0
  %735 = vmatpush1.msra.mxu0 0.0
  %736 = vmatprep.subr.mxu0 0.0
  %737 = vmatpush1.msra.mxu0 0.0
  %738 = vmatprep.subr.mxu0 0.0
  %739 = vmatpush1.msra.mxu0 0.0
  %740 = vmatprep.subr.mxu0 0.0
  %741 = vmatpush1.msra.mxu0 0.0
  %742 = vmatprep.subr.mxu0 0.0
  %743 = vmatpush1.msra.mxu0 0.0
  %744 = vmatprep.subr.mxu0 0.0
  %745 = vmatpush1.msra.mxu0 0.0
  %746 = vmatprep.subr.mxu0 0.0
  %747 = vmatpush1.msra.mxu0 0.0
  %748 = vmatprep.subr.mxu0 0.0
  %749 = vmatpush1.msra.mxu0 0.0
  %750 = vmatprep.subr.mxu0 0.0
  %751 = vmatpush1.msra.mxu0 0.0
  %752 = vmatprep.subr.mxu0 0.0
  %753 = vmatpush1.msra.mxu0 0.0
  %754 = vmatprep.mubr.f32.mxu0 0.0
  %755 = vmatmul.mubr.f32.gmra.mrb[0].mxu0 %v688
  %v756 = vpop.f32.mrb[0].mxu0
  %v757 = vadd.f32 0.0, %v756
  %v758 = vpop.f32.mrb[0].mxu0
  %759 = vdwg.mxu0
  %v761 = vrot.slane %v757, 6
  %v763 = vadd.f32 %v140, %v761
  %v764 = vmul.f32 %v763, %v49
  %v765 = vtanh.pop %v764
  %v766 = vmul.f32 %v765, 0.5
  %v767 = vadd.f32 %v766, 0.5
  %v768 = vsel %vm48, %v765, %v767
  %v770 = vrot.slane %v676, 6
  %v772 = vmul.f32 %v768, %v770
  %774 = vrot.lane.b32.xlu0 %v768, 64
  %v775 = vpop.permute.xlu0 %774
  %v777 = vmul.f32 %v768, %v775
  %779 = vrot.lane.b32.xlu0 %v777, 32
  %v780 = vpop.permute.xlu0 %779
  %v782 = vadd.f32 %v772, %v780
  %v783 = vtanh.pop %v782
  %785 = vrot.lane.b32.xlu0 %v783, 64
  %v786 = vpop.permute.xlu0 %785
  %v788 = vmul.f32 %v768, %v786
  %790 = vrot.lane.b32.xlu0 %v788, 32
  %v791 = vpop.permute.xlu0 %790
  %793 = vst.msk [vmem:[#allocation2 + $0x8] sm:$0xc] %vm360, %v791
  %v794 = vld [vmem:[#allocation2] sm:$0xff]
  %v795 = vld [vmem:[#allocation2 + $0x8] sm:$0xf]
  %v796 = vadd.f32 %v794, %v50
  %v797 = vadd.f32 %v795, %v51
  %v798 = vld [vmem:[%s6] sm:$0xff]
  %v799 = vld [vmem:[%s6 + $0x8] sm:$0xff]
  %v800 = vld [vmem:[%s6 + $0x10] sm:$0xff]
  %v801 = vld [vmem:[%s6 + $0x18] sm:$0xff]
  %v802 = vld [vmem:[%s7] sm:$0x1]
  %v804 = vlaneseq
  %v805 = vshrl.u32 %v804, 7
  %v806 = vsub.s32 0, %v805
  %v807 = vrot.slane %v802, %v806
  %v810 = vsel %vm61, %v796, 0
  %v813 = vsel %vm61, %v797, 0
  %815 = vmatprep.subr.mxu0 0.0
  %816 = vmatpush1.msra.mxu0 %v798
  %817 = vmatprep.subr.mxu0 0.0
  %818 = vmatpush1.msra.mxu0 %v799
  %819 = vmatprep.subr.mxu0 0.0
  %820 = vmatpush1.msra.mxu0 %v800
  %821 = vmatprep.subr.mxu0 0.0
  %822 = vmatpush1.msra.mxu0 %v801
  %823 = vmatprep.subr.mxu0 0.0
  %824 = vmatpush1.msra.mxu0 0.0
  %825 = vmatprep.subr.mxu0 0.0
  %826 = vmatpush1.msra.mxu0 0.0
  %827 = vmatprep.subr.mxu0 0.0
  %828 = vmatpush1.msra.mxu0 0.0
  %829 = vmatprep.subr.mxu0 0.0
  %830 = vmatpush1.msra.mxu0 0.0
  %831 = vmatprep.subr.mxu0 0.0
  %832 = vmatpush1.msra.mxu0 0.0
  %833 = vmatprep.subr.mxu0 0.0
  %834 = vmatpush1.msra.mxu0 0.0
  %835 = vmatprep.subr.mxu0 0.0
  %836 = vmatpush1.msra.mxu0 0.0
  %837 = vmatprep.subr.mxu0 0.0
  %838 = vmatpush1.msra.mxu0 0.0
  %839 = vmatprep.subr.mxu0 0.0
  %840 = vmatpush1.msra.mxu0 0.0
  %841 = vmatprep.subr.mxu0 0.0
  %842 = vmatpush1.msra.mxu0 0.0
  %843 = vmatprep.subr.mxu0 0.0
  %844 = vmatpush1.msra.mxu0 0.0
  %845 = vmatprep.subr.mxu0 0.0
  %846 = vmatpush1.msra.mxu0 0.0
  %847 = vmatprep.subr.mxu0 0.0
  %848 = vmatpush1.msra.mxu0 0.0
  %849 = vmatprep.subr.mxu0 0.0
  %850 = vmatpush1.msra.mxu0 0.0
  %851 = vmatprep.subr.mxu0 0.0
  %852 = vmatpush1.msra.mxu0 0.0
  %853 = vmatprep.subr.mxu0 0.0
  %854 = vmatpush1.msra.mxu0 0.0
  %855 = vmatprep.subr.mxu0 0.0
  %856 = vmatpush1.msra.mxu0 0.0
  %857 = vmatprep.subr.mxu0 0.0
  %858 = vmatpush1.msra.mxu0 0.0
  %859 = vmatprep.subr.mxu0 0.0
  %860 = vmatpush1.msra.mxu0 0.0
  %861 = vmatprep.subr.mxu0 0.0
  %862 = vmatpush1.msra.mxu0 0.0
  %863 = vmatprep.subr.mxu0 0.0
  %864 = vmatpush1.msra.mxu0 0.0
  %865 = vmatprep.subr.mxu0 0.0
  %866 = vmatpush1.msra.mxu0 0.0
  %867 = vmatprep.subr.mxu0 0.0
  %868 = vmatpush1.msra.mxu0 0.0
  %869 = vmatprep.subr.mxu0 0.0
  %870 = vmatpush1.msra.mxu0 0.0
  %871 = vmatprep.subr.mxu0 0.0
  %872 = vmatpush1.msra.mxu0 0.0
  %873 = vmatprep.subr.mxu0 0.0
  %874 = vmatpush1.msra.mxu0 0.0
  %875 = vmatprep.subr.mxu0 0.0
  %876 = vmatpush1.msra.mxu0 0.0
  %877 = vmatprep.subr.mxu0 0.0
  %878 = vmatpush1.msra.mxu0 0.0
  %879 = vmatprep.mubr.f32.mxu0 0.0
  %880 = vmatmul.mubr.f32.gmra.mrb[0].mxu0 %v810
  %v881 = vpop.f32.mrb[0].mxu0
  %v882 = vadd.f32 %v807, %v881
  %v883 = vpop.f32.mrb[0].mxu0
  %884 = vmatprep.mubr.f32.mxu0 0.0
  %885 = vmatmul.mubr.f32.gmra.mrb[0].mxu0 %v813
  %v886 = vpop.f32.mrb[0].mxu0
  %v887 = vadd.f32 %v807, %v886
  %v888 = vpop.f32.mrb[0].mxu0
  %889 = vdwg.mxu0
  %v890 = vld [vmem:[%s2] sm:$0xff]
  %v891 = vld [vmem:[%s2 + $0x8] sm:$0xff]
  %v892 = vld [vmem:[%s8] sm:$0xff]
  %v893 = vld [vmem:[%s8 + $0x8] sm:$0xff]
  %v894 = vld [vmem:[%s8 + $0x10] sm:$0xff]
  %v895 = vld [vmem:[%s8 + $0x18] sm:$0xff]
  %v896 = vld [vmem:[%s9] sm:$0x1]
  %v898 = vlaneseq
  %v899 = vshrl.u32 %v898, 7
  %v900 = vsub.s32 0, %v899
  %v901 = vrot.slane %v896, %v900
  %v904 = vsel %vm61, %v890, 0
  %v907 = vsel %vm61, %v891, 0
  %909 = vmatprep.subr.mxu0 0.0
  %910 = vmatpush1.msra.mxu0 %v892
  %911 = vmatprep.subr.mxu0 0.0
  %912 = vmatpush1.msra.mxu0 %v893
  %913 = vmatprep.subr.mxu0 0.0
  %914 = vmatpush1.msra.mxu0 %v894
  %915 = vmatprep.subr.mxu0 0.0
  %916 = vmatpush1.msra.mxu0 %v895
  %917 = vmatprep.subr.mxu0 0.0
  %918 = vmatpush1.msra.mxu0 0.0
  %919 = vmatprep.subr.mxu0 0.0
  %920 = vmatpush1.msra.mxu0 0.0
  %921 = vmatprep.subr.mxu0 0.0
  %922 = vmatpush1.msra.mxu0 0.0
  %923 = vmatprep.subr.mxu0 0.0
  %924 = vmatpush1.msra.mxu0 0.0
  %925 = vmatprep.subr.mxu0 0.0
  %926 = vmatpush1.msra.mxu0 0.0
  %927 = vmatprep.subr.mxu0 0.0
  %928 = vmatpush1.msra.mxu0 0.0
  %929 = vmatprep.subr.mxu0 0.0
  %930 = vmatpush1.msra.mxu0 0.0
  %931 = vmatprep.subr.mxu0 0.0
  %932 = vmatpush1.msra.mxu0 0.0
  %933 = vmatprep.subr.mxu0 0.0
  %934 = vmatpush1.msra.mxu0 0.0
  %935 = vmatprep.subr.mxu0 0.0
  %936 = vmatpush1.msra.mxu0 0.0
  %937 = vmatprep.subr.mxu0 0.0
  %938 = vmatpush1.msra.mxu0 0.0
  %939 = vmatprep.subr.mxu0 0.0
  %940 = vmatpush1.msra.mxu0 0.0
  %941 = vmatprep.subr.mxu0 0.0
  %942 = vmatpush1.msra.mxu0 0.0
  %943 = vmatprep.subr.mxu0 0.0
  %944 = vmatpush1.msra.mxu0 0.0
  %945 = vmatprep.subr.mxu0 0.0
  %946 = vmatpush1.msra.mxu0 0.0
  %947 = vmatprep.subr.mxu0 0.0
  %948 = vmatpush1.msra.mxu0 0.0
  %949 = vmatprep.subr.mxu0 0.0
  %950 = vmatpush1.msra.mxu0 0.0
  %951 = vmatprep.subr.mxu0 0.0
  %952 = vmatpush1.msra.mxu0 0.0
  %953 = vmatprep.subr.mxu0 0.0
  %954 = vmatpush1.msra.mxu0 0.0
  %955 = vmatprep.subr.mxu0 0.0
  %956 = vmatpush1.msra.mxu0 0.0
  %957 = vmatprep.subr.mxu0 0.0
  %958 = vmatpush1.msra.mxu0 0.0
  %959 = vmatprep.subr.mxu0 0.0
  %960 = vmatpush1.msra.mxu0 0.0
  %961 = vmatprep.subr.mxu0 0.0
  %962 = vmatpush1.msra.mxu0 0.0
  %963 = vmatprep.subr.mxu0 0.0
  %964 = vmatpush1.msra.mxu0 0.0
  %965 = vmatprep.subr.mxu0 0.0
  %966 = vmatpush1.msra.mxu0 0.0
  %967 = vmatprep.subr.mxu0 0.0
  %968 = vmatpush1.msra.mxu0 0.0
  %969 = vmatprep.subr.mxu0 0.0
  %970 = vmatpush1.msra.mxu0 0.0
  %971 = vmatprep.subr.mxu0 0.0
  %972 = vmatpush1.msra.mxu0 0.0
  %973 = vmatprep.mubr.f32.mxu0 0.0
  %974 = vmatmul.mubr.f32.gmra.mrb[0].mxu0 %v904
  %v975 = vpop.f32.mrb[0].mxu0
  %v976 = vadd.f32 %v901, %v975
  %v977 = vpop.f32.mrb[0].mxu0
  %978 = vmatprep.mubr.f32.mxu0 0.0
  %979 = vmatmul.mubr.f32.gmra.mrb[0].mxu0 %v907
  %v980 = vpop.f32.mrb[0].mxu0
  %v981 = vadd.f32 %v901, %v980
  %v982 = vpop.f32.mrb[0].mxu0
  %983 = vdwg.mxu0
  %v986 = vcombine.high %v882, %v882
  %v988 = vunpack.c.l.s4 1966171168
  %v989 = vunpack.c.0.s8 %v988
  %v990 = vlaneseq
  %v991 = vshrl.u32 %v990, 7
  %v992 = vsub.s32 %v989, %v991
  %v993 = vrot.slane %v882, %v992
  %v995 = vunpack.c.l.s4 1966171168
  %v996 = vunpack.c.0.s8 %v995
  %v997 = vlaneseq
  %v998 = vshrl.u32 %v997, 7
  %v999 = vsub.s32 %v996, %v998
  %v1000 = vrot.slane %v986, %v999
  %v1001 = vcombine.high %v993, %v993
  %v1002 = vcombine.high %v1000, %v1000
  %v1004 = vunpack.c.l.s4 1966171168
  %v1005 = vunpack.c.0.s8 %v1004
  %v1006 = vlaneseq
  %v1007 = vshrl.u32 %v1006, 7
  %v1008 = vsub.s32 %v1005, %v1007
  %v1009 = vrot.slane %v993, %v1008
  %v1011 = vunpack.c.l.s4 1966171168
  %v1012 = vunpack.c.0.s8 %v1011
  %v1013 = vlaneseq
  %v1014 = vshrl.u32 %v1013, 7
  %v1015 = vsub.s32 %v1012, %v1014
  %v1016 = vrot.slane %v1000, %v1015
  %v1018 = vunpack.c.l.s4 1966171168
  %v1019 = vunpack.c.0.s8 %v1018
  %v1020 = vlaneseq
  %v1021 = vshrl.u32 %v1020, 7
  %v1022 = vsub.s32 %v1019, %v1021
  %v1023 = vrot.slane %v1001, %v1022
  %v1025 = vunpack.c.l.s4 1966171168
  %v1026 = vunpack.c.0.s8 %v1025
  %v1027 = vlaneseq
  %v1028 = vshrl.u32 %v1027, 7
  %v1029 = vsub.s32 %v1026, %v1028
  %v1030 = vrot.slane %v1002, %v1029
  %v1031 = vcombine.high %v1009, %v1009
  %v1032 = vcombine.high %v1016, %v1016
  %v1033 = vcombine.high %v1023, %v1023
  %v1034 = vcombine.high %v1030, %v1030
  %v1036 = vunpack.c.l.s4 1966171168
  %v1037 = vunpack.c.0.s8 %v1036
  %v1038 = vlaneseq
  %v1039 = vshrl.u32 %v1038, 7
  %v1040 = vsub.s32 %v1037, %v1039
  %v1041 = vrot.slane %v887, %v1040
  %v1042 = vcombine.high %v1041, %v1041
  %v1044 = vunpack.c.l.s4 1966171168
  %v1045 = vunpack.c.0.s8 %v1044
  %v1046 = vlaneseq
  %v1047 = vshrl.u32 %v1046, 7
  %v1048 = vsub.s32 %v1045, %v1047
  %v1049 = vrot.slane %v1041, %v1048
  %v1051 = vunpack.c.l.s4 1966171168
  %v1052 = vunpack.c.0.s8 %v1051
  %v1053 = vlaneseq
  %v1054 = vshrl.u32 %v1053, 7
  %v1055 = vsub.s32 %v1052, %v1054
  %v1056 = vrot.slane %v1042, %v1055
  %v1057 = vcombine.high %v1049, %v1049
  %v1058 = vcombine.high %v1056, %v1056
  %v1059 = vlaneseq
  %v1060 = vshrl.u32 %v1059, 7
  %v1061 = vsub.s32 0, %v1060
  %v1062 = vrot.slane %v1009, %v1061
  %v1063 = vlaneseq
  %v1064 = vshrl.u32 %v1063, 7
  %v1065 = vsub.s32 0, %v1064
  %v1066 = vrot.slane %v1023, %v1065
  %v1067 = vlaneseq
  %v1068 = vshrl.u32 %v1067, 7
  %v1069 = vsub.s32 0, %v1068
  %v1070 = vrot.slane %v1031, %v1069
  %v1071 = vlaneseq
  %v1072 = vshrl.u32 %v1071, 7
  %v1073 = vsub.s32 0, %v1072
  %v1074 = vrot.slane %v1033, %v1073
  %v1075 = vlaneseq
  %v1076 = vshrl.u32 %v1075, 7
  %v1077 = vsub.s32 0, %v1076
  %v1078 = vrot.slane %v1016, %v1077
  %v1079 = vlaneseq
  %v1080 = vshrl.u32 %v1079, 7
  %v1081 = vsub.s32 0, %v1080
  %v1082 = vrot.slane %v1030, %v1081
  %v1083 = vlaneseq
  %v1084 = vshrl.u32 %v1083, 7
  %v1085 = vsub.s32 0, %v1084
  %v1086 = vrot.slane %v1032, %v1085
  %v1087 = vlaneseq
  %v1088 = vshrl.u32 %v1087, 7
  %v1089 = vsub.s32 0, %v1088
  %v1090 = vrot.slane %v1034, %v1089
  %v1091 = vlaneseq
  %v1092 = vshrl.u32 %v1091, 7
  %v1093 = vsub.s32 0, %v1092
  %v1094 = vrot.slane %v1049, %v1093
  %v1095 = vlaneseq
  %v1096 = vshrl.u32 %v1095, 7
  %v1097 = vsub.s32 0, %v1096
  %v1098 = vrot.slane %v1056, %v1097
  %v1099 = vlaneseq
  %v1100 = vshrl.u32 %v1099, 7
  %v1101 = vsub.s32 0, %v1100
  %v1102 = vrot.slane %v1057, %v1101
  %v1103 = vlaneseq
  %v1104 = vshrl.u32 %v1103, 7
  %v1105 = vsub.s32 0, %v1104
  %v1106 = vrot.slane %v1058, %v1105
  %v1119 = vadd.f32 %v1062, %v976
  %v1120 = vadd.f32 %v1066, %v981
  %v1121 = vadd.f32 %v1070, %v976
  %v1122 = vadd.f32 %v1074, %v981
  %v1123 = vadd.f32 %v1078, %v976
  %v1124 = vadd.f32 %v1082, %v981
  %v1125 = vadd.f32 %v1086, %v976
  %v1126 = vadd.f32 %v1090, %v981
  %v1127 = vadd.f32 %v1094, %v976
  %v1128 = vadd.f32 %v1098, %v981
  %v1129 = vadd.f32 %v1102, %v976
  %v1130 = vadd.f32 %v1106, %v981
  %v1131 = vtanh.pop %v1119
  %v1132 = vtanh.pop %v1120
  %v1133 = vtanh.pop %v1121
  %v1134 = vtanh.pop %v1122
  %v1135 = vtanh.pop %v1123
  %v1136 = vtanh.pop %v1124
  %v1137 = vtanh.pop %v1125
  %v1138 = vtanh.pop %v1126
  %v1139 = vtanh.pop %v1127
  %v1140 = vtanh.pop %v1128
  %v1141 = vtanh.pop %v1129
  %v1142 = vtanh.pop %v1130
  %v1143 = vld [vmem:[%s10] sm:$0x1]
  %v1145 = vlaneseq
  %v1146 = vshrl.u32 %v1145, 7
  %v1147 = vsub.s32 0, %v1146
  %v1148 = vrot.slane %v1143, %v1147
  %v1150 = vmul.f32 %v1131, %v1148
  %v1151 = vmul.f32 %v1132, %v1148
  %v1152 = vmul.f32 %v1133, %v1148
  %v1153 = vmul.f32 %v1134, %v1148
  %v1154 = vmul.f32 %v1135, %v1148
  %v1155 = vmul.f32 %v1136, %v1148
  %v1156 = vmul.f32 %v1137, %v1148
  %v1157 = vmul.f32 %v1138, %v1148
  %v1158 = vmul.f32 %v1139, %v1148
  %v1159 = vmul.f32 %v1140, %v1148
  %v1160 = vmul.f32 %v1141, %v1148
  %v1161 = vmul.f32 %v1142, %v1148
  %v1162 = vsel %vm61, %v1150, 0.0
  %1163 = vadd.xlane.f32.xlu0 %v1162
  %v1164 = vpop.xlane.xlu0 %1163
  %v1165 = vsel %vm61, %v1151, 0.0
  %1166 = vadd.xlane.f32.xlu0 %v1165
  %v1167 = vpop.xlane.xlu0 %1166
  %v1168 = vsel %vm61, %v1152, 0.0
  %1169 = vadd.xlane.f32.xlu0 %v1168
  %v1170 = vpop.xlane.xlu0 %1169
  %v1171 = vsel %vm61, %v1153, 0.0
  %1172 = vadd.xlane.f32.xlu0 %v1171
  %v1173 = vpop.xlane.xlu0 %1172
  %v1174 = vsel %vm61, %v1154, 0.0
  %1175 = vadd.xlane.f32.xlu0 %v1174
  %v1176 = vpop.xlane.xlu0 %1175
  %v1177 = vsel %vm61, %v1155, 0.0
  %1178 = vadd.xlane.f32.xlu0 %v1177
  %v1179 = vpop.xlane.xlu0 %1178
  %v1180 = vsel %vm61, %v1156, 0.0
  %1181 = vadd.xlane.f32.xlu0 %v1180
  %v1182 = vpop.xlane.xlu0 %1181
  %v1183 = vsel %vm61, %v1157, 0.0
  %1184 = vadd.xlane.f32.xlu0 %v1183
  %v1185 = vpop.xlane.xlu0 %1184
  %v1186 = vsel %vm61, %v1158, 0.0
  %1187 = vadd.xlane.f32.xlu0 %v1186
  %v1188 = vpop.xlane.xlu0 %1187
  %v1189 = vsel %vm61, %v1159, 0.0
  %1190 = vadd.xlane.f32.xlu0 %v1189
  %v1191 = vpop.xlane.xlu0 %1190
  %v1192 = vsel %vm61, %v1160, 0.0
  %1193 = vadd.xlane.f32.xlu0 %v1192
  %v1194 = vpop.xlane.xlu0 %1193
  %v1195 = vsel %vm61, %v1161, 0.0
  %1196 = vadd.xlane.f32.xlu0 %v1195
  %v1197 = vpop.xlane.xlu0 %1196
  %v1198 = vld [vmem:[%s3] sm:$0x3]
  %v1200 = vlaneseq
  %v1201 = vshrl.u32 %v1200, 7
  %v1202 = vsub.s32 0, %v1201
  %v1203 = vrot.slane %v1198, %v1202
  %1205 = vbcast.lane.b32.xlu0 %v1203, 256
  %v1206 = vpop.permute.xlu0 %1205
  %v1207 = vlaneseq
  %v1208 = vshrl.u32 %v1207, 7
  %v1209 = vsub.s32 1, %v1208
  %v1210 = vrot.slane %v1198, %v1209
  %1212 = vbcast.lane.b32.xlu0 %v1210, 256
  %v1213 = vpop.permute.xlu0 %1212
  %v1216 = vadd.f32 %v1164, %v1206
  %v1217 = vadd.f32 %v1167, %v1213
  %v1218 = vadd.f32 %v1170, %v1206
  %v1219 = vadd.f32 %v1173, %v1213
  %v1220 = vadd.f32 %v1176, %v1206
  %v1221 = vadd.f32 %v1179, %v1213
  %v1222 = vadd.f32 %v1182, %v1206
  %v1223 = vadd.f32 %v1185, %v1213
  %v1224 = vadd.f32 %v1188, %v1206
  %v1225 = vadd.f32 %v1191, %v1213
  %v1226 = vadd.f32 %v1194, %v1206
  %v1227 = vadd.f32 %v1197, %v1213
  %1240 = vset.pattern.permute.xlu0 0
  %1241 = vperm.xlu0 %1240, %v1216
  %v1242 = vpop.permute.xlu0 %1241
  %1243 = vset.pattern.permute.xlu0 0
  %1244 = vperm.xlu0 %1243, %v1217
  %v1245 = vpop.permute.xlu0 %1244
  %1246 = vset.pattern.permute.xlu0 0
  %1247 = vperm.xlu0 %1246, %v1218
  %v1248 = vpop.permute.xlu0 %1247
  %1249 = vset.pattern.permute.xlu0 0
  %1250 = vperm.xlu0 %1249, %v1219
  %v1251 = vpop.permute.xlu0 %1250
  %1252 = vset.pattern.permute.xlu0 0
  %1253 = vperm.xlu0 %1252, %v1220
  %v1254 = vpop.permute.xlu0 %1253
  %1255 = vset.pattern.permute.xlu0 0
  %1256 = vperm.xlu0 %1255, %v1221
  %v1257 = vpop.permute.xlu0 %1256
  %1258 = vset.pattern.permute.xlu0 0
  %1259 = vperm.xlu0 %1258, %v1222
  %v1260 = vpop.permute.xlu0 %1259
  %1261 = vset.pattern.permute.xlu0 0
  %1262 = vperm.xlu0 %1261, %v1223
  %v1263 = vpop.permute.xlu0 %1262
  %1264 = vset.pattern.permute.xlu0 0
  %1265 = vperm.xlu0 %1264, %v1224
  %v1266 = vpop.permute.xlu0 %1265
  %1267 = vset.pattern.permute.xlu0 0
  %1268 = vperm.xlu0 %1267, %v1225
  %v1269 = vpop.permute.xlu0 %1268
  %1270 = vset.pattern.permute.xlu0 0
  %1271 = vperm.xlu0 %1270, %v1226
  %v1272 = vpop.permute.xlu0 %1271
  %1273 = vset.pattern.permute.xlu0 0
  %1274 = vperm.xlu0 %1273, %v1227
  %v1275 = vpop.permute.xlu0 %1274
  %v1276 = vlaneseq
  %v1277 = vshrl.u32 %v1276, 7
  %v1278 = vsub.s32 %v45, %v1277
  %v1279 = vrot.slane %v1242, %v1278
  %v1280 = vlaneseq
  %v1281 = vshrl.u32 %v1280, 7
  %v1282 = vsub.s32 %v45, %v1281
  %v1283 = vrot.slane %v1245, %v1282
  %v1284 = vlaneseq
  %v1285 = vshrl.u32 %v1284, 7
  %v1286 = vsub.s32 %v45, %v1285
  %v1287 = vrot.slane %v1248, %v1286
  %v1288 = vlaneseq
  %v1289 = vshrl.u32 %v1288, 7
  %v1290 = vsub.s32 %v45, %v1289
  %v1291 = vrot.slane %v1251, %v1290
  %v1292 = vlaneseq
  %v1293 = vshrl.u32 %v1292, 7
  %v1294 = vsub.s32 %v45, %v1293
  %v1295 = vrot.slane %v1254, %v1294
  %v1296 = vlaneseq
  %v1297 = vshrl.u32 %v1296, 7
  %v1298 = vsub.s32 %v45, %v1297
  %v1299 = vrot.slane %v1257, %v1298
  %v1300 = vlaneseq
  %v1301 = vshrl.u32 %v1300, 7
  %v1302 = vsub.s32 %v45, %v1301
  %v1303 = vrot.slane %v1260, %v1302
  %v1304 = vlaneseq
  %v1305 = vshrl.u32 %v1304, 7
  %v1306 = vsub.s32 %v45, %v1305
  %v1307 = vrot.slane %v1263, %v1306
  %v1308 = vlaneseq
  %v1309 = vshrl.u32 %v1308, 7
  %v1310 = vsub.s32 %v45, %v1309
  %v1311 = vrot.slane %v1266, %v1310
  %v1312 = vlaneseq
  %v1313 = vshrl.u32 %v1312, 7
  %v1314 = vsub.s32 %v45, %v1313
  %v1315 = vrot.slane %v1269, %v1314
  %v1316 = vlaneseq
  %v1317 = vshrl.u32 %v1316, 7
  %v1318 = vsub.s32 %v45, %v1317
  %v1319 = vrot.slane %v1272, %v1318
  %v1320 = vlaneseq
  %v1321 = vshrl.u32 %v1320, 7
  %v1322 = vsub.s32 %v45, %v1321
  %v1323 = vrot.slane %v1275, %v1322
  %vm1324 = vcmask 1041409
  %v1325 = vsel %vm1324, %v1283, %v1279
  %v1326 = vsel %vm1324, %v1291, %v1287
  %v1327 = vsel %vm1324, %v1299, %v1295
  %v1328 = vsel %vm1324, %v1307, %v1303
  %v1329 = vsel %vm1324, %v1315, %v1311
  %v1330 = vsel %vm1324, %v1323, %v1319
  %vm1337 = vcmask 58368
  %v1338 = vsel %vm1337, %v1325, -inf
  %1339 = vmax.xlane.f32.xlu0 %v1338
  %v1340 = vpop.xlane.xlu0 %1339
  %v1341 = vsel %vm1337, %v1326, -inf
  %1342 = vmax.xlane.f32.xlu0 %v1341
  %v1343 = vpop.xlane.xlu0 %1342
  %v1344 = vsel %vm1337, %v1327, -inf
  %1345 = vmax.xlane.f32.xlu0 %v1344
  %v1346 = vpop.xlane.xlu0 %1345
  %v1347 = vsel %vm1337, %v1328, -inf
  %1348 = vmax.xlane.f32.xlu0 %v1347
  %v1349 = vpop.xlane.xlu0 %1348
  %v1350 = vsel %vm1337, %v1329, -inf
  %1351 = vmax.xlane.f32.xlu0 %v1350
  %v1352 = vpop.xlane.xlu0 %1351
  %v1353 = vsel %vm1337, %v1330, -inf
  %1354 = vmax.xlane.f32.xlu0 %v1353
  %v1355 = vpop.xlane.xlu0 %1354
  %v1362 = vlaneseq
  %v1363 = vshrl.u32 %v1362, 7
  %v1364 = vsub.s32 0, %v1363
  %v1365 = vrot.slane %v1340, %v1364
  %v1366 = vlaneseq
  %v1367 = vshrl.u32 %v1366, 7
  %v1368 = vsub.s32 1, %v1367
  %v1369 = vrot.slane %v1340, %v1368
  %v1370 = vlaneseq
  %v1371 = vshrl.u32 %v1370, 7
  %v1372 = vsub.s32 0, %v1371
  %v1373 = vrot.slane %v1343, %v1372
  %v1374 = vlaneseq
  %v1375 = vshrl.u32 %v1374, 7
  %v1376 = vsub.s32 1, %v1375
  %v1377 = vrot.slane %v1343, %v1376
  %v1378 = vlaneseq
  %v1379 = vshrl.u32 %v1378, 7
  %v1380 = vsub.s32 0, %v1379
  %v1381 = vrot.slane %v1346, %v1380
  %v1382 = vlaneseq
  %v1383 = vshrl.u32 %v1382, 7
  %v1384 = vsub.s32 1, %v1383
  %v1385 = vrot.slane %v1346, %v1384
  %v1386 = vlaneseq
  %v1387 = vshrl.u32 %v1386, 7
  %v1388 = vsub.s32 0, %v1387
  %v1389 = vrot.slane %v1349, %v1388
  %v1390 = vlaneseq
  %v1391 = vshrl.u32 %v1390, 7
  %v1392 = vsub.s32 1, %v1391
  %v1393 = vrot.slane %v1349, %v1392
  %v1394 = vlaneseq
  %v1395 = vshrl.u32 %v1394, 7
  %v1396 = vsub.s32 0, %v1395
  %v1397 = vrot.slane %v1352, %v1396
  %v1398 = vlaneseq
  %v1399 = vshrl.u32 %v1398, 7
  %v1400 = vsub.s32 1, %v1399
  %v1401 = vrot.slane %v1352, %v1400
  %v1402 = vlaneseq
  %v1403 = vshrl.u32 %v1402, 7
  %v1404 = vsub.s32 0, %v1403
  %v1405 = vrot.slane %v1355, %v1404
  %v1406 = vlaneseq
  %v1407 = vshrl.u32 %v1406, 7
  %v1408 = vsub.s32 1, %v1407
  %v1409 = vrot.slane %v1355, %v1408
  %v1422 = vsub.f32 %v1216, %v1365
  %v1423 = vsub.f32 %v1217, %v1369
  %v1424 = vsub.f32 %v1218, %v1373
  %v1425 = vsub.f32 %v1219, %v1377
  %v1426 = vsub.f32 %v1220, %v1381
  %v1427 = vsub.f32 %v1221, %v1385
  %v1428 = vsub.f32 %v1222, %v1389
  %v1429 = vsub.f32 %v1223, %v1393
  %v1430 = vsub.f32 %v1224, %v1397
  %v1431 = vsub.f32 %v1225, %v1401
  %v1432 = vsub.f32 %v1226, %v1405
  %v1433 = vsub.f32 %v1227, %v1409
  %v1434 = vmul.f32 %v1422, 1.442695
  %v1435 = vpow.pop %v1434
  %v1436 = vmul.f32 %v1423, 1.442695
  %v1437 = vpow.pop %v1436
  %v1438 = vmul.f32 %v1424, 1.442695
  %v1439 = vpow.pop %v1438
  %v1440 = vmul.f32 %v1425, 1.442695
  %v1441 = vpow.pop %v1440
  %v1442 = vmul.f32 %v1426, 1.442695
  %v1443 = vpow.pop %v1442
  %v1444 = vmul.f32 %v1427, 1.442695
  %v1445 = vpow.pop %v1444
  %v1446 = vmul.f32 %v1428, 1.442695
  %v1447 = vpow.pop %v1446
  %v1448 = vmul.f32 %v1429, 1.442695
  %v1449 = vpow.pop %v1448
  %v1450 = vmul.f32 %v1430, 1.442695
  %v1451 = vpow.pop %v1450
  %v1452 = vmul.f32 %v1431, 1.442695
  %v1453 = vpow.pop %v1452
  %v1454 = vmul.f32 %v1432, 1.442695
  %v1455 = vpow.pop %v1454
  %v1456 = vmul.f32 %v1433, 1.442695
  %v1457 = vpow.pop %v1456
  %1470 = vset.pattern.permute.xlu0 0
  %1471 = vperm.xlu0 %1470, %v1435
  %v1472 = vpop.permute.xlu0 %1471
  %1473 = vset.pattern.permute.xlu0 0
  %1474 = vperm.xlu0 %1473, %v1437
  %v1475 = vpop.permute.xlu0 %1474
  %1476 = vset.pattern.permute.xlu0 0
  %1477 = vperm.xlu0 %1476, %v1439
  %v1478 = vpop.permute.xlu0 %1477
  %1479 = vset.pattern.permute.xlu0 0
  %1480 = vperm.xlu0 %1479, %v1441
  %v1481 = vpop.permute.xlu0 %1480
  %1482 = vset.pattern.permute.xlu0 0
  %1483 = vperm.xlu0 %1482, %v1443
  %v1484 = vpop.permute.xlu0 %1483
  %1485 = vset.pattern.permute.xlu0 0
  %1486 = vperm.xlu0 %1485, %v1445
  %v1487 = vpop.permute.xlu0 %1486
  %1488 = vset.pattern.permute.xlu0 0
  %1489 = vperm.xlu0 %1488, %v1447
  %v1490 = vpop.permute.xlu0 %1489
  %1491 = vset.pattern.permute.xlu0 0
  %1492 = vperm.xlu0 %1491, %v1449
  %v1493 = vpop.permute.xlu0 %1492
  %1494 = vset.pattern.permute.xlu0 0
  %1495 = vperm.xlu0 %1494, %v1451
  %v1496 = vpop.permute.xlu0 %1495
  %1497 = vset.pattern.permute.xlu0 0
  %1498 = vperm.xlu0 %1497, %v1453
  %v1499 = vpop.permute.xlu0 %1498
  %1500 = vset.pattern.permute.xlu0 0
  %1501 = vperm.xlu0 %1500, %v1455
  %v1502 = vpop.permute.xlu0 %1501
  %1503 = vset.pattern.permute.xlu0 0
  %1504 = vperm.xlu0 %1503, %v1457
  %v1505 = vpop.permute.xlu0 %1504
  %v1506 = vlaneseq
  %v1507 = vshrl.u32 %v1506, 7
  %v1508 = vsub.s32 %v45, %v1507
  %v1509 = vrot.slane %v1472, %v1508
  %v1510 = vlaneseq
  %v1511 = vshrl.u32 %v1510, 7
  %v1512 = vsub.s32 %v45, %v1511
  %v1513 = vrot.slane %v1475, %v1512
  %v1514 = vlaneseq
  %v1515 = vshrl.u32 %v1514, 7
  %v1516 = vsub.s32 %v45, %v1515
  %v1517 = vrot.slane %v1478, %v1516
  %v1518 = vlaneseq
  %v1519 = vshrl.u32 %v1518, 7
  %v1520 = vsub.s32 %v45, %v1519
  %v1521 = vrot.slane %v1481, %v1520
  %v1522 = vlaneseq
  %v1523 = vshrl.u32 %v1522, 7
  %v1524 = vsub.s32 %v45, %v1523
  %v1525 = vrot.slane %v1484, %v1524
  %v1526 = vlaneseq
  %v1527 = vshrl.u32 %v1526, 7
  %v1528 = vsub.s32 %v45, %v1527
  %v1529 = vrot.slane %v1487, %v1528
  %v1530 = vlaneseq
  %v1531 = vshrl.u32 %v1530, 7
  %v1532 = vsub.s32 %v45, %v1531
  %v1533 = vrot.slane %v1490, %v1532
  %v1534 = vlaneseq
  %v1535 = vshrl.u32 %v1534, 7
  %v1536 = vsub.s32 %v45, %v1535
  %v1537 = vrot.slane %v1493, %v1536
  %v1538 = vlaneseq
  %v1539 = vshrl.u32 %v1538, 7
  %v1540 = vsub.s32 %v45, %v1539
  %v1541 = vrot.slane %v1496, %v1540
  %v1542 = vlaneseq
  %v1543 = vshrl.u32 %v1542, 7
  %v1544 = vsub.s32 %v45, %v1543
  %v1545 = vrot.slane %v1499, %v1544
  %v1546 = vlaneseq
  %v1547 = vshrl.u32 %v1546, 7
  %v1548 = vsub.s32 %v45, %v1547
  %v1549 = vrot.slane %v1502, %v1548
  %v1550 = vlaneseq
  %v1551 = vshrl.u32 %v1550, 7
  %v1552 = vsub.s32 %v45, %v1551
  %v1553 = vrot.slane %v1505, %v1552
  %v1554 = vsel %vm1324, %v1513, %v1509
  %v1555 = vsel %vm1324, %v1521, %v1517
  %v1556 = vsel %vm1324, %v1529, %v1525
  %v1557 = vsel %vm1324, %v1537, %v1533
  %v1558 = vsel %vm1324, %v1545, %v1541
  %v1559 = vsel %vm1324, %v1553, %v1549
  %v1566 = vsel %vm1337, %v1554, 0.0
  %1567 = vadd.xlane.f32.xlu0 %v1566
  %v1568 = vpop.xlane.xlu0 %1567
  %v1569 = vsel %vm1337, %v1555, 0.0
  %1570 = vadd.xlane.f32.xlu0 %v1569
  %v1571 = vpop.xlane.xlu0 %1570
  %v1572 = vsel %vm1337, %v1556, 0.0
  %1573 = vadd.xlane.f32.xlu0 %v1572
  %v1574 = vpop.xlane.xlu0 %1573
  %v1575 = vsel %vm1337, %v1557, 0.0
  %1576 = vadd.xlane.f32.xlu0 %v1575
  %v1577 = vpop.xlane.xlu0 %1576
  %v1578 = vsel %vm1337, %v1558, 0.0
  %1579 = vadd.xlane.f32.xlu0 %v1578
  %v1580 = vpop.xlane.xlu0 %1579
  %v1581 = vsel %vm1337, %v1559, 0.0
  %1582 = vadd.xlane.f32.xlu0 %v1581
  %v1583 = vpop.xlane.xlu0 %1582
  %v1584 = vrcp.pop %v1568
  %v1585 = vrcp.pop %v1571
  %v1586 = vrcp.pop %v1574
  %v1587 = vrcp.pop %v1577
  %v1588 = vrcp.pop %v1580
  %v1589 = vrcp.pop %v1583
  %v1596 = vlaneseq
  %v1597 = vshrl.u32 %v1596, 7
  %v1598 = vsub.s32 0, %v1597
  %v1599 = vrot.slane %v1584, %v1598
  %v1600 = vlaneseq
  %v1601 = vshrl.u32 %v1600, 7
  %v1602 = vsub.s32 1, %v1601
  %v1603 = vrot.slane %v1584, %v1602
  %v1604 = vlaneseq
  %v1605 = vshrl.u32 %v1604, 7
  %v1606 = vsub.s32 0, %v1605
  %v1607 = vrot.slane %v1585, %v1606
  %v1608 = vlaneseq
  %v1609 = vshrl.u32 %v1608, 7
  %v1610 = vsub.s32 1, %v1609
  %v1611 = vrot.slane %v1585, %v1610
  %v1612 = vlaneseq
  %v1613 = vshrl.u32 %v1612, 7
  %v1614 = vsub.s32 0, %v1613
  %v1615 = vrot.slane %v1586, %v1614
  %v1616 = vlaneseq
  %v1617 = vshrl.u32 %v1616, 7
  %v1618 = vsub.s32 1, %v1617
  %v1619 = vrot.slane %v1586, %v1618
  %v1620 = vlaneseq
  %v1621 = vshrl.u32 %v1620, 7
  %v1622 = vsub.s32 0, %v1621
  %v1623 = vrot.slane %v1587, %v1622
  %v1624 = vlaneseq
  %v1625 = vshrl.u32 %v1624, 7
  %v1626 = vsub.s32 1, %v1625
  %v1627 = vrot.slane %v1587, %v1626
  %v1628 = vlaneseq
  %v1629 = vshrl.u32 %v1628, 7
  %v1630 = vsub.s32 0, %v1629
  %v1631 = vrot.slane %v1588, %v1630
  %v1632 = vlaneseq
  %v1633 = vshrl.u32 %v1632, 7
  %v1634 = vsub.s32 1, %v1633
  %v1635 = vrot.slane %v1588, %v1634
  %v1636 = vlaneseq
  %v1637 = vshrl.u32 %v1636, 7
  %v1638 = vsub.s32 0, %v1637
  %v1639 = vrot.slane %v1589, %v1638
  %v1640 = vlaneseq
  %v1641 = vshrl.u32 %v1640, 7
  %v1642 = vsub.s32 1, %v1641
  %v1643 = vrot.slane %v1589, %v1642
  %v1656 = vmul.f32 %v1435, %v1599
  %v1657 = vmul.f32 %v1437, %v1603
  %v1658 = vmul.f32 %v1439, %v1607
  %v1659 = vmul.f32 %v1441, %v1611
  %v1660 = vmul.f32 %v1443, %v1615
  %v1661 = vmul.f32 %v1445, %v1619
  %v1662 = vmul.f32 %v1447, %v1623
  %v1663 = vmul.f32 %v1449, %v1627
  %v1664 = vmul.f32 %v1451, %v1631
  %v1665 = vmul.f32 %v1453, %v1635
  %v1666 = vmul.f32 %v1455, %v1639
  %v1667 = vmul.f32 %v1457, %v1643
  %1669 = vset.pattern.permute.xlu0 0
  %1670 = vperm.xlu0 %1669, %v1656
  %v1671 = vpop.permute.xlu0 %1670
  %1674 = vset.pattern.permute.xlu0 0
  %1675 = vperm.xlu0 %1674, %v1657
  %v1676 = vpop.permute.xlu0 %1675
  %1679 = vset.pattern.permute.xlu0 0
  %1680 = vperm.xlu0 %1679, %v1658
  %v1681 = vpop.permute.xlu0 %1680
  %1684 = vset.pattern.permute.xlu0 0
  %1685 = vperm.xlu0 %1684, %v1659
  %v1686 = vpop.permute.xlu0 %1685
  %1689 = vset.pattern.permute.xlu0 0
  %1690 = vperm.xlu0 %1689, %v1660
  %v1691 = vpop.permute.xlu0 %1690
  %1694 = vset.pattern.permute.xlu0 0
  %1695 = vperm.xlu0 %1694, %v1661
  %v1696 = vpop.permute.xlu0 %1695
  %1699 = vset.pattern.permute.xlu0 0
  %1700 = vperm.xlu0 %1699, %v1662
  %v1701 = vpop.permute.xlu0 %1700
  %1704 = vset.pattern.permute.xlu0 0
  %1705 = vperm.xlu0 %1704, %v1663
  %v1706 = vpop.permute.xlu0 %1705
  %1709 = vset.pattern.permute.xlu0 0
  %1710 = vperm.xlu0 %1709, %v1664
  %v1711 = vpop.permute.xlu0 %1710
  %1714 = vset.pattern.permute.xlu0 0
  %1715 = vperm.xlu0 %1714, %v1665
  %v1716 = vpop.permute.xlu0 %1715
  %1719 = vset.pattern.permute.xlu0 0
  %1720 = vperm.xlu0 %1719, %v1666
  %v1721 = vpop.permute.xlu0 %1720
  %1724 = vset.pattern.permute.xlu0 0
  %1725 = vperm.xlu0 %1724, %v1667
  %v1726 = vpop.permute.xlu0 %1725
  %v1728 = vmul.f32 %v1671, %v976
  %v1729 = vmul.f32 %v1676, %v981
  %v1730 = vmul.f32 %v1681, %v976
  %v1731 = vmul.f32 %v1686, %v981
  %v1732 = vmul.f32 %v1691, %v976
  %v1733 = vmul.f32 %v1696, %v981
  %v1734 = vmul.f32 %v1701, %v976
  %v1735 = vmul.f32 %v1706, %v981
  %v1736 = vmul.f32 %v1711, %v976
  %v1737 = vmul.f32 %v1716, %v981
  %v1738 = vmul.f32 %v1721, %v976
  %v1739 = vmul.f32 %v1726, %v981
  %vm1740 = vcmask 523520
  %v1741 = vsel %vm1740, %v1728, 0.0
  %v1742 = vrot.slane %v1741, 4
  %v1743 = vadd.f32 %v1741, %v1742
  %v1744 = vrot.slane %v1743, 2
  %v1745 = vadd.f32 %v1743, %v1744
  %v1746 = vrot.slane %v1745, 1
  %v1747 = vadd.f32 %v1745, %v1746
  %v1748 = vsel %vm1740, %v1729, 0.0
  %v1749 = vrot.slane %v1748, 4
  %v1750 = vadd.f32 %v1748, %v1749
  %v1751 = vrot.slane %v1750, 2
  %v1752 = vadd.f32 %v1750, %v1751
  %v1753 = vrot.slane %v1752, 1
  %v1754 = vadd.f32 %v1752, %v1753
  %v1755 = vsel %vm1740, %v1730, 0.0
  %v1756 = vrot.slane %v1755, 4
  %v1757 = vadd.f32 %v1755, %v1756
  %v1758 = vrot.slane %v1757, 2
  %v1759 = vadd.f32 %v1757, %v1758
  %v1760 = vrot.slane %v1759, 1
  %v1761 = vadd.f32 %v1759, %v1760
  %v1762 = vsel %vm1740, %v1731, 0.0
  %v1763 = vrot.slane %v1762, 4
  %v1764 = vadd.f32 %v1762, %v1763
  %v1765 = vrot.slane %v1764, 2
  %v1766 = vadd.f32 %v1764, %v1765
  %v1767 = vrot.slane %v1766, 1
  %v1768 = vadd.f32 %v1766, %v1767
  %v1769 = vsel %vm1740, %v1732, 0.0
  %v1770 = vrot.slane %v1769, 4
  %v1771 = vadd.f32 %v1769, %v1770
  %v1772 = vrot.slane %v1771, 2
  %v1773 = vadd.f32 %v1771, %v1772
  %v1774 = vrot.slane %v1773, 1
  %v1775 = vadd.f32 %v1773, %v1774
  %v1776 = vsel %vm1740, %v1733, 0.0
  %v1777 = vrot.slane %v1776, 4
  %v1778 = vadd.f32 %v1776, %v1777
  %v1779 = vrot.slane %v1778, 2
  %v1780 = vadd.f32 %v1778, %v1779
  %v1781 = vrot.slane %v1780, 1
  %v1782 = vadd.f32 %v1780, %v1781
  %v1783 = vsel %vm1740, %v1734, 0.0
  %v1784 = vrot.slane %v1783, 4
  %v1785 = vadd.f32 %v1783, %v1784
  %v1786 = vrot.slane %v1785, 2
  %v1787 = vadd.f32 %v1785, %v1786
  %v1788 = vrot.slane %v1787, 1
  %v1789 = vadd.f32 %v1787, %v1788
  %v1790 = vsel %vm1740, %v1735, 0.0
  %v1791 = vrot.slane %v1790, 4
  %v1792 = vadd.f32 %v1790, %v1791
  %v1793 = vrot.slane %v1792, 2
  %v1794 = vadd.f32 %v1792, %v1793
  %v1795 = vrot.slane %v1794, 1
  %v1796 = vadd.f32 %v1794, %v1795
  %v1797 = vsel %vm1740, %v1736, 0.0
  %v1798 = vrot.slane %v1797, 4
  %v1799 = vadd.f32 %v1797, %v1798
  %v1800 = vrot.slane %v1799, 2
  %v1801 = vadd.f32 %v1799, %v1800
  %v1802 = vrot.slane %v1801, 1
  %v1803 = vadd.f32 %v1801, %v1802
  %v1804 = vsel %vm1740, %v1737, 0.0
  %v1805 = vrot.slane %v1804, 4
  %v1806 = vadd.f32 %v1804, %v1805
  %v1807 = vrot.slane %v1806, 2
  %v1808 = vadd.f32 %v1806, %v1807
  %v1809 = vrot.slane %v1808, 1
  %v1810 = vadd.f32 %v1808, %v1809
  %v1811 = vsel %vm1740, %v1738, 0.0
  %v1812 = vrot.slane %v1811, 4
  %v1813 = vadd.f32 %v1811, %v1812
  %v1814 = vrot.slane %v1813, 2
  %v1815 = vadd.f32 %v1813, %v1814
  %v1816 = vrot.slane %v1815, 1
  %v1817 = vadd.f32 %v1815, %v1816
  %v1818 = vsel %vm1740, %v1739, 0.0
  %v1819 = vrot.slane %v1818, 4
  %v1820 = vadd.f32 %v1818, %v1819
  %v1821 = vrot.slane %v1820, 2
  %v1822 = vadd.f32 %v1820, %v1821
  %v1823 = vrot.slane %v1822, 1
  %v1824 = vadd.f32 %v1822, %v1823
  %v1825 = vld [vmem:[%s4 + $0x40] sm:$0xff]
  %v1826 = vld [vmem:[%s4 + $0x48] sm:$0xff]
  %v1827 = vld [vmem:[%s4 + $0x50] sm:$0xff]
  %v1828 = vld [vmem:[%s4 + $0x58] sm:$0xff]
  %v1829 = vld [vmem:[%s4 + $0x60] sm:$0xff]
  %v1830 = vld [vmem:[%s4 + $0x68] sm:$0xff]
  %v1831 = vld [vmem:[%s4 + $0x70] sm:$0xff]
  %v1832 = vld [vmem:[%s4 + $0x78] sm:$0xff]
  %v1845 = vsel %vm1324, %v1754, %v1747
  %vm1846 = vcmask 1042434
  %v1847 = vsel %vm1846, %v1761, %v1845
  %vm1848 = vcmask 1043459
  %v1849 = vsel %vm1848, %v1768, %v1847
  %vm1850 = vcmask 1044484
  %v1851 = vsel %vm1850, %v1775, %v1849
  %vm1852 = vcmask 1045509
  %v1853 = vsel %vm1852, %v1782, %v1851
  %vm1854 = vcmask 1046534
  %v1855 = vsel %vm1854, %v1789, %v1853
  %vm1856 = vcmask 1047559
  %v1857 = vsel %vm1856, %v1796, %v1855
  %v1858 = vsel %vm1324, %v1810, %v1803
  %v1859 = vsel %vm1846, %v1817, %v1858
  %v1860 = vsel %vm1848, %v1824, %v1859
  %1861 = vrot.lane.b32.xlu0 %v1857, 96
  %v1862 = vpop.permute.xlu0 %1861
  %1863 = vrot.lane.b32.xlu0 %v1860, 96
  %v1864 = vpop.permute.xlu0 %1863
  %v1865 = vsel %vm61, %v1862, 0
  %v1867 = vsel %vm61, %v1864, 0
  %1869 = vmatprep.subr.mxu0 0.0
  %1870 = vmatpush1.msra.mxu0 %v1829
  %1871 = vmatprep.subr.mxu0 0.0
  %1872 = vmatpush1.msra.mxu0 %v1830
  %1873 = vmatprep.subr.mxu0 0.0
  %1874 = vmatpush1.msra.mxu0 %v1831
  %1875 = vmatprep.subr.mxu0 0.0
  %1876 = vmatpush1.msra.mxu0 %v1832
  %1877 = vmatprep.subr.mxu0 0.0
  %1878 = vmatpush1.msra.mxu0 0.0
  %1879 = vmatprep.subr.mxu0 0.0
  %1880 = vmatpush1.msra.mxu0 0.0
  %1881 = vmatprep.subr.mxu0 0.0
  %1882 = vmatpush1.msra.mxu0 0.0
  %1883 = vmatprep.subr.mxu0 0.0
  %1884 = vmatpush1.msra.mxu0 0.0
  %1885 = vmatprep.subr.mxu0 0.0
  %1886 = vmatpush1.msra.mxu0 0.0
  %1887 = vmatprep.subr.mxu0 0.0
  %1888 = vmatpush1.msra.mxu0 0.0
  %1889 = vmatprep.subr.mxu0 0.0
  %1890 = vmatpush1.msra.mxu0 0.0
  %1891 = vmatprep.subr.mxu0 0.0
  %1892 = vmatpush1.msra.mxu0 0.0
  %1893 = vmatprep.subr.mxu0 0.0
  %1894 = vmatpush1.msra.mxu0 0.0
  %1895 = vmatprep.subr.mxu0 0.0
  %1896 = vmatpush1.msra.mxu0 0.0
  %1897 = vmatprep.subr.mxu0 0.0
  %1898 = vmatpush1.msra.mxu0 0.0
  %1899 = vmatprep.subr.mxu0 0.0
  %1900 = vmatpush1.msra.mxu0 0.0
  %1901 = vmatprep.subr.mxu0 0.0
  %1902 = vmatpush1.msra.mxu0 0.0
  %1903 = vmatprep.subr.mxu0 0.0
  %1904 = vmatpush1.msra.mxu0 0.0
  %1905 = vmatprep.subr.mxu0 0.0
  %1906 = vmatpush1.msra.mxu0 0.0
  %1907 = vmatprep.subr.mxu0 0.0
  %1908 = vmatpush1.msra.mxu0 0.0
  %1909 = vmatprep.subr.mxu0 0.0
  %1910 = vmatpush1.msra.mxu0 0.0
  %1911 = vmatprep.subr.mxu0 0.0
  %1912 = vmatpush1.msra.mxu0 0.0
  %1913 = vmatprep.subr.mxu0 0.0
  %1914 = vmatpush1.msra.mxu0 0.0
  %1915 = vmatprep.subr.mxu0 0.0
  %1916 = vmatpush1.msra.mxu0 0.0
  %1917 = vmatprep.subr.mxu0 0.0
  %1918 = vmatpush1.msra.mxu0 0.0
  %1919 = vmatprep.subr.mxu0 0.0
  %1920 = vmatpush1.msra.mxu0 0.0
  %1921 = vmatprep.subr.mxu0 0.0
  %1922 = vmatpush1.msra.mxu0 0.0
  %1923 = vmatprep.subr.mxu0 0.0
  %1924 = vmatpush1.msra.mxu0 0.0
  %1925 = vmatprep.subr.mxu0 0.0
  %1926 = vmatpush1.msra.mxu0 0.0
  %1927 = vmatprep.subr.mxu0 0.0
  %1928 = vmatpush1.msra.mxu0 0.0
  %1929 = vmatprep.subr.mxu0 0.0
  %1930 = vmatpush1.msra.mxu0 0.0
  %1931 = vmatprep.subr.mxu0 0.0
  %1932 = vmatpush1.msra.mxu0 0.0
  %1933 = vmatprep.mubr.f32.mxu0 0.0
  %1934 = vmatmul.mubr.f32.gmra.mrb[0].mxu0 %v1865
  %v1935 = vpop.f32.mrb[0].mxu0
  %v1936 = vadd.f32 0.0, %v1935
  %v1937 = vpop.f32.mrb[0].mxu0
  %1938 = vmatprep.mubr.f32.mxu0 0.0
  %1939 = vmatmul.mubr.f32.gmra.mrb[0].mxu0 %v1867
  %v1940 = vpop.f32.mrb[0].mxu0
  %v1941 = vadd.f32 0.0, %v1940
  %v1942 = vpop.f32.mrb[0].mxu0
  %1943 = vdwg.mxu0
  %1944 = vmatprep.subr.mxu0 0.0
  %1945 = vmatpush1.msra.mxu0 %v1825
  %1946 = vmatprep.subr.mxu0 0.0
  %1947 = vmatpush1.msra.mxu0 %v1826
  %1948 = vmatprep.subr.mxu0 0.0
  %1949 = vmatpush1.msra.mxu0 %v1827
  %1950 = vmatprep.subr.mxu0 0.0
  %1951 = vmatpush1.msra.mxu0 %v1828
  %1952 = vmatprep.subr.mxu0 0.0
  %1953 = vmatpush1.msra.mxu0 0.0
  %1954 = vmatprep.subr.mxu0 0.0
  %1955 = vmatpush1.msra.mxu0 0.0
  %1956 = vmatprep.subr.mxu0 0.0
  %1957 = vmatpush1.msra.mxu0 0.0
  %1958 = vmatprep.subr.mxu0 0.0
  %1959 = vmatpush1.msra.mxu0 0.0
  %1960 = vmatprep.subr.mxu0 0.0
  %1961 = vmatpush1.msra.mxu0 0.0
  %1962 = vmatprep.subr.mxu0 0.0
  %1963 = vmatpush1.msra.mxu0 0.0
  %1964 = vmatprep.subr.mxu0 0.0
  %1965 = vmatpush1.msra.mxu0 0.0
  %1966 = vmatprep.subr.mxu0 0.0
  %1967 = vmatpush1.msra.mxu0 0.0
  %1968 = vmatprep.subr.mxu0 0.0
  %1969 = vmatpush1.msra.mxu0 0.0
  %1970 = vmatprep.subr.mxu0 0.0
  %1971 = vmatpush1.msra.mxu0 0.0
  %1972 = vmatprep.subr.mxu0 0.0
  %1973 = vmatpush1.msra.mxu0 0.0
  %1974 = vmatprep.subr.mxu0 0.0
  %1975 = vmatpush1.msra.mxu0 0.0
  %1976 = vmatprep.subr.mxu0 0.0
  %1977 = vmatpush1.msra.mxu0 0.0
  %1978 = vmatprep.subr.mxu0 0.0
  %1979 = vmatpush1.msra.mxu0 0.0
  %1980 = vmatprep.subr.mxu0 0.0
  %1981 = vmatpush1.msra.mxu0 0.0
  %1982 = vmatprep.subr.mxu0 0.0
  %1983 = vmatpush1.msra.mxu0 0.0
  %1984 = vmatprep.subr.mxu0 0.0
  %1985 = vmatpush1.msra.mxu0 0.0
  %1986 = vmatprep.subr.mxu0 0.0
  %1987 = vmatpush1.msra.mxu0 0.0
  %1988 = vmatprep.subr.mxu0 0.0
  %1989 = vmatpush1.msra.mxu0 0.0
  %1990 = vmatprep.subr.mxu0 0.0
  %1991 = vmatpush1.msra.mxu0 0.0
  %1992 = vmatprep.subr.mxu0 0.0
  %1993 = vmatpush1.msra.mxu0 0.0
  %1994 = vmatprep.subr.mxu0 0.0
  %1995 = vmatpush1.msra.mxu0 0.0
  %1996 = vmatprep.subr.mxu0 0.0
  %1997 = vmatpush1.msra.mxu0 0.0
  %1998 = vmatprep.subr.mxu0 0.0
  %1999 = vmatpush1.msra.mxu0 0.0
  %2000 = vmatprep.subr.mxu0 0.0
  %2001 = vmatpush1.msra.mxu0 0.0
  %2002 = vmatprep.subr.mxu0 0.0
  %2003 = vmatpush1.msra.mxu0 0.0
  %2004 = vmatprep.subr.mxu0 0.0
  %2005 = vmatpush1.msra.mxu0 0.0
  %2006 = vmatprep.subr.mxu0 0.0
  %2007 = vmatpush1.msra.mxu0 0.0
  %2008 = vmatprep.mubr.f32.mxu0 0.0
  %2009 = vmatmul.mubr.f32.gmra.mrb[0].mxu0 %v810
  %v2010 = vpop.f32.mrb[0].mxu0
  %v2011 = vadd.f32 %v1936, %v2010
  %v2012 = vpop.f32.mrb[0].mxu0
  %2013 = vmatprep.mubr.f32.mxu0 0.0
  %2014 = vmatmul.mubr.f32.gmra.mrb[0].mxu0 %v813
  %v2015 = vpop.f32.mrb[0].mxu0
  %v2016 = vadd.f32 %v1941, %v2015
  %v2017 = vpop.f32.mrb[0].mxu0
  %2018 = vdwg.mxu0
  %v2019 = vld [vmem:[%s5 + $0x1] sm:$0x1]
  %v2020 = vlaneseq
  %v2021 = vshrl.u32 %v2020, 7
  %v2022 = vsub.s32 0, %v2021
  %v2023 = vrot.slane %v2019, %v2022
  %v2024 = vadd.f32 %v2011, %v2023
  %v2025 = vadd.f32 %v2016, %v2023
  %v2026 = vld [vmem:[%s4 + $0x80] sm:$0xff]
  %v2027 = vld [vmem:[%s4 + $0x88] sm:$0xff]
  %v2028 = vld [vmem:[%s4 + $0x90] sm:$0xff]
  %v2029 = vld [vmem:[%s4 + $0x98] sm:$0xff]
  %v2030 = vld [vmem:[%s1 + $0x2] sm:$0x3]
  %v2031 = vld [vmem:[%s1 + $0x6] sm:$0x3]
  %v2033 = vsel %vm61, %v2030, 0
  %2035 = vmatprep.subr.mxu0 0.0
  %2036 = vmatpush1.msra.mxu0 %v2026
  %2037 = vmatprep.subr.mxu0 0.0
  %2038 = vmatpush1.msra.mxu0 %v2027
  %2039 = vmatprep.subr.mxu0 0.0
  %2040 = vmatpush1.msra.mxu0 %v2028
  %2041 = vmatprep.subr.mxu0 0.0
  %2042 = vmatpush1.msra.mxu0 %v2029
  %2043 = vmatprep.subr.mxu0 0.0
  %2044 = vmatpush1.msra.mxu0 0.0
  %2045 = vmatprep.subr.mxu0 0.0
  %2046 = vmatpush1.msra.mxu0 0.0
  %2047 = vmatprep.subr.mxu0 0.0
  %2048 = vmatpush1.msra.mxu0 0.0
  %2049 = vmatprep.subr.mxu0 0.0
  %2050 = vmatpush1.msra.mxu0 0.0
  %2051 = vmatprep.subr.mxu0 0.0
  %2052 = vmatpush1.msra.mxu0 0.0
  %2053 = vmatprep.subr.mxu0 0.0
  %2054 = vmatpush1.msra.mxu0 0.0
  %2055 = vmatprep.subr.mxu0 0.0
  %2056 = vmatpush1.msra.mxu0 0.0
  %2057 = vmatprep.subr.mxu0 0.0
  %2058 = vmatpush1.msra.mxu0 0.0
  %2059 = vmatprep.subr.mxu0 0.0
  %2060 = vmatpush1.msra.mxu0 0.0
  %2061 = vmatprep.subr.mxu0 0.0
  %2062 = vmatpush1.msra.mxu0 0.0
  %2063 = vmatprep.subr.mxu0 0.0
  %2064 = vmatpush1.msra.mxu0 0.0
  %2065 = vmatprep.subr.mxu0 0.0
  %2066 = vmatpush1.msra.mxu0 0.0
  %2067 = vmatprep.subr.mxu0 0.0
  %2068 = vmatpush1.msra.mxu0 0.0
  %2069 = vmatprep.subr.mxu0 0.0
  %2070 = vmatpush1.msra.mxu0 0.0
  %2071 = vmatprep.subr.mxu0 0.0
  %2072 = vmatpush1.msra.mxu0 0.0
  %2073 = vmatprep.subr.mxu0 0.0
  %2074 = vmatpush1.msra.mxu0 0.0
  %2075 = vmatprep.subr.mxu0 0.0
  %2076 = vmatpush1.msra.mxu0 0.0
  %2077 = vmatprep.subr.mxu0 0.0
  %2078 = vmatpush1.msra.mxu0 0.0
  %2079 = vmatprep.subr.mxu0 0.0
  %2080 = vmatpush1.msra.mxu0 0.0
  %2081 = vmatprep.subr.mxu0 0.0
  %2082 = vmatpush1.msra.mxu0 0.0
  %2083 = vmatprep.subr.mxu0 0.0
  %2084 = vmatpush1.msra.mxu0 0.0
  %2085 = vmatprep.subr.mxu0 0.0
  %2086 = vmatpush1.msra.mxu0 0.0
  %2087 = vmatprep.subr.mxu0 0.0
  %2088 = vmatpush1.msra.mxu0 0.0
  %2089 = vmatprep.subr.mxu0 0.0
  %2090 = vmatpush1.msra.mxu0 0.0
  %2091 = vmatprep.subr.mxu0 0.0
  %2092 = vmatpush1.msra.mxu0 0.0
  %2093 = vmatprep.subr.mxu0 0.0
  %2094 = vmatpush1.msra.mxu0 0.0
  %2095 = vmatprep.subr.mxu0 0.0
  %2096 = vmatpush1.msra.mxu0 0.0
  %2097 = vmatprep.subr.mxu0 0.0
  %2098 = vmatpush1.msra.mxu0 0.0
  %2099 = vmatprep.mubr.f32.mxu0 0.0
  %2100 = vmatmul.mubr.f32.gmra.mrb[0].mxu0 %v2033
  %v2101 = vpop.f32.mrb[0].mxu0
  %v2102 = vadd.f32 0.0, %v2101
  %v2103 = vpop.f32.mrb[0].mxu0
  %2104 = vdwg.mxu0
  %v2105 = vadd.f32 %v2024, %v2102
  %v2106 = vmul.f32 %v2105, %v49
  %v2107 = vtanh.pop %v2106
  %v2108 = vmul.f32 %v2107, 0.5
  %v2109 = vadd.f32 %v2108, 0.5
  %v2110 = vsel %vm48, %v2107, %v2109
  %2112 = vrot.lane.b32.xlu0 %v2031, 32
  %v2113 = vpop.permute.xlu0 %2112
  %v2115 = vmul.f32 %v2110, %v2113
  %2117 = vrot.lane.b32.xlu0 %v2110, 64
  %v2118 = vpop.permute.xlu0 %2117
  %v2120 = vmul.f32 %v2110, %v2118
  %2122 = vrot.lane.b32.xlu0 %v2120, 32
  %v2123 = vpop.permute.xlu0 %2122
  %v2125 = vadd.f32 %v2115, %v2123
  %v2126 = vtanh.pop %v2125
  %2128 = vrot.lane.b32.xlu0 %v2126, 64
  %v2129 = vpop.permute.xlu0 %2128
  %v2131 = vmul.f32 %v2110, %v2129
  %2133 = vrot.lane.b32.xlu0 %v2131, 32
  %v2134 = vpop.permute.xlu0 %2133
  %2136 = vst.msk [vmem:[#allocation2] sm:$0x3] %vm253, %v2134
  %v2137 = vsel %vm61, %v2134, 0
  %2139 = vmatprep.subr.mxu0 0.0
  %2140 = vmatpush1.msra.mxu0 %v2026
  %2141 = vmatprep.subr.mxu0 0.0
  %2142 = vmatpush1.msra.mxu0 %v2027
  %2143 = vmatprep.subr.mxu0 0.0
  %2144 = vmatpush1.msra.mxu0 %v2028
  %2145 = vmatprep.subr.mxu0 0.0
  %2146 = vmatpush1.msra.mxu0 %v2029
  %2147 = vmatprep.subr.mxu0 0.0
  %2148 = vmatpush1.msra.mxu0 0.0
  %2149 = vmatprep.subr.mxu0 0.0
  %2150 = vmatpush1.msra.mxu0 0.0
  %2151 = vmatprep.subr.mxu0 0.0
  %2152 = vmatpush1.msra.mxu0 0.0
  %2153 = vmatprep.subr.mxu0 0.0
  %2154 = vmatpush1.msra.mxu0 0.0
  %2155 = vmatprep.subr.mxu0 0.0
  %2156 = vmatpush1.msra.mxu0 0.0
  %2157 = vmatprep.subr.mxu0 0.0
  %2158 = vmatpush1.msra.mxu0 0.0
  %2159 = vmatprep.subr.mxu0 0.0
  %2160 = vmatpush1.msra.mxu0 0.0
  %2161 = vmatprep.subr.mxu0 0.0
  %2162 = vmatpush1.msra.mxu0 0.0
  %2163 = vmatprep.subr.mxu0 0.0
  %2164 = vmatpush1.msra.mxu0 0.0
  %2165 = vmatprep.subr.mxu0 0.0
  %2166 = vmatpush1.msra.mxu0 0.0
  %2167 = vmatprep.subr.mxu0 0.0
  %2168 = vmatpush1.msra.mxu0 0.0
  %2169 = vmatprep.subr.mxu0 0.0
  %2170 = vmatpush1.msra.mxu0 0.0
  %2171 = vmatprep.subr.mxu0 0.0
  %2172 = vmatpush1.msra.mxu0 0.0
  %2173 = vmatprep.subr.mxu0 0.0
  %2174 = vmatpush1.msra.mxu0 0.0
  %2175 = vmatprep.subr.mxu0 0.0
  %2176 = vmatpush1.msra.mxu0 0.0
  %2177 = vmatprep.subr.mxu0 0.0
  %2178 = vmatpush1.msra.mxu0 0.0
  %2179 = vmatprep.subr.mxu0 0.0
  %2180 = vmatpush1.msra.mxu0 0.0
  %2181 = vmatprep.subr.mxu0 0.0
  %2182 = vmatpush1.msra.mxu0 0.0
  %2183 = vmatprep.subr.mxu0 0.0
  %2184 = vmatpush1.msra.mxu0 0.0
  %2185 = vmatprep.subr.mxu0 0.0
  %2186 = vmatpush1.msra.mxu0 0.0
  %2187 = vmatprep.subr.mxu0 0.0
  %2188 = vmatpush1.msra.mxu0 0.0
  %2189 = vmatprep.subr.mxu0 0.0
  %2190 = vmatpush1.msra.mxu0 0.0
  %2191 = vmatprep.subr.mxu0 0.0
  %2192 = vmatpush1.msra.mxu0 0.0
  %2193 = vmatprep.subr.mxu0 0.0
  %2194 = vmatpush1.msra.mxu0 0.0
  %2195 = vmatprep.subr.mxu0 0.0
  %2196 = vmatpush1.msra.mxu0 0.0
  %2197 = vmatprep.subr.mxu0 0.0
  %2198 = vmatpush1.msra.mxu0 0.0
  %2199 = vmatprep.subr.mxu0 0.0
  %2200 = vmatpush1.msra.mxu0 0.0
  %2201 = vmatprep.subr.mxu0 0.0
  %2202 = vmatpush1.msra.mxu0 0.0
  %2203 = vmatprep.mubr.f32.mxu0 0.0
  %2204 = vmatmul.mubr.f32.gmra.mrb[0].mxu0 %v2137
  %v2205 = vpop.f32.mrb[0].mxu0
  %v2206 = vadd.f32 0.0, %v2205
  %v2207 = vpop.f32.mrb[0].mxu0
  %2208 = vdwg.mxu0
  %v2210 = vrot.slane %v2206, 6
  %v2212 = vadd.f32 %v2024, %v2210
  %v2213 = vmul.f32 %v2212, %v49
  %v2214 = vtanh.pop %v2213
  %v2215 = vmul.f32 %v2214, 0.5
  %v2216 = vadd.f32 %v2215, 0.5
  %v2217 = vsel %vm48, %v2214, %v2216
  %v2219 = vrot.slane %v2125, 6
  %v2221 = vmul.f32 %v2217, %v2219
  %2223 = vrot.lane.b32.xlu0 %v2217, 64
  %v2224 = vpop.permute.xlu0 %2223
  %v2226 = vmul.f32 %v2217, %v2224
  %2228 = vrot.lane.b32.xlu0 %v2226, 32
  %v2229 = vpop.permute.xlu0 %2228
  %v2231 = vadd.f32 %v2221, %v2229
  %v2232 = vtanh.pop %v2231
  %2234 = vrot.lane.b32.xlu0 %v2232, 64
  %v2235 = vpop.permute.xlu0 %2234
  %v2237 = vmul.f32 %v2217, %v2235
  %2239 = vrot.lane.b32.xlu0 %v2237, 32
  %v2240 = vpop.permute.xlu0 %2239
  %2242 = vst.msk [vmem:[#allocation2] sm:$0xc] %vm360, %v2240
  %v2243 = vrot.slane %v2237, 2
  %2244 = vrot.lane.b32.xlu0 %v2243, 32
  %v2245 = vpop.permute.xlu0 %2244
  %v2246 = vsel %vm61, %v2245, 0
  %2248 = vmatprep.subr.mxu0 0.0
  %2249 = vmatpush1.msra.mxu0 %v2026
  %2250 = vmatprep.subr.mxu0 0.0
  %2251 = vmatpush1.msra.mxu0 %v2027
  %2252 = vmatprep.subr.mxu0 0.0
  %2253 = vmatpush1.msra.mxu0 %v2028
  %2254 = vmatprep.subr.mxu0 0.0
  %2255 = vmatpush1.msra.mxu0 %v2029
  %2256 = vmatprep.subr.mxu0 0.0
  %2257 = vmatpush1.msra.mxu0 0.0
  %2258 = vmatprep.subr.mxu0 0.0
  %2259 = vmatpush1.msra.mxu0 0.0
  %2260 = vmatprep.subr.mxu0 0.0
  %2261 = vmatpush1.msra.mxu0 0.0
  %2262 = vmatprep.subr.mxu0 0.0
  %2263 = vmatpush1.msra.mxu0 0.0
  %2264 = vmatprep.subr.mxu0 0.0
  %2265 = vmatpush1.msra.mxu0 0.0
  %2266 = vmatprep.subr.mxu0 0.0
  %2267 = vmatpush1.msra.mxu0 0.0
  %2268 = vmatprep.subr.mxu0 0.0
  %2269 = vmatpush1.msra.mxu0 0.0
  %2270 = vmatprep.subr.mxu0 0.0
  %2271 = vmatpush1.msra.mxu0 0.0
  %2272 = vmatprep.subr.mxu0 0.0
  %2273 = vmatpush1.msra.mxu0 0.0
  %2274 = vmatprep.subr.mxu0 0.0
  %2275 = vmatpush1.msra.mxu0 0.0
  %2276 = vmatprep.subr.mxu0 0.0
  %2277 = vmatpush1.msra.mxu0 0.0
  %2278 = vmatprep.subr.mxu0 0.0
  %2279 = vmatpush1.msra.mxu0 0.0
  %2280 = vmatprep.subr.mxu0 0.0
  %2281 = vmatpush1.msra.mxu0 0.0
  %2282 = vmatprep.subr.mxu0 0.0
  %2283 = vmatpush1.msra.mxu0 0.0
  %2284 = vmatprep.subr.mxu0 0.0
  %2285 = vmatpush1.msra.mxu0 0.0
  %2286 = vmatprep.subr.mxu0 0.0
  %2287 = vmatpush1.msra.mxu0 0.0
  %2288 = vmatprep.subr.mxu0 0.0
  %2289 = vmatpush1.msra.mxu0 0.0
  %2290 = vmatprep.subr.mxu0 0.0
  %2291 = vmatpush1.msra.mxu0 0.0
  %2292 = vmatprep.subr.mxu0 0.0
  %2293 = vmatpush1.msra.mxu0 0.0
  %2294 = vmatprep.subr.mxu0 0.0
  %2295 = vmatpush1.msra.mxu0 0.0
  %2296 = vmatprep.subr.mxu0 0.0
  %2297 = vmatpush1.msra.mxu0 0.0
  %2298 = vmatprep.subr.mxu0 0.0
  %2299 = vmatpush1.msra.mxu0 0.0
  %2300 = vmatprep.subr.mxu0 0.0
  %2301 = vmatpush1.msra.mxu0 0.0
  %2302 = vmatprep.subr.mxu0 0.0
  %2303 = vmatpush1.msra.mxu0 0.0
  %2304 = vmatprep.subr.mxu0 0.0
  %2305 = vmatpush1.msra.mxu0 0.0
  %2306 = vmatprep.subr.mxu0 0.0
  %2307 = vmatpush1.msra.mxu0 0.0
  %2308 = vmatprep.subr.mxu0 0.0
  %2309 = vmatpush1.msra.mxu0 0.0
  %2310 = vmatprep.subr.mxu0 0.0
  %2311 = vmatpush1.msra.mxu0 0.0
  %2312 = vmatprep.mubr.f32.mxu0 0.0
  %2313 = vmatmul.mubr.f32.gmra.mrb[0].mxu0 %v2246
  %v2314 = vpop.f32.mrb[0].mxu0
  %v2315 = vadd.f32 0.0, %v2314
  %v2316 = vpop.f32.mrb[0].mxu0
  %2317 = vdwg.mxu0
  %v2319 = vrot.slane %v2315, 4
  %v2321 = vadd.f32 %v2024, %v2319
  %v2322 = vmul.f32 %v2321, %v49
  %v2323 = vtanh.pop %v2322
  %v2324 = vmul.f32 %v2323, 0.5
  %v2325 = vadd.f32 %v2324, 0.5
  %v2326 = vsel %vm48, %v2323, %v2325
  %v2328 = vrot.slane %v2231, 6
  %v2330 = vmul.f32 %v2326, %v2328
  %2332 = vrot.lane.b32.xlu0 %v2326, 64
  %v2333 = vpop.permute.xlu0 %2332
  %v2335 = vmul.f32 %v2326, %v2333
  %2337 = vrot.lane.b32.xlu0 %v2335, 32
  %v2338 = vpop.permute.xlu0 %2337
  %v2340 = vadd.f32 %v2330, %v2338
  %v2341 = vtanh.pop %v2340
  %2343 = vrot.lane.b32.xlu0 %v2341, 64
  %v2344 = vpop.permute.xlu0 %2343
  %v2346 = vmul.f32 %v2326, %v2344
  %2348 = vrot.lane.b32.xlu0 %v2346, 32
  %v2349 = vpop.permute.xlu0 %2348
  %2351 = vst.msk [vmem:[#allocation2] sm:$0x30] %vm470, %v2349
  %v2352 = vrot.slane %v2346, 4
  %2353 = vrot.lane.b32.xlu0 %v2352, 32
  %v2354 = vpop.permute.xlu0 %2353
  %v2355 = vsel %vm61, %v2354, 0
  %2357 = vmatprep.subr.mxu0 0.0
  %2358 = vmatpush1.msra.mxu0 %v2026
  %2359 = vmatprep.subr.mxu0 0.0
  %2360 = vmatpush1.msra.mxu0 %v2027
  %2361 = vmatprep.subr.mxu0 0.0
  %2362 = vmatpush1.msra.mxu0 %v2028
  %2363 = vmatprep.subr.mxu0 0.0
  %2364 = vmatpush1.msra.mxu0 %v2029
  %2365 = vmatprep.subr.mxu0 0.0
  %2366 = vmatpush1.msra.mxu0 0.0
  %2367 = vmatprep.subr.mxu0 0.0
  %2368 = vmatpush1.msra.mxu0 0.0
  %2369 = vmatprep.subr.mxu0 0.0
  %2370 = vmatpush1.msra.mxu0 0.0
  %2371 = vmatprep.subr.mxu0 0.0
  %2372 = vmatpush1.msra.mxu0 0.0
  %2373 = vmatprep.subr.mxu0 0.0
  %2374 = vmatpush1.msra.mxu0 0.0
  %2375 = vmatprep.subr.mxu0 0.0
  %2376 = vmatpush1.msra.mxu0 0.0
  %2377 = vmatprep.subr.mxu0 0.0
  %2378 = vmatpush1.msra.mxu0 0.0
  %2379 = vmatprep.subr.mxu0 0.0
  %2380 = vmatpush1.msra.mxu0 0.0
  %2381 = vmatprep.subr.mxu0 0.0
  %2382 = vmatpush1.msra.mxu0 0.0
  %2383 = vmatprep.subr.mxu0 0.0
  %2384 = vmatpush1.msra.mxu0 0.0
  %2385 = vmatprep.subr.mxu0 0.0
  %2386 = vmatpush1.msra.mxu0 0.0
  %2387 = vmatprep.subr.mxu0 0.0
  %2388 = vmatpush1.msra.mxu0 0.0
  %2389 = vmatprep.subr.mxu0 0.0
  %2390 = vmatpush1.msra.mxu0 0.0
  %2391 = vmatprep.subr.mxu0 0.0
  %2392 = vmatpush1.msra.mxu0 0.0
  %2393 = vmatprep.subr.mxu0 0.0
  %2394 = vmatpush1.msra.mxu0 0.0
  %2395 = vmatprep.subr.mxu0 0.0
  %2396 = vmatpush1.msra.mxu0 0.0
  %2397 = vmatprep.subr.mxu0 0.0
  %2398 = vmatpush1.msra.mxu0 0.0
  %2399 = vmatprep.subr.mxu0 0.0
  %2400 = vmatpush1.msra.mxu0 0.0
  %2401 = vmatprep.subr.mxu0 0.0
  %2402 = vmatpush1.msra.mxu0 0.0
  %2403 = vmatprep.subr.mxu0 0.0
  %2404 = vmatpush1.msra.mxu0 0.0
  %2405 = vmatprep.subr.mxu0 0.0
  %2406 = vmatpush1.msra.mxu0 0.0
  %2407 = vmatprep.subr.mxu0 0.0
  %2408 = vmatpush1.msra.mxu0 0.0
  %2409 = vmatprep.subr.mxu0 0.0
  %2410 = vmatpush1.msra.mxu0 0.0
  %2411 = vmatprep.subr.mxu0 0.0
  %2412 = vmatpush1.msra.mxu0 0.0
  %2413 = vmatprep.subr.mxu0 0.0
  %2414 = vmatpush1.msra.mxu0 0.0
  %2415 = vmatprep.subr.mxu0 0.0
  %2416 = vmatpush1.msra.mxu0 0.0
  %2417 = vmatprep.subr.mxu0 0.0
  %2418 = vmatpush1.msra.mxu0 0.0
  %2419 = vmatprep.subr.mxu0 0.0
  %2420 = vmatpush1.msra.mxu0 0.0
  %2421 = vmatprep.mubr.f32.mxu0 0.0
  %2422 = vmatmul.mubr.f32.gmra.mrb[0].mxu0 %v2355
  %v2423 = vpop.f32.mrb[0].mxu0
  %v2424 = vadd.f32 0.0, %v2423
  %v2425 = vpop.f32.mrb[0].mxu0
  %2426 = vdwg.mxu0
  %v2428 = vrot.slane %v2424, 2
  %v2430 = vadd.f32 %v2024, %v2428
  %v2431 = vmul.f32 %v2430, %v49
  %v2432 = vtanh.pop %v2431
  %v2433 = vmul.f32 %v2432, 0.5
  %v2434 = vadd.f32 %v2433, 0.5
  %v2435 = vsel %vm48, %v2432, %v2434
  %v2437 = vrot.slane %v2340, 6
  %v2439 = vmul.f32 %v2435, %v2437
  %2441 = vrot.lane.b32.xlu0 %v2435, 64
  %v2442 = vpop.permute.xlu0 %2441
  %v2444 = vmul.f32 %v2435, %v2442
  %2446 = vrot.lane.b32.xlu0 %v2444, 32
  %v2447 = vpop.permute.xlu0 %2446
  %v2449 = vadd.f32 %v2439, %v2447
  %v2450 = vtanh.pop %v2449
  %2452 = vrot.lane.b32.xlu0 %v2450, 64
  %v2453 = vpop.permute.xlu0 %2452
  %v2455 = vmul.f32 %v2435, %v2453
  %2457 = vrot.lane.b32.xlu0 %v2455, 32
  %v2458 = vpop.permute.xlu0 %2457
  %2460 = vst.msk [vmem:[#allocation2] sm:$0xc0] %vm580, %v2458
  %v2461 = vrot.slane %v2455, 6
  %2462 = vrot.lane.b32.xlu0 %v2461, 32
  %v2463 = vpop.permute.xlu0 %2462
  %v2464 = vsel %vm61, %v2463, 0
  %2466 = vmatprep.subr.mxu0 0.0
  %2467 = vmatpush1.msra.mxu0 %v2026
  %2468 = vmatprep.subr.mxu0 0.0
  %2469 = vmatpush1.msra.mxu0 %v2027
  %2470 = vmatprep.subr.mxu0 0.0
  %2471 = vmatpush1.msra.mxu0 %v2028
  %2472 = vmatprep.subr.mxu0 0.0
  %2473 = vmatpush1.msra.mxu0 %v2029
  %2474 = vmatprep.subr.mxu0 0.0
  %2475 = vmatpush1.msra.mxu0 0.0
  %2476 = vmatprep.subr.mxu0 0.0
  %2477 = vmatpush1.msra.mxu0 0.0
  %2478 = vmatprep.subr.mxu0 0.0
  %2479 = vmatpush1.msra.mxu0 0.0
  %2480 = vmatprep.subr.mxu0 0.0
  %2481 = vmatpush1.msra.mxu0 0.0
  %2482 = vmatprep.subr.mxu0 0.0
  %2483 = vmatpush1.msra.mxu0 0.0
  %2484 = vmatprep.subr.mxu0 0.0
  %2485 = vmatpush1.msra.mxu0 0.0
  %2486 = vmatprep.subr.mxu0 0.0
  %2487 = vmatpush1.msra.mxu0 0.0
  %2488 = vmatprep.subr.mxu0 0.0
  %2489 = vmatpush1.msra.mxu0 0.0
  %2490 = vmatprep.subr.mxu0 0.0
  %2491 = vmatpush1.msra.mxu0 0.0
  %2492 = vmatprep.subr.mxu0 0.0
  %2493 = vmatpush1.msra.mxu0 0.0
  %2494 = vmatprep.subr.mxu0 0.0
  %2495 = vmatpush1.msra.mxu0 0.0
  %2496 = vmatprep.subr.mxu0 0.0
  %2497 = vmatpush1.msra.mxu0 0.0
  %2498 = vmatprep.subr.mxu0 0.0
  %2499 = vmatpush1.msra.mxu0 0.0
  %2500 = vmatprep.subr.mxu0 0.0
  %2501 = vmatpush1.msra.mxu0 0.0
  %2502 = vmatprep.subr.mxu0 0.0
  %2503 = vmatpush1.msra.mxu0 0.0
  %2504 = vmatprep.subr.mxu0 0.0
  %2505 = vmatpush1.msra.mxu0 0.0
  %2506 = vmatprep.subr.mxu0 0.0
  %2507 = vmatpush1.msra.mxu0 0.0
  %2508 = vmatprep.subr.mxu0 0.0
  %2509 = vmatpush1.msra.mxu0 0.0
  %2510 = vmatprep.subr.mxu0 0.0
  %2511 = vmatpush1.msra.mxu0 0.0
  %2512 = vmatprep.subr.mxu0 0.0
  %2513 = vmatpush1.msra.mxu0 0.0
  %2514 = vmatprep.subr.mxu0 0.0
  %2515 = vmatpush1.msra.mxu0 0.0
  %2516 = vmatprep.subr.mxu0 0.0
  %2517 = vmatpush1.msra.mxu0 0.0
  %2518 = vmatprep.subr.mxu0 0.0
  %2519 = vmatpush1.msra.mxu0 0.0
  %2520 = vmatprep.subr.mxu0 0.0
  %2521 = vmatpush1.msra.mxu0 0.0
  %2522 = vmatprep.subr.mxu0 0.0
  %2523 = vmatpush1.msra.mxu0 0.0
  %2524 = vmatprep.subr.mxu0 0.0
  %2525 = vmatpush1.msra.mxu0 0.0
  %2526 = vmatprep.subr.mxu0 0.0
  %2527 = vmatpush1.msra.mxu0 0.0
  %2528 = vmatprep.subr.mxu0 0.0
  %2529 = vmatpush1.msra.mxu0 0.0
  %2530 = vmatprep.mubr.f32.mxu0 0.0
  %2531 = vmatmul.mubr.f32.gmra.mrb[0].mxu0 %v2464
  %v2532 = vpop.f32.mrb[0].mxu0
  %v2533 = vadd.f32 0.0, %v2532
  %v2534 = vpop.f32.mrb[0].mxu0
  %2535 = vdwg.mxu0
  %v2536 = vadd.f32 %v2025, %v2533
  %v2537 = vmul.f32 %v2536, %v49
  %v2538 = vtanh.pop %v2537
  %v2539 = vmul.f32 %v2538, 0.5
  %v2540 = vadd.f32 %v2539, 0.5
  %v2541 = vsel %vm48, %v2538, %v2540
  %v2543 = vrot.slane %v2449, 6
  %v2545 = vmul.f32 %v2541, %v2543
  %2547 = vrot.lane.b32.xlu0 %v2541, 64
  %v2548 = vpop.permute.xlu0 %2547
  %v2550 = vmul.f32 %v2541, %v2548
  %2552 = vrot.lane.b32.xlu0 %v2550, 32
  %v2553 = vpop.permute.xlu0 %2552
  %v2555 = vadd.f32 %v2545, %v2553
  %v2556 = vtanh.pop %v2555
  %2558 = vrot.lane.b32.xlu0 %v2556, 64
  %v2559 = vpop.permute.xlu0 %2558
  %v2561 = vmul.f32 %v2541, %v2559
  %2563 = vrot.lane.b32.xlu0 %v2561, 32
  %v2564 = vpop.permute.xlu0 %2563
  %2566 = vst.msk [vmem:[#allocation2 + $0x8] sm:$0x3] %vm253, %v2564
  %v2567 = vsel %vm61, %v2564, 0
  %2569 = vmatprep.subr.mxu0 0.0
  %2570 = vmatpush1.msra.mxu0 %v2026
  %2571 = vmatprep.subr.mxu0 0.0
  %2572 = vmatpush1.msra.mxu0 %v2027
  %2573 = vmatprep.subr.mxu0 0.0
  %2574 = vmatpush1.msra.mxu0 %v2028
  %2575 = vmatprep.subr.mxu0 0.0
  %2576 = vmatpush1.msra.mxu0 %v2029
  %2577 = vmatprep.subr.mxu0 0.0
  %2578 = vmatpush1.msra.mxu0 0.0
  %2579 = vmatprep.subr.mxu0 0.0
  %2580 = vmatpush1.msra.mxu0 0.0
  %2581 = vmatprep.subr.mxu0 0.0
  %2582 = vmatpush1.msra.mxu0 0.0
  %2583 = vmatprep.subr.mxu0 0.0
  %2584 = vmatpush1.msra.mxu0 0.0
  %2585 = vmatprep.subr.mxu0 0.0
  %2586 = vmatpush1.msra.mxu0 0.0
  %2587 = vmatprep.subr.mxu0 0.0
  %2588 = vmatpush1.msra.mxu0 0.0
  %2589 = vmatprep.subr.mxu0 0.0
  %2590 = vmatpush1.msra.mxu0 0.0
  %2591 = vmatprep.subr.mxu0 0.0
  %2592 = vmatpush1.msra.mxu0 0.0
  %2593 = vmatprep.subr.mxu0 0.0
  %2594 = vmatpush1.msra.mxu0 0.0
  %2595 = vmatprep.subr.mxu0 0.0
  %2596 = vmatpush1.msra.mxu0 0.0
  %2597 = vmatprep.subr.mxu0 0.0
  %2598 = vmatpush1.msra.mxu0 0.0
  %2599 = vmatprep.subr.mxu0 0.0
  %2600 = vmatpush1.msra.mxu0 0.0
  %2601 = vmatprep.subr.mxu0 0.0
  %2602 = vmatpush1.msra.mxu0 0.0
  %2603 = vmatprep.subr.mxu0 0.0
  %2604 = vmatpush1.msra.mxu0 0.0
  %2605 = vmatprep.subr.mxu0 0.0
  %2606 = vmatpush1.msra.mxu0 0.0
  %2607 = vmatprep.subr.mxu0 0.0
  %2608 = vmatpush1.msra.mxu0 0.0
  %2609 = vmatprep.subr.mxu0 0.0
  %2610 = vmatpush1.msra.mxu0 0.0
  %2611 = vmatprep.subr.mxu0 0.0
  %2612 = vmatpush1.msra.mxu0 0.0
  %2613 = vmatprep.subr.mxu0 0.0
  %2614 = vmatpush1.msra.mxu0 0.0
  %2615 = vmatprep.subr.mxu0 0.0
  %2616 = vmatpush1.msra.mxu0 0.0
  %2617 = vmatprep.subr.mxu0 0.0
  %2618 = vmatpush1.msra.mxu0 0.0
  %2619 = vmatprep.subr.mxu0 0.0
  %2620 = vmatpush1.msra.mxu0 0.0
  %2621 = vmatprep.subr.mxu0 0.0
  %2622 = vmatpush1.msra.mxu0 0.0
  %2623 = vmatprep.subr.mxu0 0.0
  %2624 = vmatpush1.msra.mxu0 0.0
  %2625 = vmatprep.subr.mxu0 0.0
  %2626 = vmatpush1.msra.mxu0 0.0
  %2627 = vmatprep.subr.mxu0 0.0
  %2628 = vmatpush1.msra.mxu0 0.0
  %2629 = vmatprep.subr.mxu0 0.0
  %2630 = vmatpush1.msra.mxu0 0.0
  %2631 = vmatprep.subr.mxu0 0.0
  %2632 = vmatpush1.msra.mxu0 0.0
  %2633 = vmatprep.mubr.f32.mxu0 0.0
  %2634 = vmatmul.mubr.f32.gmra.mrb[0].mxu0 %v2567
  %v2635 = vpop.f32.mrb[0].mxu0
  %v2636 = vadd.f32 0.0, %v2635
  %v2637 = vpop.f32.mrb[0].mxu0
  %2638 = vdwg.mxu0
  %v2640 = vrot.slane %v2636, 6
  %v2642 = vadd.f32 %v2025, %v2640
  %v2643 = vmul.f32 %v2642, %v49
  %v2644 = vtanh.pop %v2643
  %v2645 = vmul.f32 %v2644, 0.5
  %v2646 = vadd.f32 %v2645, 0.5
  %v2647 = vsel %vm48, %v2644, %v2646
  %v2649 = vrot.slane %v2555, 6
  %v2651 = vmul.f32 %v2647, %v2649
  %2653 = vrot.lane.b32.xlu0 %v2647, 64
  %v2654 = vpop.permute.xlu0 %2653
  %v2656 = vmul.f32 %v2647, %v2654
  %2658 = vrot.lane.b32.xlu0 %v2656, 32
  %v2659 = vpop.permute.xlu0 %2658
  %v2661 = vadd.f32 %v2651, %v2659
  %v2662 = vtanh.pop %v2661
  %2664 = vrot.lane.b32.xlu0 %v2662, 64
  %v2665 = vpop.permute.xlu0 %2664
  %v2667 = vmul.f32 %v2647, %v2665
  %2669 = vrot.lane.b32.xlu0 %v2667, 32
  %v2670 = vpop.permute.xlu0 %2669
  %2672 = vst.msk [vmem:[#allocation2 + $0x8] sm:$0xc] %vm360, %v2670
  %v2673 = vld [vmem:[#allocation2] sm:$0xff]
  %v2674 = vld [vmem:[#allocation2 + $0x8] sm:$0xf]
  %v2675 = vld [vmem:[%s11] sm:$0xff]
  %v2676 = vld [vmem:[%s11 + $0x8] sm:$0xff]
  %v2677 = vld [vmem:[%s11 + $0x10] sm:$0xff]
  %v2678 = vld [vmem:[%s11 + $0x18] sm:$0xff]
  %v2679 = vld [vmem:[%s12] sm:$0x1]
  %v2681 = vlaneseq
  %v2682 = vshrl.u32 %v2681, 7
  %v2683 = vsub.s32 0, %v2682
  %v2684 = vrot.slane %v2679, %v2683
  %v2687 = vsel %vm61, %v2673, 0
  %v2690 = vsel %vm61, %v2674, 0
  %2692 = vmatprep.subr.mxu0 0.0
  %2693 = vmatpush1.msra.mxu0 %v2675
  %2694 = vmatprep.subr.mxu0 0.0
  %2695 = vmatpush1.msra.mxu0 %v2676
  %2696 = vmatprep.subr.mxu0 0.0
  %2697 = vmatpush1.msra.mxu0 %v2677
  %2698 = vmatprep.subr.mxu0 0.0
  %2699 = vmatpush1.msra.mxu0 %v2678
  %2700 = vmatprep.subr.mxu0 0.0
  %2701 = vmatpush1.msra.mxu0 0.0
  %2702 = vmatprep.subr.mxu0 0.0
  %2703 = vmatpush1.msra.mxu0 0.0
  %2704 = vmatprep.subr.mxu0 0.0
  %2705 = vmatpush1.msra.mxu0 0.0
  %2706 = vmatprep.subr.mxu0 0.0
  %2707 = vmatpush1.msra.mxu0 0.0
  %2708 = vmatprep.subr.mxu0 0.0
  %2709 = vmatpush1.msra.mxu0 0.0
  %2710 = vmatprep.subr.mxu0 0.0
  %2711 = vmatpush1.msra.mxu0 0.0
  %2712 = vmatprep.subr.mxu0 0.0
  %2713 = vmatpush1.msra.mxu0 0.0
  %2714 = vmatprep.subr.mxu0 0.0
  %2715 = vmatpush1.msra.mxu0 0.0
  %2716 = vmatprep.subr.mxu0 0.0
  %2717 = vmatpush1.msra.mxu0 0.0
  %2718 = vmatprep.subr.mxu0 0.0
  %2719 = vmatpush1.msra.mxu0 0.0
  %2720 = vmatprep.subr.mxu0 0.0
  %2721 = vmatpush1.msra.mxu0 0.0
  %2722 = vmatprep.subr.mxu0 0.0
  %2723 = vmatpush1.msra.mxu0 0.0
  %2724 = vmatprep.subr.mxu0 0.0
  %2725 = vmatpush1.msra.mxu0 0.0
  %2726 = vmatprep.subr.mxu0 0.0
  %2727 = vmatpush1.msra.mxu0 0.0
  %2728 = vmatprep.subr.mxu0 0.0
  %2729 = vmatpush1.msra.mxu0 0.0
  %2730 = vmatprep.subr.mxu0 0.0
  %2731 = vmatpush1.msra.mxu0 0.0
  %2732 = vmatprep.subr.mxu0 0.0
  %2733 = vmatpush1.msra.mxu0 0.0
  %2734 = vmatprep.subr.mxu0 0.0
  %2735 = vmatpush1.msra.mxu0 0.0
  %2736 = vmatprep.subr.mxu0 0.0
  %2737 = vmatpush1.msra.mxu0 0.0
  %2738 = vmatprep.subr.mxu0 0.0
  %2739 = vmatpush1.msra.mxu0 0.0
  %2740 = vmatprep.subr.mxu0 0.0
  %2741 = vmatpush1.msra.mxu0 0.0
  %2742 = vmatprep.subr.mxu0 0.0
  %2743 = vmatpush1.msra.mxu0 0.0
  %2744 = vmatprep.subr.mxu0 0.0
  %2745 = vmatpush1.msra.mxu0 0.0
  %2746 = vmatprep.subr.mxu0 0.0
  %2747 = vmatpush1.msra.mxu0 0.0
  %2748 = vmatprep.subr.mxu0 0.0
  %2749 = vmatpush1.msra.mxu0 0.0
  %2750 = vmatprep.subr.mxu0 0.0
  %2751 = vmatpush1.msra.mxu0 0.0
  %2752 = vmatprep.subr.mxu0 0.0
  %2753 = vmatpush1.msra.mxu0 0.0
  %2754 = vmatprep.subr.mxu0 0.0
  %2755 = vmatpush1.msra.mxu0 0.0
  %2756 = vmatprep.mubr.f32.mxu0 0.0
  %2757 = vmatmul.mubr.f32.gmra.mrb[0].mxu0 %v2687
  %v2758 = vpop.f32.mrb[0].mxu0
  %v2759 = vadd.f32 %v2684, %v2758
  %v2760 = vpop.f32.mrb[0].mxu0
  %2761 = vmatprep.mubr.f32.mxu0 0.0
  %2762 = vmatmul.mubr.f32.gmra.mrb[0].mxu0 %v2690
  %v2763 = vpop.f32.mrb[0].mxu0
  %v2764 = vadd.f32 %v2684, %v2763
  %v2765 = vpop.f32.mrb[0].mxu0
  %2766 = vdwg.mxu0
  %2767 = vst [vmem:[%s13] sm:$0xff] %v2759
  %2768 = vst [vmem:[%s13 + $0x8] sm:$0xf] %v2764
  // Predicated region
  $region54: #{decoder_forward.1} parent=0 // pred_check
    _
  $region55: #{decoder_forward.1} parent=0 // pred_check_branch
    %2770 = sbr.rel (0) target = $region57
  $region56: #{decoder_forward.1} parent=0 // pred_region
    _
  $region57: #{decoder_forward.1} parent=0 // pred_fallthru
    _
  // Predicated region
  $region58: #{decoder_forward.1} parent=0 // pred_check
    _
  $region59: #{decoder_forward.1} parent=0 // pred_check_branch
    %2772 = sbr.rel (0) target = $region61
  $region60: #{decoder_forward.1} parent=0 // pred_region
    _
  $region61: #{decoder_forward.1} parent=0 // pred_fallthru
    _

</llo_original>
